<compile_context>
chip_gen: v7x
topology: tpu7x:2x2x1
jax: 0.10.0
libtpu: 0.0.40
codegen_flags: <defaults>
</compile_context>

<pallas_src>
import jax
import jax.numpy as jnp
from jax.experimental import pallas as pl
from jax.experimental.pallas import tpu as pltpu

D = 32            # hidden size == word_embed_proj_dim (proj_size) for the head
H = 2             # attention heads
HD = D // H       # head dim
FF = 4 * D        # MLP inner dim
N_LAYERS = 2
EPS = 1e-5
NEG_INF = -1e30


def _layer_norm(x, g, b):
    mu = jnp.mean(x, axis=-1, keepdims=True)
    var = jnp.mean((x - mu) ** 2, axis=-1, keepdims=True)
    return (x - mu) * jax.lax.rsqrt(var + EPS) * g + b


def fused_forward_kernel(x_ref, bias_ref,
                         ln1_g_ref, ln1_b_ref,
                         wq_ref, bq_ref, wk_ref, bk_ref, wv_ref, bv_ref,
                         wo_ref, bo_ref,
                         ln2_g_ref, ln2_b_ref, w1_ref, b1_ref, w2_ref, b2_ref,
                         lnf_g_ref, lnf_b_ref, wc_ref, bc_ref,
                         out_ref):
    x = x_ref[...]            # (BS, D) float32, batch flattened into sublanes
    bias = bias_ref[...]      # (BS, BS) additive attention bias (0 / -1e30)
    scale = 1.0 / (HD ** 0.5)

    # Statically unrolled layer loop; all weights live in VMEM for the whole
    # kernel, activations stay in vregs (no HBM round-trips between layers).
    for l in range(N_LAYERS):
        # --- self-attention (pre-LN, causal + key-padding via `bias`) -----
        n1 = _layer_norm(x, ln1_g_ref[l], ln1_b_ref[l])
        wq = wq_ref[l]
        wk = wk_ref[l]
        wv = wv_ref[l]
        wo = wo_ref[l]
        bq = bq_ref[l]
        bk = bk_ref[l]
        bv = bv_ref[l]

        attn = None
        for h in range(H):            # static unroll; no concat of head outputs
            sl = slice(h * HD, (h + 1) * HD)
            qh = jnp.dot(n1, wq[:, sl],
                         preferred_element_type=jnp.float32) + bq[:, sl]
            kh = jnp.dot(n1, wk[:, sl],
                         preferred_element_type=jnp.float32) + bk[:, sl]
            vh = jnp.dot(n1, wv[:, sl],
                         preferred_element_type=jnp.float32) + bv[:, sl]
            # q @ k^T via dot_general (contract last dims) — no XLU transpose.
            scores = jax.lax.dot_general(
                qh, kh, (((1,), (1,)), ((), ())),
                preferred_element_type=jnp.float32) * scale + bias
            # Safe softmax: max-subtraction guarantees the denominator >= 1,
            # so fully-masked rows stay finite (uniform weights).
            m = jnp.max(scores, axis=-1, keepdims=True)
            p = jnp.exp(scores - m)
            denom = jnp.sum(p, axis=-1, keepdims=True)
            p = p * pl.reciprocal(denom, approx=True)
            ctx = jnp.dot(p, vh, preferred_element_type=jnp.float32)  # (BS, HD)
            # Fold head output straight into the output projection
            # (concat(ctx_0, ctx_1) @ Wo == sum_h ctx_h @ Wo[h*HD:(h+1)*HD]).
            part = jnp.dot(ctx, wo[sl, :], preferred_element_type=jnp.float32)
            attn = part if attn is None else attn + part

        x = x + attn + bo_ref[l]

        # --- MLP (ReLU activation, as in OPT) -----------------------------
        n2 = _layer_norm(x, ln2_g_ref[l], ln2_b_ref[l])
        h1 = jnp.dot(n2, w1_ref[l],
                     preferred_element_type=jnp.float32) + b1_ref[l]
        h1 = jnp.maximum(h1, 0.0)
        x = x + jnp.dot(h1, w2_ref[l],
                        preferred_element_type=jnp.float32) + b2_ref[l]

    # --- final LayerNorm + Linear(proj_size, 1) classification head --------
    nf = _layer_norm(x, lnf_g_ref[...], lnf_b_ref[...])
    # wc is the PyTorch weight layout (1, D); contract D-vs-D so the logits
    # come out lane-dense as (1, BS) (dense vst instead of lane-width-1 store).
    logits = jax.lax.dot_general(
        wc_ref[...], nf, (((1,), (1,)), ((), ())),
        preferred_element_type=jnp.float32) + bc_ref[...]
    out_ref[...] = logits


def _full_spec(shape):
    nd = len(shape)
    return pl.BlockSpec(shape, lambda i, _nd=nd: (0,) * _nd)


def fused_forward(x_flat, attn_bias, p):
    BS = x_flat.shape[0]
    L = N_LAYERS
    in_specs = [
        _full_spec((BS, D)),        # x (batch flattened into sublanes)
        _full_spec((BS, BS)),       # additive attention bias
        _full_spec((L, 1, D)), _full_spec((L, 1, D)),     # ln1 g/b
        _full_spec((L, D, D)), _full_spec((L, 1, D)),     # Wq / bq
        _full_spec((L, D, D)), _full_spec((L, 1, D)),     # Wk / bk
        _full_spec((L, D, D)), _full_spec((L, 1, D)),     # Wv / bv
        _full_spec((L, D, D)), _full_spec((L, 1, D)),     # Wo / bo
        _full_spec((L, 1, D)), _full_spec((L, 1, D)),     # ln2 g/b
        _full_spec((L, D, FF)), _full_spec((L, 1, FF)),   # W1 / b1
        _full_spec((L, FF, D)), _full_spec((L, 1, D)),    # W2 / b2
        _full_spec((1, D)), _full_spec((1, D)),           # final LN g/b
        _full_spec((1, D)), _full_spec((1, 1)),           # head weight / bias
    ]
    return pl.pallas_call(
        fused_forward_kernel,
        out_shape=jax.ShapeDtypeStruct((1, BS), jnp.float32),
        grid=(1,),                  # single fused launch; whole batch in one step
        in_specs=in_specs,
        out_specs=pl.BlockSpec((1, BS), lambda i: (0, 0)),
    )(x_flat, attn_bias,
      p["ln1_g"], p["ln1_b"],
      p["wq"], p["bq"], p["wk"], p["bk"], p["wv"], p["bv"],
      p["wo"], p["bo"],
      p["ln2_g"], p["ln2_b"], p["w1"], p["b1"], p["w2"], p["b2"],
      p["lnf_g"], p["lnf_b"], p["wc"], p["bc"])


def init_params(key, vocab, max_pos):
    def dense(k, shape):
        return jax.random.normal(k, shape, jnp.float32) * 0.02

    keys = jax.random.split(key, 9)
    L = N_LAYERS
    return {
        "tok_emb": dense(keys[0], (vocab, D)),
        "pos_emb": dense(keys[1], (max_pos, D)),
        # stacked per-layer weights (leading dim = N_LAYERS)
        "ln1_g": jnp.ones((L, 1, D), jnp.float32),
        "ln1_b": jnp.zeros((L, 1, D), jnp.float32),
        "wq": dense(keys[2], (L, D, D)),
        "bq": jnp.zeros((L, 1, D), jnp.float32),
        "wk": dense(keys[3], (L, D, D)),
        "bk": jnp.zeros((L, 1, D), jnp.float32),
        "wv": dense(keys[4], (L, D, D)),
        "bv": jnp.zeros((L, 1, D), jnp.float32),
        "wo": dense(keys[5], (L, D, D)),
        "bo": jnp.zeros((L, 1, D), jnp.float32),
        "ln2_g": jnp.ones((L, 1, D), jnp.float32),
        "ln2_b": jnp.zeros((L, 1, D), jnp.float32),
        "w1": dense(keys[6], (L, D, FF)),
        "b1": jnp.zeros((L, 1, FF), jnp.float32),
        "w2": dense(keys[7], (L, FF, D)),
        "b2": jnp.zeros((L, 1, D), jnp.float32),
        # backbone final LayerNorm + classification head
        "lnf_g": jnp.ones((1, D), jnp.float32),
        "lnf_b": jnp.zeros((1, D), jnp.float32),
        "wc": dense(keys[8], (1, D)),            # classification_head.weight (1, D)
        "bc": jnp.zeros((1, 1), jnp.float32),    # classification_head.bias
    }


@jax.jit
def model_forward(params, input_ids, attention_mask):
    # Glue: embedding gather + positional embedding + mask preprocessing stay
    # in plain JAX; everything else runs inside one Pallas kernel.
    B, S = input_ids.shape
    x = params["tok_emb"][input_ids] + params["pos_emb"][:S][None, :, :]
    x_flat = x.reshape(B * S, D).astype(jnp.float32)

    # Block-diagonal (per batch element) causal + key-padding additive bias,
    # built once and reused by every layer.
    idx = jnp.arange(B * S)
    b_of = idx // S
    pos = idx % S
    causal = pos[None, :] <= pos[:, None]
    same_b = b_of[None, :] == b_of[:, None]
    key_ok = attention_mask.reshape(B * S) > 0
    allowed = causal & same_b & key_ok[None, :]
    attn_bias = jnp.where(allowed, 0.0, NEG_INF).astype(jnp.float32)

    logits_row = fused_forward(x_flat, attn_bias, params)   # (1, B*S)
    return logits_row.reshape(B, S, 1)                      # match PyTorch output


if __name__ == "__main__":
    key = jax.random.PRNGKey(0)
    pkey, tkey = jax.random.split(key)

    B, S, VOCAB, MAX_POS = 2, 8, 100, 16
    params = init_params(pkey, VOCAB, MAX_POS)

    input_ids = jax.random.randint(tkey, (B, S), 0, VOCAB, dtype=jnp.int32)
    attention_mask = jnp.ones((B, S), jnp.int32).at[1, S - 1].set(0)  # one pad

    logits = model_forward(params, input_ids, attention_mask)
    logits = jax.block_until_ready(logits)

    assert logits.shape == (B, S, 1), logits.shape
    assert jnp.all(jnp.isfinite(logits)), "non-finite logits"
    print("KERNEL_OK")
</pallas_src>

<mosaic_0001>
module attributes {stable_mosaic.version = 11 : i64} {
  func.func @fused_forward_kernel(%arg0: i32, %arg1: memref<16x32xf32, #tpu.memory_space<vmem>>, %arg2: memref<16x16xf32, #tpu.memory_space<vmem>>, %arg3: memref<2x1x32xf32, #tpu.memory_space<vmem>>, %arg4: memref<2x1x32xf32, #tpu.memory_space<vmem>>, %arg5: memref<2x32x32xf32, #tpu.memory_space<vmem>>, %arg6: memref<2x1x32xf32, #tpu.memory_space<vmem>>, %arg7: memref<2x32x32xf32, #tpu.memory_space<vmem>>, %arg8: memref<2x1x32xf32, #tpu.memory_space<vmem>>, %arg9: memref<2x32x32xf32, #tpu.memory_space<vmem>>, %arg10: memref<2x1x32xf32, #tpu.memory_space<vmem>>, %arg11: memref<2x32x32xf32, #tpu.memory_space<vmem>>, %arg12: memref<2x1x32xf32, #tpu.memory_space<vmem>>, %arg13: memref<2x1x32xf32, #tpu.memory_space<vmem>>, %arg14: memref<2x1x32xf32, #tpu.memory_space<vmem>>, %arg15: memref<2x32x128xf32, #tpu.memory_space<vmem>>, %arg16: memref<2x1x128xf32, #tpu.memory_space<vmem>>, %arg17: memref<2x128x32xf32, #tpu.memory_space<vmem>>, %arg18: memref<2x1x32xf32, #tpu.memory_space<vmem>>, %arg19: memref<1x32xf32, #tpu.memory_space<vmem>>, %arg20: memref<1x32xf32, #tpu.memory_space<vmem>>, %arg21: memref<1x32xf32, #tpu.memory_space<vmem>>, %arg22: memref<1x1xf32, #tpu.memory_space<vmem>>, %arg23: memref<1x16xf32, #tpu.memory_space<vmem>>) attributes {dimension_semantics = [#tpu.dimension_semantics<arbitrary>], iteration_bounds = array<i64: 1>, scalar_prefetch = 0 : i64, scratch_operands = 0 : i64, tpu.core_type = #tpu.core_type<tc>, window_params = [{pipeline_mode = #tpu.pipeline_mode<synchronous>, transform_indices = @transform_0, window_bounds = array<i64: 16, 32>}, {pipeline_mode = #tpu.pipeline_mode<synchronous>, transform_indices = @transform_1, window_bounds = array<i64: 16, 16>}, {pipeline_mode = #tpu.pipeline_mode<synchronous>, transform_indices = @transform_2, window_bounds = array<i64: 2, 1, 32>}, {pipeline_mode = #tpu.pipeline_mode<synchronous>, transform_indices = @transform_3, window_bounds = array<i64: 2, 1, 32>}, {pipeline_mode = #tpu.pipeline_mode<synchronous>, transform_indices = @transform_4, window_bounds = array<i64: 2, 32, 32>}, {pipeline_mode = #tpu.pipeline_mode<synchronous>, transform_indices = @transform_5, window_bounds = array<i64: 2, 1, 32>}, {pipeline_mode = #tpu.pipeline_mode<synchronous>, transform_indices = @transform_6, window_bounds = array<i64: 2, 32, 32>}, {pipeline_mode = #tpu.pipeline_mode<synchronous>, transform_indices = @transform_7, window_bounds = array<i64: 2, 1, 32>}, {pipeline_mode = #tpu.pipeline_mode<synchronous>, transform_indices = @transform_8, window_bounds = array<i64: 2, 32, 32>}, {pipeline_mode = #tpu.pipeline_mode<synchronous>, transform_indices = @transform_9, window_bounds = array<i64: 2, 1, 32>}, {pipeline_mode = #tpu.pipeline_mode<synchronous>, transform_indices = @transform_10, window_bounds = array<i64: 2, 32, 32>}, {pipeline_mode = #tpu.pipeline_mode<synchronous>, transform_indices = @transform_11, window_bounds = array<i64: 2, 1, 32>}, {pipeline_mode = #tpu.pipeline_mode<synchronous>, transform_indices = @transform_12, window_bounds = array<i64: 2, 1, 32>}, {pipeline_mode = #tpu.pipeline_mode<synchronous>, transform_indices = @transform_13, window_bounds = array<i64: 2, 1, 32>}, {pipeline_mode = #tpu.pipeline_mode<synchronous>, transform_indices = @transform_14, window_bounds = array<i64: 2, 32, 128>}, {pipeline_mode = #tpu.pipeline_mode<synchronous>, transform_indices = @transform_15, window_bounds = array<i64: 2, 1, 128>}, {pipeline_mode = #tpu.pipeline_mode<synchronous>, transform_indices = @transform_16, window_bounds = array<i64: 2, 128, 32>}, {pipeline_mode = #tpu.pipeline_mode<synchronous>, transform_indices = @transform_17, window_bounds = array<i64: 2, 1, 32>}, {pipeline_mode = #tpu.pipeline_mode<synchronous>, transform_indices = @transform_18, window_bounds = array<i64: 1, 32>}, {pipeline_mode = #tpu.pipeline_mode<synchronous>, transform_indices = @transform_19, window_bounds = array<i64: 1, 32>}, {pipeline_mode = #tpu.pipeline_mode<synchronous>, transform_indices = @transform_20, window_bounds = array<i64: 1, 32>}, {pipeline_mode = #tpu.pipeline_mode<synchronous>, transform_indices = @transform_21, window_bounds = array<i64: 1, 1>}, {pipeline_mode = #tpu.pipeline_mode<synchronous>, transform_indices = @transform_22, window_bounds = array<i64: 1, 16>}]} {
    %c0 = arith.constant 0 : index
    %c0_0 = arith.constant 0 : index
    %0 = vector.load %arg1[%c0, %c0_0] : memref<16x32xf32, #tpu.memory_space<vmem>>, vector<16x32xf32>
    %c0_1 = arith.constant 0 : index
    %c0_2 = arith.constant 0 : index
    %1 = vector.load %arg2[%c0_1, %c0_2] : memref<16x16xf32, #tpu.memory_space<vmem>>, vector<16x16xf32>
    %c0_3 = arith.constant 0 : index
    %c0_4 = arith.constant 0 : index
    %c0_5 = arith.constant 0 : index
    %2 = vector.load %arg3[%c0_3, %c0_4, %c0_5] : memref<2x1x32xf32, #tpu.memory_space<vmem>>, vector<1x1x32xf32>
    %3 = vector.shape_cast %2 : vector<1x1x32xf32> to vector<1x32xf32>
    %c0_6 = arith.constant 0 : index
    %c0_7 = arith.constant 0 : index
    %c0_8 = arith.constant 0 : index
    %4 = vector.load %arg4[%c0_6, %c0_7, %c0_8] : memref<2x1x32xf32, #tpu.memory_space<vmem>>, vector<1x1x32xf32>
    %5 = vector.shape_cast %4 : vector<1x1x32xf32> to vector<1x32xf32>
    %cst = arith.constant dense<0.000000e+00> : vector<16xf32>
    %6 = vector.multi_reduction <add>, %0, %cst [1] : vector<16x32xf32> to vector<16xf32>
    %7 = vector.shape_cast %6 : vector<16xf32> to vector<16x1xf32>
    %cst_9 = arith.constant 3.200000e+01 : f32
    %8 = vector.broadcast %cst_9 : f32 to vector<16x1xf32>
    %9 = arith.divf %7, %8 : vector<16x1xf32>
    %10 = vector.broadcast %9 : vector<16x1xf32> to vector<16x32xf32>
    %11 = arith.subf %0, %10 : vector<16x32xf32>
    %12 = arith.mulf %11, %11 : vector<16x32xf32>
    %cst_10 = arith.constant dense<0.000000e+00> : vector<16xf32>
    %13 = vector.multi_reduction <add>, %12, %cst_10 [1] : vector<16x32xf32> to vector<16xf32>
    %14 = vector.shape_cast %13 : vector<16xf32> to vector<16x1xf32>
    %cst_11 = arith.constant 3.200000e+01 : f32
    %15 = vector.broadcast %cst_11 : f32 to vector<16x1xf32>
    %16 = arith.divf %14, %15 : vector<16x1xf32>
    %17 = vector.broadcast %9 : vector<16x1xf32> to vector<16x32xf32>
    %18 = arith.subf %0, %17 : vector<16x32xf32>
    %cst_12 = arith.constant 9.99999974E-6 : f32
    %19 = vector.broadcast %cst_12 : f32 to vector<16x1xf32>
    %20 = arith.addf %16, %19 : vector<16x1xf32>
    %21 = math.rsqrt %20 : vector<16x1xf32>
    %22 = vector.broadcast %21 : vector<16x1xf32> to vector<16x32xf32>
    %23 = arith.mulf %18, %22 : vector<16x32xf32>
    %24 = vector.broadcast %3 : vector<1x32xf32> to vector<16x32xf32>
    %25 = arith.mulf %23, %24 : vector<16x32xf32>
    %26 = vector.broadcast %5 : vector<1x32xf32> to vector<16x32xf32>
    %27 = arith.addf %25, %26 : vector<16x32xf32>
    %c0_13 = arith.constant 0 : index
    %c0_14 = arith.constant 0 : index
    %c0_15 = arith.constant 0 : index
    %28 = vector.load %arg5[%c0_13, %c0_14, %c0_15] : memref<2x32x32xf32, #tpu.memory_space<vmem>>, vector<1x32x32xf32>
    %29 = vector.shape_cast %28 : vector<1x32x32xf32> to vector<32x32xf32>
    %c0_16 = arith.constant 0 : index
    %c0_17 = arith.constant 0 : index
    %c0_18 = arith.constant 0 : index
    %30 = vector.load %arg7[%c0_16, %c0_17, %c0_18] : memref<2x32x32xf32, #tpu.memory_space<vmem>>, vector<1x32x32xf32>
    %31 = vector.shape_cast %30 : vector<1x32x32xf32> to vector<32x32xf32>
    %c0_19 = arith.constant 0 : index
    %c0_20 = arith.constant 0 : index
    %c0_21 = arith.constant 0 : index
    %32 = vector.load %arg9[%c0_19, %c0_20, %c0_21] : memref<2x32x32xf32, #tpu.memory_space<vmem>>, vector<1x32x32xf32>
    %33 = vector.shape_cast %32 : vector<1x32x32xf32> to vector<32x32xf32>
    %c0_22 = arith.constant 0 : index
    %c0_23 = arith.constant 0 : index
    %c0_24 = arith.constant 0 : index
    %34 = vector.load %arg11[%c0_22, %c0_23, %c0_24] : memref<2x32x32xf32, #tpu.memory_space<vmem>>, vector<1x32x32xf32>
    %35 = vector.shape_cast %34 : vector<1x32x32xf32> to vector<32x32xf32>
    %c0_25 = arith.constant 0 : index
    %c0_26 = arith.constant 0 : index
    %c0_27 = arith.constant 0 : index
    %36 = vector.load %arg6[%c0_25, %c0_26, %c0_27] : memref<2x1x32xf32, #tpu.memory_space<vmem>>, vector<1x1x32xf32>
    %37 = vector.shape_cast %36 : vector<1x1x32xf32> to vector<1x32xf32>
    %c0_28 = arith.constant 0 : index
    %c0_29 = arith.constant 0 : index
    %c0_30 = arith.constant 0 : index
    %38 = vector.load %arg8[%c0_28, %c0_29, %c0_30] : memref<2x1x32xf32, #tpu.memory_space<vmem>>, vector<1x1x32xf32>
    %39 = vector.shape_cast %38 : vector<1x1x32xf32> to vector<1x32xf32>
    %c0_31 = arith.constant 0 : index
    %c0_32 = arith.constant 0 : index
    %c0_33 = arith.constant 0 : index
    %40 = vector.load %arg10[%c0_31, %c0_32, %c0_33] : memref<2x1x32xf32, #tpu.memory_space<vmem>>, vector<1x1x32xf32>
    %41 = vector.shape_cast %40 : vector<1x1x32xf32> to vector<1x32xf32>
    %42 = vector.extract_strided_slice %29 {offsets = [0, 0], sizes = [32, 16], strides = [1, 1]} : vector<32x32xf32> to vector<32x16xf32>
    %cst_34 = arith.constant dense<0.000000e+00> : vector<16x16xf32>
    %43 = tpu.matmul %27, %42, %cst_34 {dimension_numbers = #tpu.dot_dimension_numbers<[1], [0], [0], [1], [0, 0, 1, 1], [], []>} : vector<16x32xf32>, vector<32x16xf32>, vector<16x16xf32> -> vector<16x16xf32>
    %44 = vector.extract_strided_slice %37 {offsets = [0, 0], sizes = [1, 16], strides = [1, 1]} : vector<1x32xf32> to vector<1x16xf32>
    %45 = vector.broadcast %44 : vector<1x16xf32> to vector<16x16xf32>
    %46 = arith.addf %43, %45 : vector<16x16xf32>
    %47 = vector.extract_strided_slice %31 {offsets = [0, 0], sizes = [32, 16], strides = [1, 1]} : vector<32x32xf32> to vector<32x16xf32>
    %cst_35 = arith.constant dense<0.000000e+00> : vector<16x16xf32>
    %48 = tpu.matmul %27, %47, %cst_35 {dimension_numbers = #tpu.dot_dimension_numbers<[1], [0], [0], [1], [0, 0, 1, 1], [], []>} : vector<16x32xf32>, vector<32x16xf32>, vector<16x16xf32> -> vector<16x16xf32>
    %49 = vector.extract_strided_slice %39 {offsets = [0, 0], sizes = [1, 16], strides = [1, 1]} : vector<1x32xf32> to vector<1x16xf32>
    %50 = vector.broadcast %49 : vector<1x16xf32> to vector<16x16xf32>
    %51 = arith.addf %48, %50 : vector<16x16xf32>
    %52 = vector.extract_strided_slice %33 {offsets = [0, 0], sizes = [32, 16], strides = [1, 1]} : vector<32x32xf32> to vector<32x16xf32>
    %cst_36 = arith.constant dense<0.000000e+00> : vector<16x16xf32>
    %53 = tpu.matmul %27, %52, %cst_36 {dimension_numbers = #tpu.dot_dimension_numbers<[1], [0], [0], [1], [0, 0, 1, 1], [], []>} : vector<16x32xf32>, vector<32x16xf32>, vector<16x16xf32> -> vector<16x16xf32>
    %54 = vector.extract_strided_slice %41 {offsets = [0, 0], sizes = [1, 16], strides = [1, 1]} : vector<1x32xf32> to vector<1x16xf32>
    %55 = vector.broadcast %54 : vector<1x16xf32> to vector<16x16xf32>
    %56 = arith.addf %53, %55 : vector<16x16xf32>
    %cst_37 = arith.constant dense<0.000000e+00> : vector<16x16xf32>
    %57 = tpu.matmul %46, %51, %cst_37 {dimension_numbers = #tpu.dot_dimension_numbers<[1], [1], [0], [0], [0, 0, 1, 0], [], []>} : vector<16x16xf32>, vector<16x16xf32>, vector<16x16xf32> -> vector<16x16xf32>
    %cst_38 = arith.constant 2.500000e-01 : f32
    %58 = vector.broadcast %cst_38 : f32 to vector<16x16xf32>
    %59 = arith.mulf %57, %58 : vector<16x16xf32>
    %60 = arith.addf %59, %1 : vector<16x16xf32>
    %cst_39 = arith.constant dense<0xFF800000> : vector<16xf32>
    %61 = vector.multi_reduction <maximumf>, %60, %cst_39 [1] : vector<16x16xf32> to vector<16xf32>
    %62 = vector.shape_cast %61 : vector<16xf32> to vector<16x1xf32>
    %63 = vector.broadcast %62 : vector<16x1xf32> to vector<16x16xf32>
    %64 = arith.subf %60, %63 : vector<16x16xf32>
    %65 = math.exp %64 : vector<16x16xf32>
    %cst_40 = arith.constant dense<0.000000e+00> : vector<16xf32>
    %66 = vector.multi_reduction <add>, %65, %cst_40 [1] : vector<16x16xf32> to vector<16xf32>
    %67 = vector.shape_cast %66 : vector<16xf32> to vector<16x1xf32>
    %68 = tpu.reciprocal %67 {approx = true} : vector<16x1xf32> -> vector<16x1xf32>
    %69 = vector.broadcast %68 : vector<16x1xf32> to vector<16x16xf32>
    %70 = arith.mulf %65, %69 : vector<16x16xf32>
    %cst_41 = arith.constant dense<0.000000e+00> : vector<16x16xf32>
    %71 = tpu.matmul %70, %56, %cst_41 {dimension_numbers = #tpu.dot_dimension_numbers<[1], [0], [0], [1], [0, 0, 1, 1], [], []>} : vector<16x16xf32>, vector<16x16xf32>, vector<16x16xf32> -> vector<16x16xf32>
    %72 = vector.extract_strided_slice %35 {offsets = [0, 0], sizes = [16, 32], strides = [1, 1]} : vector<32x32xf32> to vector<16x32xf32>
    %cst_42 = arith.constant dense<0.000000e+00> : vector<16x32xf32>
    %73 = tpu.matmul %71, %72, %cst_42 {dimension_numbers = #tpu.dot_dimension_numbers<[1], [0], [0], [1], [0, 0, 1, 1], [], []>} : vector<16x16xf32>, vector<16x32xf32>, vector<16x32xf32> -> vector<16x32xf32>
    %74 = vector.extract_strided_slice %29 {offsets = [0, 16], sizes = [32, 16], strides = [1, 1]} : vector<32x32xf32> to vector<32x16xf32>
    %cst_43 = arith.constant dense<0.000000e+00> : vector<16x16xf32>
    %75 = tpu.matmul %27, %74, %cst_43 {dimension_numbers = #tpu.dot_dimension_numbers<[1], [0], [0], [1], [0, 0, 1, 1], [], []>} : vector<16x32xf32>, vector<32x16xf32>, vector<16x16xf32> -> vector<16x16xf32>
    %76 = vector.extract_strided_slice %37 {offsets = [0, 16], sizes = [1, 16], strides = [1, 1]} : vector<1x32xf32> to vector<1x16xf32>
    %77 = vector.broadcast %76 : vector<1x16xf32> to vector<16x16xf32>
    %78 = arith.addf %75, %77 : vector<16x16xf32>
    %79 = vector.extract_strided_slice %31 {offsets = [0, 16], sizes = [32, 16], strides = [1, 1]} : vector<32x32xf32> to vector<32x16xf32>
    %cst_44 = arith.constant dense<0.000000e+00> : vector<16x16xf32>
    %80 = tpu.matmul %27, %79, %cst_44 {dimension_numbers = #tpu.dot_dimension_numbers<[1], [0], [0], [1], [0, 0, 1, 1], [], []>} : vector<16x32xf32>, vector<32x16xf32>, vector<16x16xf32> -> vector<16x16xf32>
    %81 = vector.extract_strided_slice %39 {offsets = [0, 16], sizes = [1, 16], strides = [1, 1]} : vector<1x32xf32> to vector<1x16xf32>
    %82 = vector.broadcast %81 : vector<1x16xf32> to vector<16x16xf32>
    %83 = arith.addf %80, %82 : vector<16x16xf32>
    %84 = vector.extract_strided_slice %33 {offsets = [0, 16], sizes = [32, 16], strides = [1, 1]} : vector<32x32xf32> to vector<32x16xf32>
    %cst_45 = arith.constant dense<0.000000e+00> : vector<16x16xf32>
    %85 = tpu.matmul %27, %84, %cst_45 {dimension_numbers = #tpu.dot_dimension_numbers<[1], [0], [0], [1], [0, 0, 1, 1], [], []>} : vector<16x32xf32>, vector<32x16xf32>, vector<16x16xf32> -> vector<16x16xf32>
    %86 = vector.extract_strided_slice %41 {offsets = [0, 16], sizes = [1, 16], strides = [1, 1]} : vector<1x32xf32> to vector<1x16xf32>
    %87 = vector.broadcast %86 : vector<1x16xf32> to vector<16x16xf32>
    %88 = arith.addf %85, %87 : vector<16x16xf32>
    %cst_46 = arith.constant dense<0.000000e+00> : vector<16x16xf32>
    %89 = tpu.matmul %78, %83, %cst_46 {dimension_numbers = #tpu.dot_dimension_numbers<[1], [1], [0], [0], [0, 0, 1, 0], [], []>} : vector<16x16xf32>, vector<16x16xf32>, vector<16x16xf32> -> vector<16x16xf32>
    %cst_47 = arith.constant 2.500000e-01 : f32
    %90 = vector.broadcast %cst_47 : f32 to vector<16x16xf32>
    %91 = arith.mulf %89, %90 : vector<16x16xf32>
    %92 = arith.addf %91, %1 : vector<16x16xf32>
    %cst_48 = arith.constant dense<0xFF800000> : vector<16xf32>
    %93 = vector.multi_reduction <maximumf>, %92, %cst_48 [1] : vector<16x16xf32> to vector<16xf32>
    %94 = vector.shape_cast %93 : vector<16xf32> to vector<16x1xf32>
    %95 = vector.broadcast %94 : vector<16x1xf32> to vector<16x16xf32>
    %96 = arith.subf %92, %95 : vector<16x16xf32>
    %97 = math.exp %96 : vector<16x16xf32>
    %cst_49 = arith.constant dense<0.000000e+00> : vector<16xf32>
    %98 = vector.multi_reduction <add>, %97, %cst_49 [1] : vector<16x16xf32> to vector<16xf32>
    %99 = vector.shape_cast %98 : vector<16xf32> to vector<16x1xf32>
    %100 = tpu.reciprocal %99 {approx = true} : vector<16x1xf32> -> vector<16x1xf32>
    %101 = vector.broadcast %100 : vector<16x1xf32> to vector<16x16xf32>
    %102 = arith.mulf %97, %101 : vector<16x16xf32>
    %cst_50 = arith.constant dense<0.000000e+00> : vector<16x16xf32>
    %103 = tpu.matmul %102, %88, %cst_50 {dimension_numbers = #tpu.dot_dimension_numbers<[1], [0], [0], [1], [0, 0, 1, 1], [], []>} : vector<16x16xf32>, vector<16x16xf32>, vector<16x16xf32> -> vector<16x16xf32>
    %104 = vector.extract_strided_slice %35 {offsets = [16, 0], sizes = [16, 32], strides = [1, 1]} : vector<32x32xf32> to vector<16x32xf32>
    %cst_51 = arith.constant dense<0.000000e+00> : vector<16x32xf32>
    %105 = tpu.matmul %103, %104, %cst_51 {dimension_numbers = #tpu.dot_dimension_numbers<[1], [0], [0], [1], [0, 0, 1, 1], [], []>} : vector<16x16xf32>, vector<16x32xf32>, vector<16x32xf32> -> vector<16x32xf32>
    %106 = arith.addf %73, %105 : vector<16x32xf32>
    %107 = arith.addf %0, %106 : vector<16x32xf32>
    %c0_52 = arith.constant 0 : index
    %c0_53 = arith.constant 0 : index
    %c0_54 = arith.constant 0 : index
    %108 = vector.load %arg12[%c0_52, %c0_53, %c0_54] : memref<2x1x32xf32, #tpu.memory_space<vmem>>, vector<1x1x32xf32>
    %109 = vector.shape_cast %108 : vector<1x1x32xf32> to vector<1x32xf32>
    %110 = vector.broadcast %109 : vector<1x32xf32> to vector<16x32xf32>
    %111 = arith.addf %107, %110 : vector<16x32xf32>
    %c0_55 = arith.constant 0 : index
    %c0_56 = arith.constant 0 : index
    %c0_57 = arith.constant 0 : index
    %112 = vector.load %arg13[%c0_55, %c0_56, %c0_57] : memref<2x1x32xf32, #tpu.memory_space<vmem>>, vector<1x1x32xf32>
    %113 = vector.shape_cast %112 : vector<1x1x32xf32> to vector<1x32xf32>
    %c0_58 = arith.constant 0 : index
    %c0_59 = arith.constant 0 : index
    %c0_60 = arith.constant 0 : index
    %114 = vector.load %arg14[%c0_58, %c0_59, %c0_60] : memref<2x1x32xf32, #tpu.memory_space<vmem>>, vector<1x1x32xf32>
    %115 = vector.shape_cast %114 : vector<1x1x32xf32> to vector<1x32xf32>
    %cst_61 = arith.constant dense<0.000000e+00> : vector<16xf32>
    %116 = vector.multi_reduction <add>, %111, %cst_61 [1] : vector<16x32xf32> to vector<16xf32>
    %117 = vector.shape_cast %116 : vector<16xf32> to vector<16x1xf32>
    %cst_62 = arith.constant 3.200000e+01 : f32
    %118 = vector.broadcast %cst_62 : f32 to vector<16x1xf32>
    %119 = arith.divf %117, %118 : vector<16x1xf32>
    %120 = vector.broadcast %119 : vector<16x1xf32> to vector<16x32xf32>
    %121 = arith.subf %111, %120 : vector<16x32xf32>
    %122 = arith.mulf %121, %121 : vector<16x32xf32>
    %cst_63 = arith.constant dense<0.000000e+00> : vector<16xf32>
    %123 = vector.multi_reduction <add>, %122, %cst_63 [1] : vector<16x32xf32> to vector<16xf32>
    %124 = vector.shape_cast %123 : vector<16xf32> to vector<16x1xf32>
    %cst_64 = arith.constant 3.200000e+01 : f32
    %125 = vector.broadcast %cst_64 : f32 to vector<16x1xf32>
    %126 = arith.divf %124, %125 : vector<16x1xf32>
    %127 = vector.broadcast %119 : vector<16x1xf32> to vector<16x32xf32>
    %128 = arith.subf %111, %127 : vector<16x32xf32>
    %cst_65 = arith.constant 9.99999974E-6 : f32
    %129 = vector.broadcast %cst_65 : f32 to vector<16x1xf32>
    %130 = arith.addf %126, %129 : vector<16x1xf32>
    %131 = math.rsqrt %130 : vector<16x1xf32>
    %132 = vector.broadcast %131 : vector<16x1xf32> to vector<16x32xf32>
    %133 = arith.mulf %128, %132 : vector<16x32xf32>
    %134 = vector.broadcast %113 : vector<1x32xf32> to vector<16x32xf32>
    %135 = arith.mulf %133, %134 : vector<16x32xf32>
    %136 = vector.broadcast %115 : vector<1x32xf32> to vector<16x32xf32>
    %137 = arith.addf %135, %136 : vector<16x32xf32>
    %c0_66 = arith.constant 0 : index
    %c0_67 = arith.constant 0 : index
    %c0_68 = arith.constant 0 : index
    %138 = vector.load %arg15[%c0_66, %c0_67, %c0_68] : memref<2x32x128xf32, #tpu.memory_space<vmem>>, vector<1x32x128xf32>
    %139 = vector.shape_cast %138 : vector<1x32x128xf32> to vector<32x128xf32>
    %cst_69 = arith.constant dense<0.000000e+00> : vector<16x128xf32>
    %140 = tpu.matmul %137, %139, %cst_69 {dimension_numbers = #tpu.dot_dimension_numbers<[1], [0], [0], [1], [0, 0, 1, 1], [], []>} : vector<16x32xf32>, vector<32x128xf32>, vector<16x128xf32> -> vector<16x128xf32>
    %c0_70 = arith.constant 0 : index
    %c0_71 = arith.constant 0 : index
    %c0_72 = arith.constant 0 : index
    %141 = vector.load %arg16[%c0_70, %c0_71, %c0_72] : memref<2x1x128xf32, #tpu.memory_space<vmem>>, vector<1x1x128xf32>
    %142 = vector.shape_cast %141 : vector<1x1x128xf32> to vector<1x128xf32>
    %143 = vector.broadcast %142 : vector<1x128xf32> to vector<16x128xf32>
    %144 = arith.addf %140, %143 : vector<16x128xf32>
    %cst_73 = arith.constant 0.000000e+00 : f32
    %145 = vector.broadcast %cst_73 : f32 to vector<16x128xf32>
    %146 = arith.maximumf %144, %145 : vector<16x128xf32>
    %c0_74 = arith.constant 0 : index
    %c0_75 = arith.constant 0 : index
    %c0_76 = arith.constant 0 : index
    %147 = vector.load %arg17[%c0_74, %c0_75, %c0_76] : memref<2x128x32xf32, #tpu.memory_space<vmem>>, vector<1x128x32xf32>
    %148 = vector.shape_cast %147 : vector<1x128x32xf32> to vector<128x32xf32>
    %cst_77 = arith.constant dense<0.000000e+00> : vector<16x32xf32>
    %149 = tpu.matmul %146, %148, %cst_77 {dimension_numbers = #tpu.dot_dimension_numbers<[1], [0], [0], [1], [0, 0, 1, 1], [], []>} : vector<16x128xf32>, vector<128x32xf32>, vector<16x32xf32> -> vector<16x32xf32>
    %150 = arith.addf %111, %149 : vector<16x32xf32>
    %c0_78 = arith.constant 0 : index
    %c0_79 = arith.constant 0 : index
    %c0_80 = arith.constant 0 : index
    %151 = vector.load %arg18[%c0_78, %c0_79, %c0_80] : memref<2x1x32xf32, #tpu.memory_space<vmem>>, vector<1x1x32xf32>
    %152 = vector.shape_cast %151 : vector<1x1x32xf32> to vector<1x32xf32>
    %153 = vector.broadcast %152 : vector<1x32xf32> to vector<16x32xf32>
    %154 = arith.addf %150, %153 : vector<16x32xf32>
    %c1 = arith.constant 1 : index
    %c0_81 = arith.constant 0 : index
    %c0_82 = arith.constant 0 : index
    %155 = vector.load %arg3[%c1, %c0_81, %c0_82] : memref<2x1x32xf32, #tpu.memory_space<vmem>>, vector<1x1x32xf32>
    %156 = vector.shape_cast %155 : vector<1x1x32xf32> to vector<1x32xf32>
    %c1_83 = arith.constant 1 : index
    %c0_84 = arith.constant 0 : index
    %c0_85 = arith.constant 0 : index
    %157 = vector.load %arg4[%c1_83, %c0_84, %c0_85] : memref<2x1x32xf32, #tpu.memory_space<vmem>>, vector<1x1x32xf32>
    %158 = vector.shape_cast %157 : vector<1x1x32xf32> to vector<1x32xf32>
    %cst_86 = arith.constant dense<0.000000e+00> : vector<16xf32>
    %159 = vector.multi_reduction <add>, %154, %cst_86 [1] : vector<16x32xf32> to vector<16xf32>
    %160 = vector.shape_cast %159 : vector<16xf32> to vector<16x1xf32>
    %cst_87 = arith.constant 3.200000e+01 : f32
    %161 = vector.broadcast %cst_87 : f32 to vector<16x1xf32>
    %162 = arith.divf %160, %161 : vector<16x1xf32>
    %163 = vector.broadcast %162 : vector<16x1xf32> to vector<16x32xf32>
    %164 = arith.subf %154, %163 : vector<16x32xf32>
    %165 = arith.mulf %164, %164 : vector<16x32xf32>
    %cst_88 = arith.constant dense<0.000000e+00> : vector<16xf32>
    %166 = vector.multi_reduction <add>, %165, %cst_88 [1] : vector<16x32xf32> to vector<16xf32>
    %167 = vector.shape_cast %166 : vector<16xf32> to vector<16x1xf32>
    %cst_89 = arith.constant 3.200000e+01 : f32
    %168 = vector.broadcast %cst_89 : f32 to vector<16x1xf32>
    %169 = arith.divf %167, %168 : vector<16x1xf32>
    %170 = vector.broadcast %162 : vector<16x1xf32> to vector<16x32xf32>
    %171 = arith.subf %154, %170 : vector<16x32xf32>
    %cst_90 = arith.constant 9.99999974E-6 : f32
    %172 = vector.broadcast %cst_90 : f32 to vector<16x1xf32>
    %173 = arith.addf %169, %172 : vector<16x1xf32>
    %174 = math.rsqrt %173 : vector<16x1xf32>
    %175 = vector.broadcast %174 : vector<16x1xf32> to vector<16x32xf32>
    %176 = arith.mulf %171, %175 : vector<16x32xf32>
    %177 = vector.broadcast %156 : vector<1x32xf32> to vector<16x32xf32>
    %178 = arith.mulf %176, %177 : vector<16x32xf32>
    %179 = vector.broadcast %158 : vector<1x32xf32> to vector<16x32xf32>
    %180 = arith.addf %178, %179 : vector<16x32xf32>
    %c1_91 = arith.constant 1 : index
    %c0_92 = arith.constant 0 : index
    %c0_93 = arith.constant 0 : index
    %181 = vector.load %arg5[%c1_91, %c0_92, %c0_93] : memref<2x32x32xf32, #tpu.memory_space<vmem>>, vector<1x32x32xf32>
    %182 = vector.shape_cast %181 : vector<1x32x32xf32> to vector<32x32xf32>
    %c1_94 = arith.constant 1 : index
    %c0_95 = arith.constant 0 : index
    %c0_96 = arith.constant 0 : index
    %183 = vector.load %arg7[%c1_94, %c0_95, %c0_96] : memref<2x32x32xf32, #tpu.memory_space<vmem>>, vector<1x32x32xf32>
    %184 = vector.shape_cast %183 : vector<1x32x32xf32> to vector<32x32xf32>
    %c1_97 = arith.constant 1 : index
    %c0_98 = arith.constant 0 : index
    %c0_99 = arith.constant 0 : index
    %185 = vector.load %arg9[%c1_97, %c0_98, %c0_99] : memref<2x32x32xf32, #tpu.memory_space<vmem>>, vector<1x32x32xf32>
    %186 = vector.shape_cast %185 : vector<1x32x32xf32> to vector<32x32xf32>
    %c1_100 = arith.constant 1 : index
    %c0_101 = arith.constant 0 : index
    %c0_102 = arith.constant 0 : index
    %187 = vector.load %arg11[%c1_100, %c0_101, %c0_102] : memref<2x32x32xf32, #tpu.memory_space<vmem>>, vector<1x32x32xf32>
    %188 = vector.shape_cast %187 : vector<1x32x32xf32> to vector<32x32xf32>
    %c1_103 = arith.constant 1 : index
    %c0_104 = arith.constant 0 : index
    %c0_105 = arith.constant 0 : index
    %189 = vector.load %arg6[%c1_103, %c0_104, %c0_105] : memref<2x1x32xf32, #tpu.memory_space<vmem>>, vector<1x1x32xf32>
    %190 = vector.shape_cast %189 : vector<1x1x32xf32> to vector<1x32xf32>
    %c1_106 = arith.constant 1 : index
    %c0_107 = arith.constant 0 : index
    %c0_108 = arith.constant 0 : index
    %191 = vector.load %arg8[%c1_106, %c0_107, %c0_108] : memref<2x1x32xf32, #tpu.memory_space<vmem>>, vector<1x1x32xf32>
    %192 = vector.shape_cast %191 : vector<1x1x32xf32> to vector<1x32xf32>
    %c1_109 = arith.constant 1 : index
    %c0_110 = arith.constant 0 : index
    %c0_111 = arith.constant 0 : index
    %193 = vector.load %arg10[%c1_109, %c0_110, %c0_111] : memref<2x1x32xf32, #tpu.memory_space<vmem>>, vector<1x1x32xf32>
    %194 = vector.shape_cast %193 : vector<1x1x32xf32> to vector<1x32xf32>
    %195 = vector.extract_strided_slice %182 {offsets = [0, 0], sizes = [32, 16], strides = [1, 1]} : vector<32x32xf32> to vector<32x16xf32>
    %cst_112 = arith.constant dense<0.000000e+00> : vector<16x16xf32>
    %196 = tpu.matmul %180, %195, %cst_112 {dimension_numbers = #tpu.dot_dimension_numbers<[1], [0], [0], [1], [0, 0, 1, 1], [], []>} : vector<16x32xf32>, vector<32x16xf32>, vector<16x16xf32> -> vector<16x16xf32>
    %197 = vector.extract_strided_slice %190 {offsets = [0, 0], sizes = [1, 16], strides = [1, 1]} : vector<1x32xf32> to vector<1x16xf32>
    %198 = vector.broadcast %197 : vector<1x16xf32> to vector<16x16xf32>
    %199 = arith.addf %196, %198 : vector<16x16xf32>
    %200 = vector.extract_strided_slice %184 {offsets = [0, 0], sizes = [32, 16], strides = [1, 1]} : vector<32x32xf32> to vector<32x16xf32>
    %cst_113 = arith.constant dense<0.000000e+00> : vector<16x16xf32>
    %201 = tpu.matmul %180, %200, %cst_113 {dimension_numbers = #tpu.dot_dimension_numbers<[1], [0], [0], [1], [0, 0, 1, 1], [], []>} : vector<16x32xf32>, vector<32x16xf32>, vector<16x16xf32> -> vector<16x16xf32>
    %202 = vector.extract_strided_slice %192 {offsets = [0, 0], sizes = [1, 16], strides = [1, 1]} : vector<1x32xf32> to vector<1x16xf32>
    %203 = vector.broadcast %202 : vector<1x16xf32> to vector<16x16xf32>
    %204 = arith.addf %201, %203 : vector<16x16xf32>
    %205 = vector.extract_strided_slice %186 {offsets = [0, 0], sizes = [32, 16], strides = [1, 1]} : vector<32x32xf32> to vector<32x16xf32>
    %cst_114 = arith.constant dense<0.000000e+00> : vector<16x16xf32>
    %206 = tpu.matmul %180, %205, %cst_114 {dimension_numbers = #tpu.dot_dimension_numbers<[1], [0], [0], [1], [0, 0, 1, 1], [], []>} : vector<16x32xf32>, vector<32x16xf32>, vector<16x16xf32> -> vector<16x16xf32>
    %207 = vector.extract_strided_slice %194 {offsets = [0, 0], sizes = [1, 16], strides = [1, 1]} : vector<1x32xf32> to vector<1x16xf32>
    %208 = vector.broadcast %207 : vector<1x16xf32> to vector<16x16xf32>
    %209 = arith.addf %206, %208 : vector<16x16xf32>
    %cst_115 = arith.constant dense<0.000000e+00> : vector<16x16xf32>
    %210 = tpu.matmul %199, %204, %cst_115 {dimension_numbers = #tpu.dot_dimension_numbers<[1], [1], [0], [0], [0, 0, 1, 0], [], []>} : vector<16x16xf32>, vector<16x16xf32>, vector<16x16xf32> -> vector<16x16xf32>
    %cst_116 = arith.constant 2.500000e-01 : f32
    %211 = vector.broadcast %cst_116 : f32 to vector<16x16xf32>
    %212 = arith.mulf %210, %211 : vector<16x16xf32>
    %213 = arith.addf %212, %1 : vector<16x16xf32>
    %cst_117 = arith.constant dense<0xFF800000> : vector<16xf32>
    %214 = vector.multi_reduction <maximumf>, %213, %cst_117 [1] : vector<16x16xf32> to vector<16xf32>
    %215 = vector.shape_cast %214 : vector<16xf32> to vector<16x1xf32>
    %216 = vector.broadcast %215 : vector<16x1xf32> to vector<16x16xf32>
    %217 = arith.subf %213, %216 : vector<16x16xf32>
    %218 = math.exp %217 : vector<16x16xf32>
    %cst_118 = arith.constant dense<0.000000e+00> : vector<16xf32>
    %219 = vector.multi_reduction <add>, %218, %cst_118 [1] : vector<16x16xf32> to vector<16xf32>
    %220 = vector.shape_cast %219 : vector<16xf32> to vector<16x1xf32>
    %221 = tpu.reciprocal %220 {approx = true} : vector<16x1xf32> -> vector<16x1xf32>
    %222 = vector.broadcast %221 : vector<16x1xf32> to vector<16x16xf32>
    %223 = arith.mulf %218, %222 : vector<16x16xf32>
    %cst_119 = arith.constant dense<0.000000e+00> : vector<16x16xf32>
    %224 = tpu.matmul %223, %209, %cst_119 {dimension_numbers = #tpu.dot_dimension_numbers<[1], [0], [0], [1], [0, 0, 1, 1], [], []>} : vector<16x16xf32>, vector<16x16xf32>, vector<16x16xf32> -> vector<16x16xf32>
    %225 = vector.extract_strided_slice %188 {offsets = [0, 0], sizes = [16, 32], strides = [1, 1]} : vector<32x32xf32> to vector<16x32xf32>
    %cst_120 = arith.constant dense<0.000000e+00> : vector<16x32xf32>
    %226 = tpu.matmul %224, %225, %cst_120 {dimension_numbers = #tpu.dot_dimension_numbers<[1], [0], [0], [1], [0, 0, 1, 1], [], []>} : vector<16x16xf32>, vector<16x32xf32>, vector<16x32xf32> -> vector<16x32xf32>
    %227 = vector.extract_strided_slice %182 {offsets = [0, 16], sizes = [32, 16], strides = [1, 1]} : vector<32x32xf32> to vector<32x16xf32>
    %cst_121 = arith.constant dense<0.000000e+00> : vector<16x16xf32>
    %228 = tpu.matmul %180, %227, %cst_121 {dimension_numbers = #tpu.dot_dimension_numbers<[1], [0], [0], [1], [0, 0, 1, 1], [], []>} : vector<16x32xf32>, vector<32x16xf32>, vector<16x16xf32> -> vector<16x16xf32>
    %229 = vector.extract_strided_slice %190 {offsets = [0, 16], sizes = [1, 16], strides = [1, 1]} : vector<1x32xf32> to vector<1x16xf32>
    %230 = vector.broadcast %229 : vector<1x16xf32> to vector<16x16xf32>
    %231 = arith.addf %228, %230 : vector<16x16xf32>
    %232 = vector.extract_strided_slice %184 {offsets = [0, 16], sizes = [32, 16], strides = [1, 1]} : vector<32x32xf32> to vector<32x16xf32>
    %cst_122 = arith.constant dense<0.000000e+00> : vector<16x16xf32>
    %233 = tpu.matmul %180, %232, %cst_122 {dimension_numbers = #tpu.dot_dimension_numbers<[1], [0], [0], [1], [0, 0, 1, 1], [], []>} : vector<16x32xf32>, vector<32x16xf32>, vector<16x16xf32> -> vector<16x16xf32>
    %234 = vector.extract_strided_slice %192 {offsets = [0, 16], sizes = [1, 16], strides = [1, 1]} : vector<1x32xf32> to vector<1x16xf32>
    %235 = vector.broadcast %234 : vector<1x16xf32> to vector<16x16xf32>
    %236 = arith.addf %233, %235 : vector<16x16xf32>
    %237 = vector.extract_strided_slice %186 {offsets = [0, 16], sizes = [32, 16], strides = [1, 1]} : vector<32x32xf32> to vector<32x16xf32>
    %cst_123 = arith.constant dense<0.000000e+00> : vector<16x16xf32>
    %238 = tpu.matmul %180, %237, %cst_123 {dimension_numbers = #tpu.dot_dimension_numbers<[1], [0], [0], [1], [0, 0, 1, 1], [], []>} : vector<16x32xf32>, vector<32x16xf32>, vector<16x16xf32> -> vector<16x16xf32>
    %239 = vector.extract_strided_slice %194 {offsets = [0, 16], sizes = [1, 16], strides = [1, 1]} : vector<1x32xf32> to vector<1x16xf32>
    %240 = vector.broadcast %239 : vector<1x16xf32> to vector<16x16xf32>
    %241 = arith.addf %238, %240 : vector<16x16xf32>
    %cst_124 = arith.constant dense<0.000000e+00> : vector<16x16xf32>
    %242 = tpu.matmul %231, %236, %cst_124 {dimension_numbers = #tpu.dot_dimension_numbers<[1], [1], [0], [0], [0, 0, 1, 0], [], []>} : vector<16x16xf32>, vector<16x16xf32>, vector<16x16xf32> -> vector<16x16xf32>
    %cst_125 = arith.constant 2.500000e-01 : f32
    %243 = vector.broadcast %cst_125 : f32 to vector<16x16xf32>
    %244 = arith.mulf %242, %243 : vector<16x16xf32>
    %245 = arith.addf %244, %1 : vector<16x16xf32>
    %cst_126 = arith.constant dense<0xFF800000> : vector<16xf32>
    %246 = vector.multi_reduction <maximumf>, %245, %cst_126 [1] : vector<16x16xf32> to vector<16xf32>
    %247 = vector.shape_cast %246 : vector<16xf32> to vector<16x1xf32>
    %248 = vector.broadcast %247 : vector<16x1xf32> to vector<16x16xf32>
    %249 = arith.subf %245, %248 : vector<16x16xf32>
    %250 = math.exp %249 : vector<16x16xf32>
    %cst_127 = arith.constant dense<0.000000e+00> : vector<16xf32>
    %251 = vector.multi_reduction <add>, %250, %cst_127 [1] : vector<16x16xf32> to vector<16xf32>
    %252 = vector.shape_cast %251 : vector<16xf32> to vector<16x1xf32>
    %253 = tpu.reciprocal %252 {approx = true} : vector<16x1xf32> -> vector<16x1xf32>
    %254 = vector.broadcast %253 : vector<16x1xf32> to vector<16x16xf32>
    %255 = arith.mulf %250, %254 : vector<16x16xf32>
    %cst_128 = arith.constant dense<0.000000e+00> : vector<16x16xf32>
    %256 = tpu.matmul %255, %241, %cst_128 {dimension_numbers = #tpu.dot_dimension_numbers<[1], [0], [0], [1], [0, 0, 1, 1], [], []>} : vector<16x16xf32>, vector<16x16xf32>, vector<16x16xf32> -> vector<16x16xf32>
    %257 = vector.extract_strided_slice %188 {offsets = [16, 0], sizes = [16, 32], strides = [1, 1]} : vector<32x32xf32> to vector<16x32xf32>
    %cst_129 = arith.constant dense<0.000000e+00> : vector<16x32xf32>
    %258 = tpu.matmul %256, %257, %cst_129 {dimension_numbers = #tpu.dot_dimension_numbers<[1], [0], [0], [1], [0, 0, 1, 1], [], []>} : vector<16x16xf32>, vector<16x32xf32>, vector<16x32xf32> -> vector<16x32xf32>
    %259 = arith.addf %226, %258 : vector<16x32xf32>
    %260 = arith.addf %154, %259 : vector<16x32xf32>
    %c1_130 = arith.constant 1 : index
    %c0_131 = arith.constant 0 : index
    %c0_132 = arith.constant 0 : index
    %261 = vector.load %arg12[%c1_130, %c0_131, %c0_132] : memref<2x1x32xf32, #tpu.memory_space<vmem>>, vector<1x1x32xf32>
    %262 = vector.shape_cast %261 : vector<1x1x32xf32> to vector<1x32xf32>
    %263 = vector.broadcast %262 : vector<1x32xf32> to vector<16x32xf32>
    %264 = arith.addf %260, %263 : vector<16x32xf32>
    %c1_133 = arith.constant 1 : index
    %c0_134 = arith.constant 0 : index
    %c0_135 = arith.constant 0 : index
    %265 = vector.load %arg13[%c1_133, %c0_134, %c0_135] : memref<2x1x32xf32, #tpu.memory_space<vmem>>, vector<1x1x32xf32>
    %266 = vector.shape_cast %265 : vector<1x1x32xf32> to vector<1x32xf32>
    %c1_136 = arith.constant 1 : index
    %c0_137 = arith.constant 0 : index
    %c0_138 = arith.constant 0 : index
    %267 = vector.load %arg14[%c1_136, %c0_137, %c0_138] : memref<2x1x32xf32, #tpu.memory_space<vmem>>, vector<1x1x32xf32>
    %268 = vector.shape_cast %267 : vector<1x1x32xf32> to vector<1x32xf32>
    %cst_139 = arith.constant dense<0.000000e+00> : vector<16xf32>
    %269 = vector.multi_reduction <add>, %264, %cst_139 [1] : vector<16x32xf32> to vector<16xf32>
    %270 = vector.shape_cast %269 : vector<16xf32> to vector<16x1xf32>
    %cst_140 = arith.constant 3.200000e+01 : f32
    %271 = vector.broadcast %cst_140 : f32 to vector<16x1xf32>
    %272 = arith.divf %270, %271 : vector<16x1xf32>
    %273 = vector.broadcast %272 : vector<16x1xf32> to vector<16x32xf32>
    %274 = arith.subf %264, %273 : vector<16x32xf32>
    %275 = arith.mulf %274, %274 : vector<16x32xf32>
    %cst_141 = arith.constant dense<0.000000e+00> : vector<16xf32>
    %276 = vector.multi_reduction <add>, %275, %cst_141 [1] : vector<16x32xf32> to vector<16xf32>
    %277 = vector.shape_cast %276 : vector<16xf32> to vector<16x1xf32>
    %cst_142 = arith.constant 3.200000e+01 : f32
    %278 = vector.broadcast %cst_142 : f32 to vector<16x1xf32>
    %279 = arith.divf %277, %278 : vector<16x1xf32>
    %280 = vector.broadcast %272 : vector<16x1xf32> to vector<16x32xf32>
    %281 = arith.subf %264, %280 : vector<16x32xf32>
    %cst_143 = arith.constant 9.99999974E-6 : f32
    %282 = vector.broadcast %cst_143 : f32 to vector<16x1xf32>
    %283 = arith.addf %279, %282 : vector<16x1xf32>
    %284 = math.rsqrt %283 : vector<16x1xf32>
    %285 = vector.broadcast %284 : vector<16x1xf32> to vector<16x32xf32>
    %286 = arith.mulf %281, %285 : vector<16x32xf32>
    %287 = vector.broadcast %266 : vector<1x32xf32> to vector<16x32xf32>
    %288 = arith.mulf %286, %287 : vector<16x32xf32>
    %289 = vector.broadcast %268 : vector<1x32xf32> to vector<16x32xf32>
    %290 = arith.addf %288, %289 : vector<16x32xf32>
    %c1_144 = arith.constant 1 : index
    %c0_145 = arith.constant 0 : index
    %c0_146 = arith.constant 0 : index
    %291 = vector.load %arg15[%c1_144, %c0_145, %c0_146] : memref<2x32x128xf32, #tpu.memory_space<vmem>>, vector<1x32x128xf32>
    %292 = vector.shape_cast %291 : vector<1x32x128xf32> to vector<32x128xf32>
    %cst_147 = arith.constant dense<0.000000e+00> : vector<16x128xf32>
    %293 = tpu.matmul %290, %292, %cst_147 {dimension_numbers = #tpu.dot_dimension_numbers<[1], [0], [0], [1], [0, 0, 1, 1], [], []>} : vector<16x32xf32>, vector<32x128xf32>, vector<16x128xf32> -> vector<16x128xf32>
    %c1_148 = arith.constant 1 : index
    %c0_149 = arith.constant 0 : index
    %c0_150 = arith.constant 0 : index
    %294 = vector.load %arg16[%c1_148, %c0_149, %c0_150] : memref<2x1x128xf32, #tpu.memory_space<vmem>>, vector<1x1x128xf32>
    %295 = vector.shape_cast %294 : vector<1x1x128xf32> to vector<1x128xf32>
    %296 = vector.broadcast %295 : vector<1x128xf32> to vector<16x128xf32>
    %297 = arith.addf %293, %296 : vector<16x128xf32>
    %cst_151 = arith.constant 0.000000e+00 : f32
    %298 = vector.broadcast %cst_151 : f32 to vector<16x128xf32>
    %299 = arith.maximumf %297, %298 : vector<16x128xf32>
    %c1_152 = arith.constant 1 : index
    %c0_153 = arith.constant 0 : index
    %c0_154 = arith.constant 0 : index
    %300 = vector.load %arg17[%c1_152, %c0_153, %c0_154] : memref<2x128x32xf32, #tpu.memory_space<vmem>>, vector<1x128x32xf32>
    %301 = vector.shape_cast %300 : vector<1x128x32xf32> to vector<128x32xf32>
    %cst_155 = arith.constant dense<0.000000e+00> : vector<16x32xf32>
    %302 = tpu.matmul %299, %301, %cst_155 {dimension_numbers = #tpu.dot_dimension_numbers<[1], [0], [0], [1], [0, 0, 1, 1], [], []>} : vector<16x128xf32>, vector<128x32xf32>, vector<16x32xf32> -> vector<16x32xf32>
    %303 = arith.addf %264, %302 : vector<16x32xf32>
    %c1_156 = arith.constant 1 : index
    %c0_157 = arith.constant 0 : index
    %c0_158 = arith.constant 0 : index
    %304 = vector.load %arg18[%c1_156, %c0_157, %c0_158] : memref<2x1x32xf32, #tpu.memory_space<vmem>>, vector<1x1x32xf32>
    %305 = vector.shape_cast %304 : vector<1x1x32xf32> to vector<1x32xf32>
    %306 = vector.broadcast %305 : vector<1x32xf32> to vector<16x32xf32>
    %307 = arith.addf %303, %306 : vector<16x32xf32>
    %c0_159 = arith.constant 0 : index
    %c0_160 = arith.constant 0 : index
    %308 = vector.load %arg19[%c0_159, %c0_160] : memref<1x32xf32, #tpu.memory_space<vmem>>, vector<1x32xf32>
    %c0_161 = arith.constant 0 : index
    %c0_162 = arith.constant 0 : index
    %309 = vector.load %arg20[%c0_161, %c0_162] : memref<1x32xf32, #tpu.memory_space<vmem>>, vector<1x32xf32>
    %cst_163 = arith.constant dense<0.000000e+00> : vector<16xf32>
    %310 = vector.multi_reduction <add>, %307, %cst_163 [1] : vector<16x32xf32> to vector<16xf32>
    %311 = vector.shape_cast %310 : vector<16xf32> to vector<16x1xf32>
    %cst_164 = arith.constant 3.200000e+01 : f32
    %312 = vector.broadcast %cst_164 : f32 to vector<16x1xf32>
    %313 = arith.divf %311, %312 : vector<16x1xf32>
    %314 = vector.broadcast %313 : vector<16x1xf32> to vector<16x32xf32>
    %315 = arith.subf %307, %314 : vector<16x32xf32>
    %316 = arith.mulf %315, %315 : vector<16x32xf32>
    %cst_165 = arith.constant dense<0.000000e+00> : vector<16xf32>
    %317 = vector.multi_reduction <add>, %316, %cst_165 [1] : vector<16x32xf32> to vector<16xf32>
    %318 = vector.shape_cast %317 : vector<16xf32> to vector<16x1xf32>
    %cst_166 = arith.constant 3.200000e+01 : f32
    %319 = vector.broadcast %cst_166 : f32 to vector<16x1xf32>
    %320 = arith.divf %318, %319 : vector<16x1xf32>
    %321 = vector.broadcast %313 : vector<16x1xf32> to vector<16x32xf32>
    %322 = arith.subf %307, %321 : vector<16x32xf32>
    %cst_167 = arith.constant 9.99999974E-6 : f32
    %323 = vector.broadcast %cst_167 : f32 to vector<16x1xf32>
    %324 = arith.addf %320, %323 : vector<16x1xf32>
    %325 = math.rsqrt %324 : vector<16x1xf32>
    %326 = vector.broadcast %325 : vector<16x1xf32> to vector<16x32xf32>
    %327 = arith.mulf %322, %326 : vector<16x32xf32>
    %328 = vector.broadcast %308 : vector<1x32xf32> to vector<16x32xf32>
    %329 = arith.mulf %327, %328 : vector<16x32xf32>
    %330 = vector.broadcast %309 : vector<1x32xf32> to vector<16x32xf32>
    %331 = arith.addf %329, %330 : vector<16x32xf32>
    %c0_168 = arith.constant 0 : index
    %c0_169 = arith.constant 0 : index
    %332 = vector.load %arg21[%c0_168, %c0_169] : memref<1x32xf32, #tpu.memory_space<vmem>>, vector<1x32xf32>
    %cst_170 = arith.constant dense<0.000000e+00> : vector<1x16xf32>
    %333 = tpu.matmul %332, %331, %cst_170 {dimension_numbers = #tpu.dot_dimension_numbers<[1], [1], [0], [0], [0, 0, 1, 0], [], []>} : vector<1x32xf32>, vector<16x32xf32>, vector<1x16xf32> -> vector<1x16xf32>
    %c0_171 = arith.constant 0 : index
    %c0_172 = arith.constant 0 : index
    %334 = vector.load %arg22[%c0_171, %c0_172] : memref<1x1xf32, #tpu.memory_space<vmem>>, vector<1x1xf32>
    %335 = vector.broadcast %334 : vector<1x1xf32> to vector<1x16xf32>
    %336 = arith.addf %333, %335 : vector<1x16xf32>
    %c0_173 = arith.constant 0 : index
    %c0_174 = arith.constant 0 : index
    %337 = vector.load %arg23[%c0_173, %c0_174] : memref<1x16xf32, #tpu.memory_space<vmem>>, vector<1x16xf32>
    tpu.vector_store %arg23[%c0_173, %c0_174], %336 {strides = array<i32>} : memref<1x16xf32, #tpu.memory_space<vmem>>, vector<1x16xf32>,
    return
  }
  func.func @transform_0(%arg0: i32) -> (i32, i32) {
    %c0_i32 = arith.constant 0 : i32
    %c0_i32_0 = arith.constant 0 : i32
    %c0_i32_1 = arith.constant 0 : i32
    return %c0_i32, %c0_i32_0 : i32, i32
  }
  func.func @transform_1(%arg0: i32) -> (i32, i32) {
    %c0_i32 = arith.constant 0 : i32
    %c0_i32_0 = arith.constant 0 : i32
    %c0_i32_1 = arith.constant 0 : i32
    return %c0_i32, %c0_i32_0 : i32, i32
  }
  func.func @transform_2(%arg0: i32) -> (i32, i32, i32) {
    %c0_i32 = arith.constant 0 : i32
    %c0_i32_0 = arith.constant 0 : i32
    %c0_i32_1 = arith.constant 0 : i32
    %c0_i32_2 = arith.constant 0 : i32
    return %c0_i32, %c0_i32_0, %c0_i32_1 : i32, i32, i32
  }
  func.func @transform_3(%arg0: i32) -> (i32, i32, i32) {
    %c0_i32 = arith.constant 0 : i32
    %c0_i32_0 = arith.constant 0 : i32
    %c0_i32_1 = arith.constant 0 : i32
    %c0_i32_2 = arith.constant 0 : i32
    return %c0_i32, %c0_i32_0, %c0_i32_1 : i32, i32, i32
  }
  func.func @transform_4(%arg0: i32) -> (i32, i32, i32) {
    %c0_i32 = arith.constant 0 : i32
    %c0_i32_0 = arith.constant 0 : i32
    %c0_i32_1 = arith.constant 0 : i32
    %c0_i32_2 = arith.constant 0 : i32
    return %c0_i32, %c0_i32_0, %c0_i32_1 : i32, i32, i32
  }
  func.func @transform_5(%arg0: i32) -> (i32, i32, i32) {
    %c0_i32 = arith.constant 0 : i32
    %c0_i32_0 = arith.constant 0 : i32
    %c0_i32_1 = arith.constant 0 : i32
    %c0_i32_2 = arith.constant 0 : i32
    return %c0_i32, %c0_i32_0, %c0_i32_1 : i32, i32, i32
  }
  func.func @transform_6(%arg0: i32) -> (i32, i32, i32) {
    %c0_i32 = arith.constant 0 : i32
    %c0_i32_0 = arith.constant 0 : i32
    %c0_i32_1 = arith.constant 0 : i32
    %c0_i32_2 = arith.constant 0 : i32
    return %c0_i32, %c0_i32_0, %c0_i32_1 : i32, i32, i32
  }
  func.func @transform_7(%arg0: i32) -> (i32, i32, i32) {
    %c0_i32 = arith.constant 0 : i32
    %c0_i32_0 = arith.constant 0 : i32
    %c0_i32_1 = arith.constant 0 : i32
    %c0_i32_2 = arith.constant 0 : i32
    return %c0_i32, %c0_i32_0, %c0_i32_1 : i32, i32, i32
  }
  func.func @transform_8(%arg0: i32) -> (i32, i32, i32) {
    %c0_i32 = arith.constant 0 : i32
    %c0_i32_0 = arith.constant 0 : i32
    %c0_i32_1 = arith.constant 0 : i32
    %c0_i32_2 = arith.constant 0 : i32
    return %c0_i32, %c0_i32_0, %c0_i32_1 : i32, i32, i32
  }
  func.func @transform_9(%arg0: i32) -> (i32, i32, i32) {
    %c0_i32 = arith.constant 0 : i32
    %c0_i32_0 = arith.constant 0 : i32
    %c0_i32_1 = arith.constant 0 : i32
    %c0_i32_2 = arith.constant 0 : i32
    return %c0_i32, %c0_i32_0, %c0_i32_1 : i32, i32, i32
  }
  func.func @transform_10(%arg0: i32) -> (i32, i32, i32) {
    %c0_i32 = arith.constant 0 : i32
    %c0_i32_0 = arith.constant 0 : i32
    %c0_i32_1 = arith.constant 0 : i32
    %c0_i32_2 = arith.constant 0 : i32
    return %c0_i32, %c0_i32_0, %c0_i32_1 : i32, i32, i32
  }
  func.func @transform_11(%arg0: i32) -> (i32, i32, i32) {
    %c0_i32 = arith.constant 0 : i32
    %c0_i32_0 = arith.constant 0 : i32
    %c0_i32_1 = arith.constant 0 : i32
    %c0_i32_2 = arith.constant 0 : i32
    return %c0_i32, %c0_i32_0, %c0_i32_1 : i32, i32, i32
  }
  func.func @transform_12(%arg0: i32) -> (i32, i32, i32) {
    %c0_i32 = arith.constant 0 : i32
    %c0_i32_0 = arith.constant 0 : i32
    %c0_i32_1 = arith.constant 0 : i32
    %c0_i32_2 = arith.constant 0 : i32
    return %c0_i32, %c0_i32_0, %c0_i32_1 : i32, i32, i32
  }
  func.func @transform_13(%arg0: i32) -> (i32, i32, i32) {
    %c0_i32 = arith.constant 0 : i32
    %c0_i32_0 = arith.constant 0 : i32
    %c0_i32_1 = arith.constant 0 : i32
    %c0_i32_2 = arith.constant 0 : i32
    return %c0_i32, %c0_i32_0, %c0_i32_1 : i32, i32, i32
  }
  func.func @transform_14(%arg0: i32) -> (i32, i32, i32) {
    %c0_i32 = arith.constant 0 : i32
    %c0_i32_0 = arith.constant 0 : i32
    %c0_i32_1 = arith.constant 0 : i32
    %c0_i32_2 = arith.constant 0 : i32
    return %c0_i32, %c0_i32_0, %c0_i32_1 : i32, i32, i32
  }
  func.func @transform_15(%arg0: i32) -> (i32, i32, i32) {
    %c0_i32 = arith.constant 0 : i32
    %c0_i32_0 = arith.constant 0 : i32
    %c0_i32_1 = arith.constant 0 : i32
    %c0_i32_2 = arith.constant 0 : i32
    return %c0_i32, %c0_i32_0, %c0_i32_1 : i32, i32, i32
  }
  func.func @transform_16(%arg0: i32) -> (i32, i32, i32) {
    %c0_i32 = arith.constant 0 : i32
    %c0_i32_0 = arith.constant 0 : i32
    %c0_i32_1 = arith.constant 0 : i32
    %c0_i32_2 = arith.constant 0 : i32
    return %c0_i32, %c0_i32_0, %c0_i32_1 : i32, i32, i32
  }
  func.func @transform_17(%arg0: i32) -> (i32, i32, i32) {
    %c0_i32 = arith.constant 0 : i32
    %c0_i32_0 = arith.constant 0 : i32
    %c0_i32_1 = arith.constant 0 : i32
    %c0_i32_2 = arith.constant 0 : i32
    return %c0_i32, %c0_i32_0, %c0_i32_1 : i32, i32, i32
  }
  func.func @transform_18(%arg0: i32) -> (i32, i32) {
    %c0_i32 = arith.constant 0 : i32
    %c0_i32_0 = arith.constant 0 : i32
    %c0_i32_1 = arith.constant 0 : i32
    return %c0_i32, %c0_i32_0 : i32, i32
  }
  func.func @transform_19(%arg0: i32) -> (i32, i32) {
    %c0_i32 = arith.constant 0 : i32
    %c0_i32_0 = arith.constant 0 : i32
    %c0_i32_1 = arith.constant 0 : i32
    return %c0_i32, %c0_i32_0 : i32, i32
  }
  func.func @transform_20(%arg0: i32) -> (i32, i32) {
    %c0_i32 = arith.constant 0 : i32
    %c0_i32_0 = arith.constant 0 : i32
    %c0_i32_1 = arith.constant 0 : i32
    return %c0_i32, %c0_i32_0 : i32, i32
  }
  func.func @transform_21(%arg0: i32) -> (i32, i32) {
    %c0_i32 = arith.constant 0 : i32
    %c0_i32_0 = arith.constant 0 : i32
    %c0_i32_1 = arith.constant 0 : i32
    return %c0_i32, %c0_i32_0 : i32, i32
  }
  func.func @transform_22(%arg0: i32) -> (i32, i32) {
    %c0_i32 = arith.constant 0 : i32
    %c0_i32_0 = arith.constant 0 : i32
    %c0_i32_1 = arith.constant 0 : i32
    return %c0_i32, %c0_i32_0 : i32, i32
  }
}

</mosaic_0001>

<llo_original>
// kernel: model_forward.1
$region0: #{model_forward.1}
  #allocation0 [shape = 'u32[]', space=smem, size = 0x4, offset = 0x4, fixed_abs, tag = 'smem constant byte address 0x4 - core index']
  #allocation1 [shape = 'u32[144,128]{1,0:T(1,128)}', space=vmem, size = 0x12000, scoped, tag = 'internal scratch']
  #allocation2 [shape = 'f32[1,1]{1,0:T(1,128)S(1)}', space=vmem, size = 0x200, scoped, tag = 'scoped memory for model_forward.1']
  %s0 = inlined_call_operand.vmem [shape: f32[16,32], index: 0, kind: input, shape index: {}]
  %s1 = inlined_call_operand.vmem [shape: f32[16,16], index: 1, kind: input, shape index: {}]
  %s2 = inlined_call_operand.vmem [shape: f32[2,1,32], index: 2, kind: input, shape index: {}]
  %s3 = inlined_call_operand.vmem [shape: f32[2,1,32], index: 3, kind: input, shape index: {}]
  %s4 = inlined_call_operand.vmem [shape: f32[2,32,32], index: 4, kind: input, shape index: {}]
  %s5 = inlined_call_operand.vmem [shape: f32[2,1,32], index: 5, kind: input, shape index: {}]
  %s6 = inlined_call_operand.vmem [shape: f32[2,32,32], index: 6, kind: input, shape index: {}]
  %s7 = inlined_call_operand.vmem [shape: f32[2,1,32], index: 7, kind: input, shape index: {}]
  %s8 = inlined_call_operand.vmem [shape: f32[2,32,32], index: 8, kind: input, shape index: {}]
  %s9 = inlined_call_operand.vmem [shape: f32[2,1,32], index: 9, kind: input, shape index: {}]
  %s10 = inlined_call_operand.vmem [shape: f32[2,32,32], index: 10, kind: input, shape index: {}]
  %s11 = inlined_call_operand.vmem [shape: f32[2,1,32], index: 11, kind: input, shape index: {}]
  %s12 = inlined_call_operand.vmem [shape: f32[2,1,32], index: 12, kind: input, shape index: {}]
  %s13 = inlined_call_operand.vmem [shape: f32[2,1,32], index: 13, kind: input, shape index: {}]
  %s14 = inlined_call_operand.vmem [shape: f32[2,32,128], index: 14, kind: input, shape index: {}]
  %s15 = inlined_call_operand.vmem [shape: f32[2,1,128], index: 15, kind: input, shape index: {}]
  %s16 = inlined_call_operand.vmem [shape: f32[2,128,32], index: 16, kind: input, shape index: {}]
  %s17 = inlined_call_operand.vmem [shape: f32[2,1,32], index: 17, kind: input, shape index: {}]
  %s18 = inlined_call_operand.vmem [shape: f32[1,32], index: 18, kind: input, shape index: {}]
  %s19 = inlined_call_operand.vmem [shape: f32[1,32], index: 19, kind: input, shape index: {}]
  %s20 = inlined_call_operand.vmem [shape: f32[1,32], index: 20, kind: input, shape index: {}]
  %s21 = inlined_call_operand.<no memory space> [shape: f32[1,1], index: 21, kind: input, shape index: {}]
  %s22 = inlined_call_operand.vmem [shape: f32[1,16], index: 22, kind: output, shape index: {}]
  %s23 = sld [smem:[#allocation0]]
  $region98: #{model_forward.1} parent=0
    _
  %s25 = ssub.s32 1, %s23
  %s26 = scalar_select 0, %s25, %s23
  %v27 = vstv %s21
  %28 = vst [vmem:[#allocation2] sm:$0x1] %v27
  // Predicated region
  $region2: #{model_forward.1} parent=0 // pred_check
    _
  $region3: #{model_forward.1} parent=0 // pred_check_branch
    %30 = sbr.rel (0) target = $region5
  $region4: #{model_forward.1} parent=0 // pred_region
    _
  $region5: #{model_forward.1} parent=0 // pred_fallthru
    _
  // Predicated region
  $region6: #{model_forward.1} parent=0 // pred_check
    _
  $region7: #{model_forward.1} parent=0 // pred_check_branch
    %32 = sbr.rel (0) target = $region9
  $region8: #{model_forward.1} parent=0 // pred_region
    _
  $region9: #{model_forward.1} parent=0 // pred_fallthru
    _
  // Predicated region
  $region10: #{model_forward.1} parent=0 // pred_check
    _
  $region11: #{model_forward.1} parent=0 // pred_check_branch
    %34 = sbr.rel (0) target = $region13
  $region12: #{model_forward.1} parent=0 // pred_region
    _
  $region13: #{model_forward.1} parent=0 // pred_fallthru
    _
  // Predicated region
  $region14: #{model_forward.1} parent=0 // pred_check
    _
  $region15: #{model_forward.1} parent=0 // pred_check_branch
    %36 = sbr.rel (0) target = $region17
  $region16: #{model_forward.1} parent=0 // pred_region
    _
  $region17: #{model_forward.1} parent=0 // pred_fallthru
    _
  // Predicated region
  $region18: #{model_forward.1} parent=0 // pred_check
    _
  $region19: #{model_forward.1} parent=0 // pred_check_branch
    %38 = sbr.rel (0) target = $region21
  $region20: #{model_forward.1} parent=0 // pred_region
    _
  $region21: #{model_forward.1} parent=0 // pred_fallthru
    _
  // Predicated region
  $region22: #{model_forward.1} parent=0 // pred_check
    _
  $region23: #{model_forward.1} parent=0 // pred_check_branch
    %40 = sbr.rel (0) target = $region25
  $region24: #{model_forward.1} parent=0 // pred_region
    _
  $region25: #{model_forward.1} parent=0 // pred_fallthru
    _
  // Predicated region
  $region26: #{model_forward.1} parent=0 // pred_check
    _
  $region27: #{model_forward.1} parent=0 // pred_check_branch
    %42 = sbr.rel (0) target = $region29
  $region28: #{model_forward.1} parent=0 // pred_region
    _
  $region29: #{model_forward.1} parent=0 // pred_fallthru
    _
  // Predicated region
  $region30: #{model_forward.1} parent=0 // pred_check
    _
  $region31: #{model_forward.1} parent=0 // pred_check_branch
    %44 = sbr.rel (0) target = $region33
  $region32: #{model_forward.1} parent=0 // pred_region
    _
  $region33: #{model_forward.1} parent=0 // pred_fallthru
    _
  // Predicated region
  $region34: #{model_forward.1} parent=0 // pred_check
    _
  $region35: #{model_forward.1} parent=0 // pred_check_branch
    %46 = sbr.rel (0) target = $region37
  $region36: #{model_forward.1} parent=0 // pred_region
    _
  $region37: #{model_forward.1} parent=0 // pred_fallthru
    _
  // Predicated region
  $region38: #{model_forward.1} parent=0 // pred_check
    _
  $region39: #{model_forward.1} parent=0 // pred_check_branch
    %48 = sbr.rel (0) target = $region41
  $region40: #{model_forward.1} parent=0 // pred_region
    _
  $region41: #{model_forward.1} parent=0 // pred_fallthru
    _
  // Predicated region
  $region42: #{model_forward.1} parent=0 // pred_check
    _
  $region43: #{model_forward.1} parent=0 // pred_check_branch
    %50 = sbr.rel (0) target = $region45
  $region44: #{model_forward.1} parent=0 // pred_region
    _
  $region45: #{model_forward.1} parent=0 // pred_fallthru
    _
  // Predicated region
  $region46: #{model_forward.1} parent=0 // pred_check
    _
  $region47: #{model_forward.1} parent=0 // pred_check_branch
    %52 = sbr.rel (0) target = $region49
  $region48: #{model_forward.1} parent=0 // pred_region
    _
  $region49: #{model_forward.1} parent=0 // pred_fallthru
    _
  // Predicated region
  $region50: #{model_forward.1} parent=0 // pred_check
    _
  $region51: #{model_forward.1} parent=0 // pred_check_branch
    %54 = sbr.rel (0) target = $region53
  $region52: #{model_forward.1} parent=0 // pred_region
    _
  $region53: #{model_forward.1} parent=0 // pred_fallthru
    _
  // Predicated region
  $region54: #{model_forward.1} parent=0 // pred_check
    _
  $region55: #{model_forward.1} parent=0 // pred_check_branch
    %56 = sbr.rel (0) target = $region57
  $region56: #{model_forward.1} parent=0 // pred_region
    _
  $region57: #{model_forward.1} parent=0 // pred_fallthru
    _
  // Predicated region
  $region58: #{model_forward.1} parent=0 // pred_check
    _
  $region59: #{model_forward.1} parent=0 // pred_check_branch
    %58 = sbr.rel (0) target = $region61
  $region60: #{model_forward.1} parent=0 // pred_region
    _
  $region61: #{model_forward.1} parent=0 // pred_fallthru
    _
  // Predicated region
  $region62: #{model_forward.1} parent=0 // pred_check
    _
  $region63: #{model_forward.1} parent=0 // pred_check_branch
    %60 = sbr.rel (0) target = $region65
  $region64: #{model_forward.1} parent=0 // pred_region
    _
  $region65: #{model_forward.1} parent=0 // pred_fallthru
    _
  // Predicated region
  $region66: #{model_forward.1} parent=0 // pred_check
    _
  $region67: #{model_forward.1} parent=0 // pred_check_branch
    %62 = sbr.rel (0) target = $region69
  $region68: #{model_forward.1} parent=0 // pred_region
    _
  $region69: #{model_forward.1} parent=0 // pred_fallthru
    _
  // Predicated region
  $region70: #{model_forward.1} parent=0 // pred_check
    _
  $region71: #{model_forward.1} parent=0 // pred_check_branch
    %64 = sbr.rel (0) target = $region73
  $region72: #{model_forward.1} parent=0 // pred_region
    _
  $region73: #{model_forward.1} parent=0 // pred_fallthru
    _
  // Predicated region
  $region74: #{model_forward.1} parent=0 // pred_check
    _
  $region75: #{model_forward.1} parent=0 // pred_check_branch
    %66 = sbr.rel (0) target = $region77
  $region76: #{model_forward.1} parent=0 // pred_region
    _
  $region77: #{model_forward.1} parent=0 // pred_fallthru
    _
  // Predicated region
  $region78: #{model_forward.1} parent=0 // pred_check
    _
  $region79: #{model_forward.1} parent=0 // pred_check_branch
    %68 = sbr.rel (0) target = $region81
  $region80: #{model_forward.1} parent=0 // pred_region
    _
  $region81: #{model_forward.1} parent=0 // pred_fallthru
    _
  // Predicated region
  $region82: #{model_forward.1} parent=0 // pred_check
    _
  $region83: #{model_forward.1} parent=0 // pred_check_branch
    %70 = sbr.rel (0) target = $region85
  $region84: #{model_forward.1} parent=0 // pred_region
    _
  $region85: #{model_forward.1} parent=0 // pred_fallthru
    _
  // Predicated region
  $region86: #{model_forward.1} parent=0 // pred_check
    _
  $region87: #{model_forward.1} parent=0 // pred_check_branch
    %72 = sbr.rel (0) target = $region89
  $region88: #{model_forward.1} parent=0 // pred_region
    _
  $region89: #{model_forward.1} parent=0 // pred_fallthru
    _
  %v73 = vld [vmem:[%s0] sm:$0xff]
  %v74 = vld [vmem:[%s0 + $0x8] sm:$0xff]
  %v75 = vld [vmem:[%s1] sm:$0xff]
  %v76 = vld [vmem:[%s1 + $0x8] sm:$0xff]
  %v77 = vld [vmem:[%s2] sm:$0x1]
  %v78 = vld [vmem:[%s3] sm:$0x1]
  %vm79 = vcmask 261120
  %v80 = vsel %vm79, %v73, 0.0
  %81 = vadd.xlane.f32.xlu0 %v80
  %v82 = vpop.xlane.xlu0 %81
  %v83 = vsel %vm79, %v74, 0.0
  %84 = vadd.xlane.f32.xlu0 %v83
  %v85 = vpop.xlane.xlu0 %84
  %v86 = vrcp.pop 32.0
  %v87 = vmul.f32 %v82, %v86
  %v88 = vmul.f32 %v85, %v86
  %v89 = vsub.f32 %v73, %v87
  %v90 = vsub.f32 %v74, %v88
  %v91 = vmul.f32 %v89, %v89
  %v92 = vmul.f32 %v90, %v90
  %v93 = vsel %vm79, %v91, 0.0
  %94 = vadd.xlane.f32.xlu0 %v93
  %v95 = vpop.xlane.xlu0 %94
  %v96 = vsel %vm79, %v92, 0.0
  %97 = vadd.xlane.f32.xlu0 %v96
  %v98 = vpop.xlane.xlu0 %97
  %v99 = vmul.f32 %v95, %v86
  %v100 = vmul.f32 %v98, %v86
  %v101 = vadd.f32 %v99, 1e-05
  %v102 = vadd.f32 %v100, 1e-05
  %v103 = vrsqrt.pop %v101
  %v104 = vrsqrt.pop %v102
  %v105 = vmul.f32 %v89, %v103
  %v106 = vmul.f32 %v90, %v104
  %v108 = vlaneseq
  %v109 = vshrl.u32 %v108, 7
  %v110 = vsub.s32 0, %v109
  %v111 = vrot.slane %v77, %v110
  %v113 = vmul.f32 %v105, %v111
  %v114 = vmul.f32 %v106, %v111
  %v116 = vlaneseq
  %v117 = vshrl.u32 %v116, 7
  %v118 = vsub.s32 0, %v117
  %v119 = vrot.slane %v78, %v118
  %v121 = vadd.f32 %v113, %v119
  %v122 = vadd.f32 %v114, %v119
  %v123 = vld [vmem:[%s4] sm:$0xff]
  %v124 = vld [vmem:[%s4 + $0x8] sm:$0xff]
  %v125 = vld [vmem:[%s4 + $0x10] sm:$0xff]
  %v126 = vld [vmem:[%s4 + $0x18] sm:$0xff]
  %v127 = vld [vmem:[%s6] sm:$0xff]
  %v128 = vld [vmem:[%s6 + $0x8] sm:$0xff]
  %v129 = vld [vmem:[%s6 + $0x10] sm:$0xff]
  %v130 = vld [vmem:[%s6 + $0x18] sm:$0xff]
  %v131 = vld [vmem:[%s8] sm:$0xff]
  %v132 = vld [vmem:[%s8 + $0x8] sm:$0xff]
  %v133 = vld [vmem:[%s8 + $0x10] sm:$0xff]
  %v134 = vld [vmem:[%s8 + $0x18] sm:$0xff]
  %v135 = vld [vmem:[%s10] sm:$0xff]
  %v136 = vld [vmem:[%s10 + $0x8] sm:$0xff]
  %v137 = vld [vmem:[%s10 + $0x10] sm:$0xff]
  %v138 = vld [vmem:[%s10 + $0x18] sm:$0xff]
  %v139 = vld [vmem:[%s5] sm:$0x1]
  %v140 = vld [vmem:[%s7] sm:$0x1]
  %v141 = vld [vmem:[%s9] sm:$0x1]
  %v143 = vlaneseq
  %v144 = vshrl.u32 %v143, 7
  %v145 = vsub.s32 0, %v144
  %v146 = vrot.slane %v139, %v145
  %v149 = vsel %vm79, %v121, 0
  %v152 = vsel %vm79, %v122, 0
  %154 = vmatprep.subr.mxu0 0.0
  %155 = vmatpush1.msra.mxu0 %v123
  %156 = vmatprep.subr.mxu0 0.0
  %157 = vmatpush1.msra.mxu0 %v124
  %158 = vmatprep.subr.mxu0 0.0
  %159 = vmatpush1.msra.mxu0 %v125
  %160 = vmatprep.subr.mxu0 0.0
  %161 = vmatpush1.msra.mxu0 %v126
  %162 = vmatprep.subr.mxu0 0.0
  %163 = vmatpush1.msra.mxu0 0.0
  %164 = vmatprep.subr.mxu0 0.0
  %165 = vmatpush1.msra.mxu0 0.0
  %166 = vmatprep.subr.mxu0 0.0
  %167 = vmatpush1.msra.mxu0 0.0
  %168 = vmatprep.subr.mxu0 0.0
  %169 = vmatpush1.msra.mxu0 0.0
  %170 = vmatprep.subr.mxu0 0.0
  %171 = vmatpush1.msra.mxu0 0.0
  %172 = vmatprep.subr.mxu0 0.0
  %173 = vmatpush1.msra.mxu0 0.0
  %174 = vmatprep.subr.mxu0 0.0
  %175 = vmatpush1.msra.mxu0 0.0
  %176 = vmatprep.subr.mxu0 0.0
  %177 = vmatpush1.msra.mxu0 0.0
  %178 = vmatprep.subr.mxu0 0.0
  %179 = vmatpush1.msra.mxu0 0.0
  %180 = vmatprep.subr.mxu0 0.0
  %181 = vmatpush1.msra.mxu0 0.0
  %182 = vmatprep.subr.mxu0 0.0
  %183 = vmatpush1.msra.mxu0 0.0
  %184 = vmatprep.subr.mxu0 0.0
  %185 = vmatpush1.msra.mxu0 0.0
  %186 = vmatprep.subr.mxu0 0.0
  %187 = vmatpush1.msra.mxu0 0.0
  %188 = vmatprep.subr.mxu0 0.0
  %189 = vmatpush1.msra.mxu0 0.0
  %190 = vmatprep.subr.mxu0 0.0
  %191 = vmatpush1.msra.mxu0 0.0
  %192 = vmatprep.subr.mxu0 0.0
  %193 = vmatpush1.msra.mxu0 0.0
  %194 = vmatprep.subr.mxu0 0.0
  %195 = vmatpush1.msra.mxu0 0.0
  %196 = vmatprep.subr.mxu0 0.0
  %197 = vmatpush1.msra.mxu0 0.0
  %198 = vmatprep.subr.mxu0 0.0
  %199 = vmatpush1.msra.mxu0 0.0
  %200 = vmatprep.subr.mxu0 0.0
  %201 = vmatpush1.msra.mxu0 0.0
  %202 = vmatprep.subr.mxu0 0.0
  %203 = vmatpush1.msra.mxu0 0.0
  %204 = vmatprep.subr.mxu0 0.0
  %205 = vmatpush1.msra.mxu0 0.0
  %206 = vmatprep.subr.mxu0 0.0
  %207 = vmatpush1.msra.mxu0 0.0
  %208 = vmatprep.subr.mxu0 0.0
  %209 = vmatpush1.msra.mxu0 0.0
  %210 = vmatprep.subr.mxu0 0.0
  %211 = vmatpush1.msra.mxu0 0.0
  %212 = vmatprep.subr.mxu0 0.0
  %213 = vmatpush1.msra.mxu0 0.0
  %214 = vmatprep.subr.mxu0 0.0
  %215 = vmatpush1.msra.mxu0 0.0
  %216 = vmatprep.subr.mxu0 0.0
  %217 = vmatpush1.msra.mxu0 0.0
  %218 = vmatprep.mubr.f32.mxu0 0.0
  %219 = vmatmul.mubr.f32.gmra.mrb[0].mxu0 %v149
  %v220 = vpop.f32.mrb[0].mxu0
  %v221 = vadd.f32 %v146, %v220
  %v222 = vpop.f32.mrb[0].mxu0
  %223 = vmatprep.mubr.f32.mxu0 0.0
  %224 = vmatmul.mubr.f32.gmra.mrb[0].mxu0 %v152
  %v225 = vpop.f32.mrb[0].mxu0
  %v226 = vadd.f32 %v146, %v225
  %v227 = vpop.f32.mrb[0].mxu0
  %228 = vdwg.mxu0
  %v230 = vlaneseq
  %v231 = vshrl.u32 %v230, 7
  %v232 = vsub.s32 0, %v231
  %v233 = vrot.slane %v140, %v232
  %235 = vmatprep.subr.mxu0 0.0
  %236 = vmatpush1.msra.mxu0 %v127
  %237 = vmatprep.subr.mxu0 0.0
  %238 = vmatpush1.msra.mxu0 %v128
  %239 = vmatprep.subr.mxu0 0.0
  %240 = vmatpush1.msra.mxu0 %v129
  %241 = vmatprep.subr.mxu0 0.0
  %242 = vmatpush1.msra.mxu0 %v130
  %243 = vmatprep.subr.mxu0 0.0
  %244 = vmatpush1.msra.mxu0 0.0
  %245 = vmatprep.subr.mxu0 0.0
  %246 = vmatpush1.msra.mxu0 0.0
  %247 = vmatprep.subr.mxu0 0.0
  %248 = vmatpush1.msra.mxu0 0.0
  %249 = vmatprep.subr.mxu0 0.0
  %250 = vmatpush1.msra.mxu0 0.0
  %251 = vmatprep.subr.mxu0 0.0
  %252 = vmatpush1.msra.mxu0 0.0
  %253 = vmatprep.subr.mxu0 0.0
  %254 = vmatpush1.msra.mxu0 0.0
  %255 = vmatprep.subr.mxu0 0.0
  %256 = vmatpush1.msra.mxu0 0.0
  %257 = vmatprep.subr.mxu0 0.0
  %258 = vmatpush1.msra.mxu0 0.0
  %259 = vmatprep.subr.mxu0 0.0
  %260 = vmatpush1.msra.mxu0 0.0
  %261 = vmatprep.subr.mxu0 0.0
  %262 = vmatpush1.msra.mxu0 0.0
  %263 = vmatprep.subr.mxu0 0.0
  %264 = vmatpush1.msra.mxu0 0.0
  %265 = vmatprep.subr.mxu0 0.0
  %266 = vmatpush1.msra.mxu0 0.0
  %267 = vmatprep.subr.mxu0 0.0
  %268 = vmatpush1.msra.mxu0 0.0
  %269 = vmatprep.subr.mxu0 0.0
  %270 = vmatpush1.msra.mxu0 0.0
  %271 = vmatprep.subr.mxu0 0.0
  %272 = vmatpush1.msra.mxu0 0.0
  %273 = vmatprep.subr.mxu0 0.0
  %274 = vmatpush1.msra.mxu0 0.0
  %275 = vmatprep.subr.mxu0 0.0
  %276 = vmatpush1.msra.mxu0 0.0
  %277 = vmatprep.subr.mxu0 0.0
  %278 = vmatpush1.msra.mxu0 0.0
  %279 = vmatprep.subr.mxu0 0.0
  %280 = vmatpush1.msra.mxu0 0.0
  %281 = vmatprep.subr.mxu0 0.0
  %282 = vmatpush1.msra.mxu0 0.0
  %283 = vmatprep.subr.mxu0 0.0
  %284 = vmatpush1.msra.mxu0 0.0
  %285 = vmatprep.subr.mxu0 0.0
  %286 = vmatpush1.msra.mxu0 0.0
  %287 = vmatprep.subr.mxu0 0.0
  %288 = vmatpush1.msra.mxu0 0.0
  %289 = vmatprep.subr.mxu0 0.0
  %290 = vmatpush1.msra.mxu0 0.0
  %291 = vmatprep.subr.mxu0 0.0
  %292 = vmatpush1.msra.mxu0 0.0
  %293 = vmatprep.subr.mxu0 0.0
  %294 = vmatpush1.msra.mxu0 0.0
  %295 = vmatprep.subr.mxu0 0.0
  %296 = vmatpush1.msra.mxu0 0.0
  %297 = vmatprep.subr.mxu0 0.0
  %298 = vmatpush1.msra.mxu0 0.0
  %299 = vmatprep.mubr.f32.mxu0 0.0
  %300 = vmatmul.mubr.f32.gmra.mrb[0].mxu0 %v149
  %v301 = vpop.f32.mrb[0].mxu0
  %v302 = vadd.f32 %v233, %v301
  %v303 = vpop.f32.mrb[0].mxu0
  %304 = vmatprep.mubr.f32.mxu0 0.0
  %305 = vmatmul.mubr.f32.gmra.mrb[0].mxu0 %v152
  %v306 = vpop.f32.mrb[0].mxu0
  %v307 = vadd.f32 %v233, %v306
  %v308 = vpop.f32.mrb[0].mxu0
  %309 = vdwg.mxu0
  %v311 = vlaneseq
  %v312 = vshrl.u32 %v311, 7
  %v313 = vsub.s32 0, %v312
  %v314 = vrot.slane %v141, %v313
  %316 = vmatprep.subr.mxu0 0.0
  %317 = vmatpush1.msra.mxu0 %v131
  %318 = vmatprep.subr.mxu0 0.0
  %319 = vmatpush1.msra.mxu0 %v132
  %320 = vmatprep.subr.mxu0 0.0
  %321 = vmatpush1.msra.mxu0 %v133
  %322 = vmatprep.subr.mxu0 0.0
  %323 = vmatpush1.msra.mxu0 %v134
  %324 = vmatprep.subr.mxu0 0.0
  %325 = vmatpush1.msra.mxu0 0.0
  %326 = vmatprep.subr.mxu0 0.0
  %327 = vmatpush1.msra.mxu0 0.0
  %328 = vmatprep.subr.mxu0 0.0
  %329 = vmatpush1.msra.mxu0 0.0
  %330 = vmatprep.subr.mxu0 0.0
  %331 = vmatpush1.msra.mxu0 0.0
  %332 = vmatprep.subr.mxu0 0.0
  %333 = vmatpush1.msra.mxu0 0.0
  %334 = vmatprep.subr.mxu0 0.0
  %335 = vmatpush1.msra.mxu0 0.0
  %336 = vmatprep.subr.mxu0 0.0
  %337 = vmatpush1.msra.mxu0 0.0
  %338 = vmatprep.subr.mxu0 0.0
  %339 = vmatpush1.msra.mxu0 0.0
  %340 = vmatprep.subr.mxu0 0.0
  %341 = vmatpush1.msra.mxu0 0.0
  %342 = vmatprep.subr.mxu0 0.0
  %343 = vmatpush1.msra.mxu0 0.0
  %344 = vmatprep.subr.mxu0 0.0
  %345 = vmatpush1.msra.mxu0 0.0
  %346 = vmatprep.subr.mxu0 0.0
  %347 = vmatpush1.msra.mxu0 0.0
  %348 = vmatprep.subr.mxu0 0.0
  %349 = vmatpush1.msra.mxu0 0.0
  %350 = vmatprep.subr.mxu0 0.0
  %351 = vmatpush1.msra.mxu0 0.0
  %352 = vmatprep.subr.mxu0 0.0
  %353 = vmatpush1.msra.mxu0 0.0
  %354 = vmatprep.subr.mxu0 0.0
  %355 = vmatpush1.msra.mxu0 0.0
  %356 = vmatprep.subr.mxu0 0.0
  %357 = vmatpush1.msra.mxu0 0.0
  %358 = vmatprep.subr.mxu0 0.0
  %359 = vmatpush1.msra.mxu0 0.0
  %360 = vmatprep.subr.mxu0 0.0
  %361 = vmatpush1.msra.mxu0 0.0
  %362 = vmatprep.subr.mxu0 0.0
  %363 = vmatpush1.msra.mxu0 0.0
  %364 = vmatprep.subr.mxu0 0.0
  %365 = vmatpush1.msra.mxu0 0.0
  %366 = vmatprep.subr.mxu0 0.0
  %367 = vmatpush1.msra.mxu0 0.0
  %368 = vmatprep.subr.mxu0 0.0
  %369 = vmatpush1.msra.mxu0 0.0
  %370 = vmatprep.subr.mxu0 0.0
  %371 = vmatpush1.msra.mxu0 0.0
  %372 = vmatprep.subr.mxu0 0.0
  %373 = vmatpush1.msra.mxu0 0.0
  %374 = vmatprep.subr.mxu0 0.0
  %375 = vmatpush1.msra.mxu0 0.0
  %376 = vmatprep.subr.mxu0 0.0
  %377 = vmatpush1.msra.mxu0 0.0
  %378 = vmatprep.subr.mxu0 0.0
  %379 = vmatpush1.msra.mxu0 0.0
  %380 = vmatprep.mubr.f32.mxu0 0.0
  %381 = vmatmul.mubr.f32.gmra.mrb[0].mxu0 %v149
  %v382 = vpop.f32.mrb[0].mxu0
  %v383 = vadd.f32 %v314, %v382
  %v384 = vpop.f32.mrb[0].mxu0
  %385 = vmatprep.mubr.f32.mxu0 0.0
  %386 = vmatmul.mubr.f32.gmra.mrb[0].mxu0 %v152
  %v387 = vpop.f32.mrb[0].mxu0
  %v388 = vadd.f32 %v314, %v387
  %v389 = vpop.f32.mrb[0].mxu0
  %390 = vdwg.mxu0
  %vm391 = vcmask 130048
  %v393 = vsel %vm391, %v221, 0
  %v396 = vsel %vm391, %v226, 0
  %v399 = vsel %vm391, %v302, 0
  %v402 = vsel %vm391, %v307, 0
  %404 = vmatprep.subr.mxu0 0.0
  %405 = vmatpush1.xpose.msra.mxu0 %v399
  %406 = vmatprep.subr.mxu0 0.0
  %407 = vmatpush1.xpose.msra.mxu0 %v402
  %408 = vmatprep.subr.mxu0 0.0
  %409 = vmatpush1.xpose.msra.mxu0 0.0
  %410 = vmatprep.subr.mxu0 0.0
  %411 = vmatpush1.xpose.msra.mxu0 0.0
  %412 = vmatprep.subr.mxu0 0.0
  %413 = vmatpush1.xpose.msra.mxu0 0.0
  %414 = vmatprep.subr.mxu0 0.0
  %415 = vmatpush1.xpose.msra.mxu0 0.0
  %416 = vmatprep.subr.mxu0 0.0
  %417 = vmatpush1.xpose.msra.mxu0 0.0
  %418 = vmatprep.subr.mxu0 0.0
  %419 = vmatpush1.xpose.msra.mxu0 0.0
  %420 = vmatprep.subr.mxu0 0.0
  %421 = vmatpush1.xpose.msra.mxu0 0.0
  %422 = vmatprep.subr.mxu0 0.0
  %423 = vmatpush1.xpose.msra.mxu0 0.0
  %424 = vmatprep.subr.mxu0 0.0
  %425 = vmatpush1.xpose.msra.mxu0 0.0
  %426 = vmatprep.subr.mxu0 0.0
  %427 = vmatpush1.xpose.msra.mxu0 0.0
  %428 = vmatprep.subr.mxu0 0.0
  %429 = vmatpush1.xpose.msra.mxu0 0.0
  %430 = vmatprep.subr.mxu0 0.0
  %431 = vmatpush1.xpose.msra.mxu0 0.0
  %432 = vmatprep.subr.mxu0 0.0
  %433 = vmatpush1.xpose.msra.mxu0 0.0
  %434 = vmatprep.subr.mxu0 0.0
  %435 = vmatpush1.xpose.msra.mxu0 0.0
  %436 = vmatprep.subr.mxu0 0.0
  %437 = vmatpush1.xpose.msra.mxu0 0.0
  %438 = vmatprep.subr.mxu0 0.0
  %439 = vmatpush1.xpose.msra.mxu0 0.0
  %440 = vmatprep.subr.mxu0 0.0
  %441 = vmatpush1.xpose.msra.mxu0 0.0
  %442 = vmatprep.subr.mxu0 0.0
  %443 = vmatpush1.xpose.msra.mxu0 0.0
  %444 = vmatprep.subr.mxu0 0.0
  %445 = vmatpush1.xpose.msra.mxu0 0.0
  %446 = vmatprep.subr.mxu0 0.0
  %447 = vmatpush1.xpose.msra.mxu0 0.0
  %448 = vmatprep.subr.mxu0 0.0
  %449 = vmatpush1.xpose.msra.mxu0 0.0
  %450 = vmatprep.subr.mxu0 0.0
  %451 = vmatpush1.xpose.msra.mxu0 0.0
  %452 = vmatprep.subr.mxu0 0.0
  %453 = vmatpush1.xpose.msra.mxu0 0.0
  %454 = vmatprep.subr.mxu0 0.0
  %455 = vmatpush1.xpose.msra.mxu0 0.0
  %456 = vmatprep.subr.mxu0 0.0
  %457 = vmatpush1.xpose.msra.mxu0 0.0
  %458 = vmatprep.subr.mxu0 0.0
  %459 = vmatpush1.xpose.msra.mxu0 0.0
  %460 = vmatprep.subr.mxu0 0.0
  %461 = vmatpush1.xpose.msra.mxu0 0.0
  %462 = vmatprep.subr.mxu0 0.0
  %463 = vmatpush1.xpose.msra.mxu0 0.0
  %464 = vmatprep.subr.mxu0 0.0
  %465 = vmatpush1.xpose.msra.mxu0 0.0
  %466 = vmatprep.subr.mxu0 0.0
  %467 = vmatpush1.xpose.msra.mxu0 0.0
  %468 = vmatprep.mubr.f32.mxu0 0.0
  %469 = vmatmul.mubr.f32.gmra.mrb[0].mxu0 %v393
  %v470 = vpop.f32.mrb[0].mxu0
  %v471 = vadd.f32 0.0, %v470
  %v472 = vpop.f32.mrb[0].mxu0
  %473 = vmatprep.mubr.f32.mxu0 0.0
  %474 = vmatmul.mubr.f32.gmra.mrb[0].mxu0 %v396
  %v475 = vpop.f32.mrb[0].mxu0
  %v476 = vadd.f32 0.0, %v475
  %v477 = vpop.f32.mrb[0].mxu0
  %478 = vdwg.mxu0
  %v479 = vmul.f32 %v471, 0.25
  %v480 = vmul.f32 %v476, 0.25
  %v481 = vadd.f32 %v479, %v75
  %v482 = vadd.f32 %v480, %v76
  %v483 = vsel %vm391, %v481, -inf
  %484 = vmax.xlane.f32.xlu0 %v483
  %v485 = vpop.xlane.xlu0 %484
  %v486 = vsel %vm391, %v482, -inf
  %487 = vmax.xlane.f32.xlu0 %v486
  %v488 = vpop.xlane.xlu0 %487
  %v489 = vsub.f32 %v481, %v485
  %v490 = vsub.f32 %v482, %v488
  %v491 = vmul.f32 %v489, 1.442695
  %v492 = vpow.pop %v491
  %v493 = vmul.f32 %v490, 1.442695
  %v494 = vpow.pop %v493
  %v495 = vsel %vm391, %v492, 0.0
  %496 = vadd.xlane.f32.xlu0 %v495
  %v497 = vpop.xlane.xlu0 %496
  %v498 = vsel %vm391, %v494, 0.0
  %499 = vadd.xlane.f32.xlu0 %v498
  %v500 = vpop.xlane.xlu0 %499
  %v501 = vrcp.pop %v497
  %v502 = vrcp.pop %v500
  %v503 = vmul.f32 %v492, %v501
  %v504 = vmul.f32 %v494, %v502
  %v506 = vsel %vm391, %v503, 0
  %v509 = vsel %vm391, %v504, 0
  %511 = vmatprep.subr.mxu0 0.0
  %512 = vmatpush1.msra.mxu0 %v383
  %513 = vmatprep.subr.mxu0 0.0
  %514 = vmatpush1.msra.mxu0 %v388
  %515 = vmatprep.subr.mxu0 0.0
  %516 = vmatpush1.msra.mxu0 0.0
  %517 = vmatprep.subr.mxu0 0.0
  %518 = vmatpush1.msra.mxu0 0.0
  %519 = vmatprep.subr.mxu0 0.0
  %520 = vmatpush1.msra.mxu0 0.0
  %521 = vmatprep.subr.mxu0 0.0
  %522 = vmatpush1.msra.mxu0 0.0
  %523 = vmatprep.subr.mxu0 0.0
  %524 = vmatpush1.msra.mxu0 0.0
  %525 = vmatprep.subr.mxu0 0.0
  %526 = vmatpush1.msra.mxu0 0.0
  %527 = vmatprep.subr.mxu0 0.0
  %528 = vmatpush1.msra.mxu0 0.0
  %529 = vmatprep.subr.mxu0 0.0
  %530 = vmatpush1.msra.mxu0 0.0
  %531 = vmatprep.subr.mxu0 0.0
  %532 = vmatpush1.msra.mxu0 0.0
  %533 = vmatprep.subr.mxu0 0.0
  %534 = vmatpush1.msra.mxu0 0.0
  %535 = vmatprep.subr.mxu0 0.0
  %536 = vmatpush1.msra.mxu0 0.0
  %537 = vmatprep.subr.mxu0 0.0
  %538 = vmatpush1.msra.mxu0 0.0
  %539 = vmatprep.subr.mxu0 0.0
  %540 = vmatpush1.msra.mxu0 0.0
  %541 = vmatprep.subr.mxu0 0.0
  %542 = vmatpush1.msra.mxu0 0.0
  %543 = vmatprep.subr.mxu0 0.0
  %544 = vmatpush1.msra.mxu0 0.0
  %545 = vmatprep.subr.mxu0 0.0
  %546 = vmatpush1.msra.mxu0 0.0
  %547 = vmatprep.subr.mxu0 0.0
  %548 = vmatpush1.msra.mxu0 0.0
  %549 = vmatprep.subr.mxu0 0.0
  %550 = vmatpush1.msra.mxu0 0.0
  %551 = vmatprep.subr.mxu0 0.0
  %552 = vmatpush1.msra.mxu0 0.0
  %553 = vmatprep.subr.mxu0 0.0
  %554 = vmatpush1.msra.mxu0 0.0
  %555 = vmatprep.subr.mxu0 0.0
  %556 = vmatpush1.msra.mxu0 0.0
  %557 = vmatprep.subr.mxu0 0.0
  %558 = vmatpush1.msra.mxu0 0.0
  %559 = vmatprep.subr.mxu0 0.0
  %560 = vmatpush1.msra.mxu0 0.0
  %561 = vmatprep.subr.mxu0 0.0
  %562 = vmatpush1.msra.mxu0 0.0
  %563 = vmatprep.subr.mxu0 0.0
  %564 = vmatpush1.msra.mxu0 0.0
  %565 = vmatprep.subr.mxu0 0.0
  %566 = vmatpush1.msra.mxu0 0.0
  %567 = vmatprep.subr.mxu0 0.0
  %568 = vmatpush1.msra.mxu0 0.0
  %569 = vmatprep.subr.mxu0 0.0
  %570 = vmatpush1.msra.mxu0 0.0
  %571 = vmatprep.subr.mxu0 0.0
  %572 = vmatpush1.msra.mxu0 0.0
  %573 = vmatprep.subr.mxu0 0.0
  %574 = vmatpush1.msra.mxu0 0.0
  %575 = vmatprep.mubr.f32.mxu0 0.0
  %576 = vmatmul.mubr.f32.gmra.mrb[0].mxu0 %v506
  %v577 = vpop.f32.mrb[0].mxu0
  %v578 = vadd.f32 0.0, %v577
  %v579 = vpop.f32.mrb[0].mxu0
  %580 = vmatprep.mubr.f32.mxu0 0.0
  %581 = vmatmul.mubr.f32.gmra.mrb[0].mxu0 %v509
  %v582 = vpop.f32.mrb[0].mxu0
  %v583 = vadd.f32 0.0, %v582
  %v584 = vpop.f32.mrb[0].mxu0
  %585 = vdwg.mxu0
  %590 = vrot.lane.b32.xlu0 %v123, 112
  %v591 = vpop.permute.xlu0 %590
  %592 = vrot.lane.b32.xlu0 %v124, 112
  %v593 = vpop.permute.xlu0 %592
  %594 = vrot.lane.b32.xlu0 %v125, 112
  %v595 = vpop.permute.xlu0 %594
  %596 = vrot.lane.b32.xlu0 %v126, 112
  %v597 = vpop.permute.xlu0 %596
  %602 = vrot.lane.b32.xlu0 %v146, 112
  %v603 = vpop.permute.xlu0 %602
  %605 = vmatprep.subr.mxu0 0.0
  %606 = vmatpush1.msra.mxu0 %v591
  %607 = vmatprep.subr.mxu0 0.0
  %608 = vmatpush1.msra.mxu0 %v593
  %609 = vmatprep.subr.mxu0 0.0
  %610 = vmatpush1.msra.mxu0 %v595
  %611 = vmatprep.subr.mxu0 0.0
  %612 = vmatpush1.msra.mxu0 %v597
  %613 = vmatprep.subr.mxu0 0.0
  %614 = vmatpush1.msra.mxu0 0.0
  %615 = vmatprep.subr.mxu0 0.0
  %616 = vmatpush1.msra.mxu0 0.0
  %617 = vmatprep.subr.mxu0 0.0
  %618 = vmatpush1.msra.mxu0 0.0
  %619 = vmatprep.subr.mxu0 0.0
  %620 = vmatpush1.msra.mxu0 0.0
  %621 = vmatprep.subr.mxu0 0.0
  %622 = vmatpush1.msra.mxu0 0.0
  %623 = vmatprep.subr.mxu0 0.0
  %624 = vmatpush1.msra.mxu0 0.0
  %625 = vmatprep.subr.mxu0 0.0
  %626 = vmatpush1.msra.mxu0 0.0
  %627 = vmatprep.subr.mxu0 0.0
  %628 = vmatpush1.msra.mxu0 0.0
  %629 = vmatprep.subr.mxu0 0.0
  %630 = vmatpush1.msra.mxu0 0.0
  %631 = vmatprep.subr.mxu0 0.0
  %632 = vmatpush1.msra.mxu0 0.0
  %633 = vmatprep.subr.mxu0 0.0
  %634 = vmatpush1.msra.mxu0 0.0
  %635 = vmatprep.subr.mxu0 0.0
  %636 = vmatpush1.msra.mxu0 0.0
  %637 = vmatprep.subr.mxu0 0.0
  %638 = vmatpush1.msra.mxu0 0.0
  %639 = vmatprep.subr.mxu0 0.0
  %640 = vmatpush1.msra.mxu0 0.0
  %641 = vmatprep.subr.mxu0 0.0
  %642 = vmatpush1.msra.mxu0 0.0
  %643 = vmatprep.subr.mxu0 0.0
  %644 = vmatpush1.msra.mxu0 0.0
  %645 = vmatprep.subr.mxu0 0.0
  %646 = vmatpush1.msra.mxu0 0.0
  %647 = vmatprep.subr.mxu0 0.0
  %648 = vmatpush1.msra.mxu0 0.0
  %649 = vmatprep.subr.mxu0 0.0
  %650 = vmatpush1.msra.mxu0 0.0
  %651 = vmatprep.subr.mxu0 0.0
  %652 = vmatpush1.msra.mxu0 0.0
  %653 = vmatprep.subr.mxu0 0.0
  %654 = vmatpush1.msra.mxu0 0.0
  %655 = vmatprep.subr.mxu0 0.0
  %656 = vmatpush1.msra.mxu0 0.0
  %657 = vmatprep.subr.mxu0 0.0
  %658 = vmatpush1.msra.mxu0 0.0
  %659 = vmatprep.subr.mxu0 0.0
  %660 = vmatpush1.msra.mxu0 0.0
  %661 = vmatprep.subr.mxu0 0.0
  %662 = vmatpush1.msra.mxu0 0.0
  %663 = vmatprep.subr.mxu0 0.0
  %664 = vmatpush1.msra.mxu0 0.0
  %665 = vmatprep.subr.mxu0 0.0
  %666 = vmatpush1.msra.mxu0 0.0
  %667 = vmatprep.subr.mxu0 0.0
  %668 = vmatpush1.msra.mxu0 0.0
  %669 = vmatprep.mubr.f32.mxu0 0.0
  %670 = vmatmul.mubr.f32.gmra.mrb[0].mxu0 %v149
  %v671 = vpop.f32.mrb[0].mxu0
  %v672 = vadd.f32 %v603, %v671
  %v673 = vpop.f32.mrb[0].mxu0
  %674 = vmatprep.mubr.f32.mxu0 0.0
  %675 = vmatmul.mubr.f32.gmra.mrb[0].mxu0 %v152
  %v676 = vpop.f32.mrb[0].mxu0
  %v677 = vadd.f32 %v603, %v676
  %v678 = vpop.f32.mrb[0].mxu0
  %679 = vdwg.mxu0
  %684 = vrot.lane.b32.xlu0 %v127, 112
  %v685 = vpop.permute.xlu0 %684
  %686 = vrot.lane.b32.xlu0 %v128, 112
  %v687 = vpop.permute.xlu0 %686
  %688 = vrot.lane.b32.xlu0 %v129, 112
  %v689 = vpop.permute.xlu0 %688
  %690 = vrot.lane.b32.xlu0 %v130, 112
  %v691 = vpop.permute.xlu0 %690
  %696 = vrot.lane.b32.xlu0 %v233, 112
  %v697 = vpop.permute.xlu0 %696
  %699 = vmatprep.subr.mxu0 0.0
  %700 = vmatpush1.msra.mxu0 %v685
  %701 = vmatprep.subr.mxu0 0.0
  %702 = vmatpush1.msra.mxu0 %v687
  %703 = vmatprep.subr.mxu0 0.0
  %704 = vmatpush1.msra.mxu0 %v689
  %705 = vmatprep.subr.mxu0 0.0
  %706 = vmatpush1.msra.mxu0 %v691
  %707 = vmatprep.subr.mxu0 0.0
  %708 = vmatpush1.msra.mxu0 0.0
  %709 = vmatprep.subr.mxu0 0.0
  %710 = vmatpush1.msra.mxu0 0.0
  %711 = vmatprep.subr.mxu0 0.0
  %712 = vmatpush1.msra.mxu0 0.0
  %713 = vmatprep.subr.mxu0 0.0
  %714 = vmatpush1.msra.mxu0 0.0
  %715 = vmatprep.subr.mxu0 0.0
  %716 = vmatpush1.msra.mxu0 0.0
  %717 = vmatprep.subr.mxu0 0.0
  %718 = vmatpush1.msra.mxu0 0.0
  %719 = vmatprep.subr.mxu0 0.0
  %720 = vmatpush1.msra.mxu0 0.0
  %721 = vmatprep.subr.mxu0 0.0
  %722 = vmatpush1.msra.mxu0 0.0
  %723 = vmatprep.subr.mxu0 0.0
  %724 = vmatpush1.msra.mxu0 0.0
  %725 = vmatprep.subr.mxu0 0.0
  %726 = vmatpush1.msra.mxu0 0.0
  %727 = vmatprep.subr.mxu0 0.0
  %728 = vmatpush1.msra.mxu0 0.0
  %729 = vmatprep.subr.mxu0 0.0
  %730 = vmatpush1.msra.mxu0 0.0
  %731 = vmatprep.subr.mxu0 0.0
  %732 = vmatpush1.msra.mxu0 0.0
  %733 = vmatprep.subr.mxu0 0.0
  %734 = vmatpush1.msra.mxu0 0.0
  %735 = vmatprep.subr.mxu0 0.0
  %736 = vmatpush1.msra.mxu0 0.0
  %737 = vmatprep.subr.mxu0 0.0
  %738 = vmatpush1.msra.mxu0 0.0
  %739 = vmatprep.subr.mxu0 0.0
  %740 = vmatpush1.msra.mxu0 0.0
  %741 = vmatprep.subr.mxu0 0.0
  %742 = vmatpush1.msra.mxu0 0.0
  %743 = vmatprep.subr.mxu0 0.0
  %744 = vmatpush1.msra.mxu0 0.0
  %745 = vmatprep.subr.mxu0 0.0
  %746 = vmatpush1.msra.mxu0 0.0
  %747 = vmatprep.subr.mxu0 0.0
  %748 = vmatpush1.msra.mxu0 0.0
  %749 = vmatprep.subr.mxu0 0.0
  %750 = vmatpush1.msra.mxu0 0.0
  %751 = vmatprep.subr.mxu0 0.0
  %752 = vmatpush1.msra.mxu0 0.0
  %753 = vmatprep.subr.mxu0 0.0
  %754 = vmatpush1.msra.mxu0 0.0
  %755 = vmatprep.subr.mxu0 0.0
  %756 = vmatpush1.msra.mxu0 0.0
  %757 = vmatprep.subr.mxu0 0.0
  %758 = vmatpush1.msra.mxu0 0.0
  %759 = vmatprep.subr.mxu0 0.0
  %760 = vmatpush1.msra.mxu0 0.0
  %761 = vmatprep.subr.mxu0 0.0
  %762 = vmatpush1.msra.mxu0 0.0
  %763 = vmatprep.mubr.f32.mxu0 0.0
  %764 = vmatmul.mubr.f32.gmra.mrb[0].mxu0 %v149
  %v765 = vpop.f32.mrb[0].mxu0
  %v766 = vadd.f32 %v697, %v765
  %v767 = vpop.f32.mrb[0].mxu0
  %768 = vmatprep.mubr.f32.mxu0 0.0
  %769 = vmatmul.mubr.f32.gmra.mrb[0].mxu0 %v152
  %v770 = vpop.f32.mrb[0].mxu0
  %v771 = vadd.f32 %v697, %v770
  %v772 = vpop.f32.mrb[0].mxu0
  %773 = vdwg.mxu0
  %778 = vrot.lane.b32.xlu0 %v131, 112
  %v779 = vpop.permute.xlu0 %778
  %780 = vrot.lane.b32.xlu0 %v132, 112
  %v781 = vpop.permute.xlu0 %780
  %782 = vrot.lane.b32.xlu0 %v133, 112
  %v783 = vpop.permute.xlu0 %782
  %784 = vrot.lane.b32.xlu0 %v134, 112
  %v785 = vpop.permute.xlu0 %784
  %790 = vrot.lane.b32.xlu0 %v314, 112
  %v791 = vpop.permute.xlu0 %790
  %793 = vmatprep.subr.mxu0 0.0
  %794 = vmatpush1.msra.mxu0 %v779
  %795 = vmatprep.subr.mxu0 0.0
  %796 = vmatpush1.msra.mxu0 %v781
  %797 = vmatprep.subr.mxu0 0.0
  %798 = vmatpush1.msra.mxu0 %v783
  %799 = vmatprep.subr.mxu0 0.0
  %800 = vmatpush1.msra.mxu0 %v785
  %801 = vmatprep.subr.mxu0 0.0
  %802 = vmatpush1.msra.mxu0 0.0
  %803 = vmatprep.subr.mxu0 0.0
  %804 = vmatpush1.msra.mxu0 0.0
  %805 = vmatprep.subr.mxu0 0.0
  %806 = vmatpush1.msra.mxu0 0.0
  %807 = vmatprep.subr.mxu0 0.0
  %808 = vmatpush1.msra.mxu0 0.0
  %809 = vmatprep.subr.mxu0 0.0
  %810 = vmatpush1.msra.mxu0 0.0
  %811 = vmatprep.subr.mxu0 0.0
  %812 = vmatpush1.msra.mxu0 0.0
  %813 = vmatprep.subr.mxu0 0.0
  %814 = vmatpush1.msra.mxu0 0.0
  %815 = vmatprep.subr.mxu0 0.0
  %816 = vmatpush1.msra.mxu0 0.0
  %817 = vmatprep.subr.mxu0 0.0
  %818 = vmatpush1.msra.mxu0 0.0
  %819 = vmatprep.subr.mxu0 0.0
  %820 = vmatpush1.msra.mxu0 0.0
  %821 = vmatprep.subr.mxu0 0.0
  %822 = vmatpush1.msra.mxu0 0.0
  %823 = vmatprep.subr.mxu0 0.0
  %824 = vmatpush1.msra.mxu0 0.0
  %825 = vmatprep.subr.mxu0 0.0
  %826 = vmatpush1.msra.mxu0 0.0
  %827 = vmatprep.subr.mxu0 0.0
  %828 = vmatpush1.msra.mxu0 0.0
  %829 = vmatprep.subr.mxu0 0.0
  %830 = vmatpush1.msra.mxu0 0.0
  %831 = vmatprep.subr.mxu0 0.0
  %832 = vmatpush1.msra.mxu0 0.0
  %833 = vmatprep.subr.mxu0 0.0
  %834 = vmatpush1.msra.mxu0 0.0
  %835 = vmatprep.subr.mxu0 0.0
  %836 = vmatpush1.msra.mxu0 0.0
  %837 = vmatprep.subr.mxu0 0.0
  %838 = vmatpush1.msra.mxu0 0.0
  %839 = vmatprep.subr.mxu0 0.0
  %840 = vmatpush1.msra.mxu0 0.0
  %841 = vmatprep.subr.mxu0 0.0
  %842 = vmatpush1.msra.mxu0 0.0
  %843 = vmatprep.subr.mxu0 0.0
  %844 = vmatpush1.msra.mxu0 0.0
  %845 = vmatprep.subr.mxu0 0.0
  %846 = vmatpush1.msra.mxu0 0.0
  %847 = vmatprep.subr.mxu0 0.0
  %848 = vmatpush1.msra.mxu0 0.0
  %849 = vmatprep.subr.mxu0 0.0
  %850 = vmatpush1.msra.mxu0 0.0
  %851 = vmatprep.subr.mxu0 0.0
  %852 = vmatpush1.msra.mxu0 0.0
  %853 = vmatprep.subr.mxu0 0.0
  %854 = vmatpush1.msra.mxu0 0.0
  %855 = vmatprep.subr.mxu0 0.0
  %856 = vmatpush1.msra.mxu0 0.0
  %857 = vmatprep.mubr.f32.mxu0 0.0
  %858 = vmatmul.mubr.f32.gmra.mrb[0].mxu0 %v149
  %v859 = vpop.f32.mrb[0].mxu0
  %v860 = vadd.f32 %v791, %v859
  %v861 = vpop.f32.mrb[0].mxu0
  %862 = vmatprep.mubr.f32.mxu0 0.0
  %863 = vmatmul.mubr.f32.gmra.mrb[0].mxu0 %v152
  %v864 = vpop.f32.mrb[0].mxu0
  %v865 = vadd.f32 %v791, %v864
  %v866 = vpop.f32.mrb[0].mxu0
  %867 = vdwg.mxu0
  %v869 = vsel %vm391, %v672, 0
  %v872 = vsel %vm391, %v677, 0
  %v875 = vsel %vm391, %v766, 0
  %v878 = vsel %vm391, %v771, 0
  %880 = vmatprep.subr.mxu0 0.0
  %881 = vmatpush1.xpose.msra.mxu0 %v875
  %882 = vmatprep.subr.mxu0 0.0
  %883 = vmatpush1.xpose.msra.mxu0 %v878
  %884 = vmatprep.subr.mxu0 0.0
  %885 = vmatpush1.xpose.msra.mxu0 0.0
  %886 = vmatprep.subr.mxu0 0.0
  %887 = vmatpush1.xpose.msra.mxu0 0.0
  %888 = vmatprep.subr.mxu0 0.0
  %889 = vmatpush1.xpose.msra.mxu0 0.0
  %890 = vmatprep.subr.mxu0 0.0
  %891 = vmatpush1.xpose.msra.mxu0 0.0
  %892 = vmatprep.subr.mxu0 0.0
  %893 = vmatpush1.xpose.msra.mxu0 0.0
  %894 = vmatprep.subr.mxu0 0.0
  %895 = vmatpush1.xpose.msra.mxu0 0.0
  %896 = vmatprep.subr.mxu0 0.0
  %897 = vmatpush1.xpose.msra.mxu0 0.0
  %898 = vmatprep.subr.mxu0 0.0
  %899 = vmatpush1.xpose.msra.mxu0 0.0
  %900 = vmatprep.subr.mxu0 0.0
  %901 = vmatpush1.xpose.msra.mxu0 0.0
  %902 = vmatprep.subr.mxu0 0.0
  %903 = vmatpush1.xpose.msra.mxu0 0.0
  %904 = vmatprep.subr.mxu0 0.0
  %905 = vmatpush1.xpose.msra.mxu0 0.0
  %906 = vmatprep.subr.mxu0 0.0
  %907 = vmatpush1.xpose.msra.mxu0 0.0
  %908 = vmatprep.subr.mxu0 0.0
  %909 = vmatpush1.xpose.msra.mxu0 0.0
  %910 = vmatprep.subr.mxu0 0.0
  %911 = vmatpush1.xpose.msra.mxu0 0.0
  %912 = vmatprep.subr.mxu0 0.0
  %913 = vmatpush1.xpose.msra.mxu0 0.0
  %914 = vmatprep.subr.mxu0 0.0
  %915 = vmatpush1.xpose.msra.mxu0 0.0
  %916 = vmatprep.subr.mxu0 0.0
  %917 = vmatpush1.xpose.msra.mxu0 0.0
  %918 = vmatprep.subr.mxu0 0.0
  %919 = vmatpush1.xpose.msra.mxu0 0.0
  %920 = vmatprep.subr.mxu0 0.0
  %921 = vmatpush1.xpose.msra.mxu0 0.0
  %922 = vmatprep.subr.mxu0 0.0
  %923 = vmatpush1.xpose.msra.mxu0 0.0
  %924 = vmatprep.subr.mxu0 0.0
  %925 = vmatpush1.xpose.msra.mxu0 0.0
  %926 = vmatprep.subr.mxu0 0.0
  %927 = vmatpush1.xpose.msra.mxu0 0.0
  %928 = vmatprep.subr.mxu0 0.0
  %929 = vmatpush1.xpose.msra.mxu0 0.0
  %930 = vmatprep.subr.mxu0 0.0
  %931 = vmatpush1.xpose.msra.mxu0 0.0
  %932 = vmatprep.subr.mxu0 0.0
  %933 = vmatpush1.xpose.msra.mxu0 0.0
  %934 = vmatprep.subr.mxu0 0.0
  %935 = vmatpush1.xpose.msra.mxu0 0.0
  %936 = vmatprep.subr.mxu0 0.0
  %937 = vmatpush1.xpose.msra.mxu0 0.0
  %938 = vmatprep.subr.mxu0 0.0
  %939 = vmatpush1.xpose.msra.mxu0 0.0
  %940 = vmatprep.subr.mxu0 0.0
  %941 = vmatpush1.xpose.msra.mxu0 0.0
  %942 = vmatprep.subr.mxu0 0.0
  %943 = vmatpush1.xpose.msra.mxu0 0.0
  %944 = vmatprep.mubr.f32.mxu0 0.0
  %945 = vmatmul.mubr.f32.gmra.mrb[0].mxu0 %v869
  %v946 = vpop.f32.mrb[0].mxu0
  %v947 = vadd.f32 0.0, %v946
  %v948 = vpop.f32.mrb[0].mxu0
  %949 = vmatprep.mubr.f32.mxu0 0.0
  %950 = vmatmul.mubr.f32.gmra.mrb[0].mxu0 %v872
  %v951 = vpop.f32.mrb[0].mxu0
  %v952 = vadd.f32 0.0, %v951
  %v953 = vpop.f32.mrb[0].mxu0
  %954 = vdwg.mxu0
  %v955 = vmul.f32 %v947, 0.25
  %v956 = vmul.f32 %v952, 0.25
  %v957 = vadd.f32 %v955, %v75
  %v958 = vadd.f32 %v956, %v76
  %v959 = vsel %vm391, %v957, -inf
  %960 = vmax.xlane.f32.xlu0 %v959
  %v961 = vpop.xlane.xlu0 %960
  %v962 = vsel %vm391, %v958, -inf
  %963 = vmax.xlane.f32.xlu0 %v962
  %v964 = vpop.xlane.xlu0 %963
  %v965 = vsub.f32 %v957, %v961
  %v966 = vsub.f32 %v958, %v964
  %v967 = vmul.f32 %v965, 1.442695
  %v968 = vpow.pop %v967
  %v969 = vmul.f32 %v966, 1.442695
  %v970 = vpow.pop %v969
  %v971 = vsel %vm391, %v968, 0.0
  %972 = vadd.xlane.f32.xlu0 %v971
  %v973 = vpop.xlane.xlu0 %972
  %v974 = vsel %vm391, %v970, 0.0
  %975 = vadd.xlane.f32.xlu0 %v974
  %v976 = vpop.xlane.xlu0 %975
  %v977 = vrcp.pop %v973
  %v978 = vrcp.pop %v976
  %v979 = vmul.f32 %v968, %v977
  %v980 = vmul.f32 %v970, %v978
  %v982 = vsel %vm391, %v979, 0
  %v985 = vsel %vm391, %v980, 0
  %987 = vmatprep.subr.mxu0 0.0
  %988 = vmatpush1.msra.mxu0 %v860
  %989 = vmatprep.subr.mxu0 0.0
  %990 = vmatpush1.msra.mxu0 %v865
  %991 = vmatprep.subr.mxu0 0.0
  %992 = vmatpush1.msra.mxu0 0.0
  %993 = vmatprep.subr.mxu0 0.0
  %994 = vmatpush1.msra.mxu0 0.0
  %995 = vmatprep.subr.mxu0 0.0
  %996 = vmatpush1.msra.mxu0 0.0
  %997 = vmatprep.subr.mxu0 0.0
  %998 = vmatpush1.msra.mxu0 0.0
  %999 = vmatprep.subr.mxu0 0.0
  %1000 = vmatpush1.msra.mxu0 0.0
  %1001 = vmatprep.subr.mxu0 0.0
  %1002 = vmatpush1.msra.mxu0 0.0
  %1003 = vmatprep.subr.mxu0 0.0
  %1004 = vmatpush1.msra.mxu0 0.0
  %1005 = vmatprep.subr.mxu0 0.0
  %1006 = vmatpush1.msra.mxu0 0.0
  %1007 = vmatprep.subr.mxu0 0.0
  %1008 = vmatpush1.msra.mxu0 0.0
  %1009 = vmatprep.subr.mxu0 0.0
  %1010 = vmatpush1.msra.mxu0 0.0
  %1011 = vmatprep.subr.mxu0 0.0
  %1012 = vmatpush1.msra.mxu0 0.0
  %1013 = vmatprep.subr.mxu0 0.0
  %1014 = vmatpush1.msra.mxu0 0.0
  %1015 = vmatprep.subr.mxu0 0.0
  %1016 = vmatpush1.msra.mxu0 0.0
  %1017 = vmatprep.subr.mxu0 0.0
  %1018 = vmatpush1.msra.mxu0 0.0
  %1019 = vmatprep.subr.mxu0 0.0
  %1020 = vmatpush1.msra.mxu0 0.0
  %1021 = vmatprep.subr.mxu0 0.0
  %1022 = vmatpush1.msra.mxu0 0.0
  %1023 = vmatprep.subr.mxu0 0.0
  %1024 = vmatpush1.msra.mxu0 0.0
  %1025 = vmatprep.subr.mxu0 0.0
  %1026 = vmatpush1.msra.mxu0 0.0
  %1027 = vmatprep.subr.mxu0 0.0
  %1028 = vmatpush1.msra.mxu0 0.0
  %1029 = vmatprep.subr.mxu0 0.0
  %1030 = vmatpush1.msra.mxu0 0.0
  %1031 = vmatprep.subr.mxu0 0.0
  %1032 = vmatpush1.msra.mxu0 0.0
  %1033 = vmatprep.subr.mxu0 0.0
  %1034 = vmatpush1.msra.mxu0 0.0
  %1035 = vmatprep.subr.mxu0 0.0
  %1036 = vmatpush1.msra.mxu0 0.0
  %1037 = vmatprep.subr.mxu0 0.0
  %1038 = vmatpush1.msra.mxu0 0.0
  %1039 = vmatprep.subr.mxu0 0.0
  %1040 = vmatpush1.msra.mxu0 0.0
  %1041 = vmatprep.subr.mxu0 0.0
  %1042 = vmatpush1.msra.mxu0 0.0
  %1043 = vmatprep.subr.mxu0 0.0
  %1044 = vmatpush1.msra.mxu0 0.0
  %1045 = vmatprep.subr.mxu0 0.0
  %1046 = vmatpush1.msra.mxu0 0.0
  %1047 = vmatprep.subr.mxu0 0.0
  %1048 = vmatpush1.msra.mxu0 0.0
  %1049 = vmatprep.subr.mxu0 0.0
  %1050 = vmatpush1.msra.mxu0 0.0
  %1051 = vmatprep.mubr.f32.mxu0 0.0
  %1052 = vmatmul.mubr.f32.gmra.mrb[0].mxu0 %v982
  %v1053 = vpop.f32.mrb[0].mxu0
  %v1054 = vadd.f32 0.0, %v1053
  %v1055 = vpop.f32.mrb[0].mxu0
  %1056 = vmatprep.mubr.f32.mxu0 0.0
  %1057 = vmatmul.mubr.f32.gmra.mrb[0].mxu0 %v985
  %v1058 = vpop.f32.mrb[0].mxu0
  %v1059 = vadd.f32 0.0, %v1058
  %v1060 = vpop.f32.mrb[0].mxu0
  %1061 = vdwg.mxu0
  %v1063 = vsel %vm391, %v1054, 0
  %v1066 = vsel %vm391, %v1059, 0
  %1068 = vmatprep.subr.mxu0 0.0
  %1069 = vmatpush1.msra.mxu0 %v137
  %1070 = vmatprep.subr.mxu0 0.0
  %1071 = vmatpush1.msra.mxu0 %v138
  %1072 = vmatprep.subr.mxu0 0.0
  %1073 = vmatpush1.msra.mxu0 0.0
  %1074 = vmatprep.subr.mxu0 0.0
  %1075 = vmatpush1.msra.mxu0 0.0
  %1076 = vmatprep.subr.mxu0 0.0
  %1077 = vmatpush1.msra.mxu0 0.0
  %1078 = vmatprep.subr.mxu0 0.0
  %1079 = vmatpush1.msra.mxu0 0.0
  %1080 = vmatprep.subr.mxu0 0.0
  %1081 = vmatpush1.msra.mxu0 0.0
  %1082 = vmatprep.subr.mxu0 0.0
  %1083 = vmatpush1.msra.mxu0 0.0
  %1084 = vmatprep.subr.mxu0 0.0
  %1085 = vmatpush1.msra.mxu0 0.0
  %1086 = vmatprep.subr.mxu0 0.0
  %1087 = vmatpush1.msra.mxu0 0.0
  %1088 = vmatprep.subr.mxu0 0.0
  %1089 = vmatpush1.msra.mxu0 0.0
  %1090 = vmatprep.subr.mxu0 0.0
  %1091 = vmatpush1.msra.mxu0 0.0
  %1092 = vmatprep.subr.mxu0 0.0
  %1093 = vmatpush1.msra.mxu0 0.0
  %1094 = vmatprep.subr.mxu0 0.0
  %1095 = vmatpush1.msra.mxu0 0.0
  %1096 = vmatprep.subr.mxu0 0.0
  %1097 = vmatpush1.msra.mxu0 0.0
  %1098 = vmatprep.subr.mxu0 0.0
  %1099 = vmatpush1.msra.mxu0 0.0
  %1100 = vmatprep.subr.mxu0 0.0
  %1101 = vmatpush1.msra.mxu0 0.0
  %1102 = vmatprep.subr.mxu0 0.0
  %1103 = vmatpush1.msra.mxu0 0.0
  %1104 = vmatprep.subr.mxu0 0.0
  %1105 = vmatpush1.msra.mxu0 0.0
  %1106 = vmatprep.subr.mxu0 0.0
  %1107 = vmatpush1.msra.mxu0 0.0
  %1108 = vmatprep.subr.mxu0 0.0
  %1109 = vmatpush1.msra.mxu0 0.0
  %1110 = vmatprep.subr.mxu0 0.0
  %1111 = vmatpush1.msra.mxu0 0.0
  %1112 = vmatprep.subr.mxu0 0.0
  %1113 = vmatpush1.msra.mxu0 0.0
  %1114 = vmatprep.subr.mxu0 0.0
  %1115 = vmatpush1.msra.mxu0 0.0
  %1116 = vmatprep.subr.mxu0 0.0
  %1117 = vmatpush1.msra.mxu0 0.0
  %1118 = vmatprep.subr.mxu0 0.0
  %1119 = vmatpush1.msra.mxu0 0.0
  %1120 = vmatprep.subr.mxu0 0.0
  %1121 = vmatpush1.msra.mxu0 0.0
  %1122 = vmatprep.subr.mxu0 0.0
  %1123 = vmatpush1.msra.mxu0 0.0
  %1124 = vmatprep.subr.mxu0 0.0
  %1125 = vmatpush1.msra.mxu0 0.0
  %1126 = vmatprep.subr.mxu0 0.0
  %1127 = vmatpush1.msra.mxu0 0.0
  %1128 = vmatprep.subr.mxu0 0.0
  %1129 = vmatpush1.msra.mxu0 0.0
  %1130 = vmatprep.subr.mxu0 0.0
  %1131 = vmatpush1.msra.mxu0 0.0
  %1132 = vmatprep.mubr.f32.mxu0 0.0
  %1133 = vmatmul.mubr.f32.gmra.mrb[0].mxu0 %v1063
  %v1134 = vpop.f32.mrb[0].mxu0
  %v1135 = vadd.f32 0.0, %v1134
  %v1136 = vpop.f32.mrb[0].mxu0
  %1137 = vmatprep.mubr.f32.mxu0 0.0
  %1138 = vmatmul.mubr.f32.gmra.mrb[0].mxu0 %v1066
  %v1139 = vpop.f32.mrb[0].mxu0
  %v1140 = vadd.f32 0.0, %v1139
  %v1141 = vpop.f32.mrb[0].mxu0
  %1142 = vdwg.mxu0
  %v1144 = vsel %vm391, %v578, 0
  %v1147 = vsel %vm391, %v583, 0
  %1149 = vmatprep.subr.mxu0 0.0
  %1150 = vmatpush1.msra.mxu0 %v135
  %1151 = vmatprep.subr.mxu0 0.0
  %1152 = vmatpush1.msra.mxu0 %v136
  %1153 = vmatprep.subr.mxu0 0.0
  %1154 = vmatpush1.msra.mxu0 0.0
  %1155 = vmatprep.subr.mxu0 0.0
  %1156 = vmatpush1.msra.mxu0 0.0
  %1157 = vmatprep.subr.mxu0 0.0
  %1158 = vmatpush1.msra.mxu0 0.0
  %1159 = vmatprep.subr.mxu0 0.0
  %1160 = vmatpush1.msra.mxu0 0.0
  %1161 = vmatprep.subr.mxu0 0.0
  %1162 = vmatpush1.msra.mxu0 0.0
  %1163 = vmatprep.subr.mxu0 0.0
  %1164 = vmatpush1.msra.mxu0 0.0
  %1165 = vmatprep.subr.mxu0 0.0
  %1166 = vmatpush1.msra.mxu0 0.0
  %1167 = vmatprep.subr.mxu0 0.0
  %1168 = vmatpush1.msra.mxu0 0.0
  %1169 = vmatprep.subr.mxu0 0.0
  %1170 = vmatpush1.msra.mxu0 0.0
  %1171 = vmatprep.subr.mxu0 0.0
  %1172 = vmatpush1.msra.mxu0 0.0
  %1173 = vmatprep.subr.mxu0 0.0
  %1174 = vmatpush1.msra.mxu0 0.0
  %1175 = vmatprep.subr.mxu0 0.0
  %1176 = vmatpush1.msra.mxu0 0.0
  %1177 = vmatprep.subr.mxu0 0.0
  %1178 = vmatpush1.msra.mxu0 0.0
  %1179 = vmatprep.subr.mxu0 0.0
  %1180 = vmatpush1.msra.mxu0 0.0
  %1181 = vmatprep.subr.mxu0 0.0
  %1182 = vmatpush1.msra.mxu0 0.0
  %1183 = vmatprep.subr.mxu0 0.0
  %1184 = vmatpush1.msra.mxu0 0.0
  %1185 = vmatprep.subr.mxu0 0.0
  %1186 = vmatpush1.msra.mxu0 0.0
  %1187 = vmatprep.subr.mxu0 0.0
  %1188 = vmatpush1.msra.mxu0 0.0
  %1189 = vmatprep.subr.mxu0 0.0
  %1190 = vmatpush1.msra.mxu0 0.0
  %1191 = vmatprep.subr.mxu0 0.0
  %1192 = vmatpush1.msra.mxu0 0.0
  %1193 = vmatprep.subr.mxu0 0.0
  %1194 = vmatpush1.msra.mxu0 0.0
  %1195 = vmatprep.subr.mxu0 0.0
  %1196 = vmatpush1.msra.mxu0 0.0
  %1197 = vmatprep.subr.mxu0 0.0
  %1198 = vmatpush1.msra.mxu0 0.0
  %1199 = vmatprep.subr.mxu0 0.0
  %1200 = vmatpush1.msra.mxu0 0.0
  %1201 = vmatprep.subr.mxu0 0.0
  %1202 = vmatpush1.msra.mxu0 0.0
  %1203 = vmatprep.subr.mxu0 0.0
  %1204 = vmatpush1.msra.mxu0 0.0
  %1205 = vmatprep.subr.mxu0 0.0
  %1206 = vmatpush1.msra.mxu0 0.0
  %1207 = vmatprep.subr.mxu0 0.0
  %1208 = vmatpush1.msra.mxu0 0.0
  %1209 = vmatprep.subr.mxu0 0.0
  %1210 = vmatpush1.msra.mxu0 0.0
  %1211 = vmatprep.subr.mxu0 0.0
  %1212 = vmatpush1.msra.mxu0 0.0
  %1213 = vmatprep.mubr.f32.mxu0 0.0
  %1214 = vmatmul.mubr.f32.gmra.mrb[0].mxu0 %v1144
  %v1215 = vpop.f32.mrb[0].mxu0
  %v1216 = vadd.f32 %v1135, %v1215
  %v1217 = vpop.f32.mrb[0].mxu0
  %1218 = vmatprep.mubr.f32.mxu0 0.0
  %1219 = vmatmul.mubr.f32.gmra.mrb[0].mxu0 %v1147
  %v1220 = vpop.f32.mrb[0].mxu0
  %v1221 = vadd.f32 %v1140, %v1220
  %v1222 = vpop.f32.mrb[0].mxu0
  %1223 = vdwg.mxu0
  %v1224 = vadd.f32 %v73, %v1216
  %v1225 = vadd.f32 %v74, %v1221
  %v1226 = vld [vmem:[%s11] sm:$0x1]
  %v1228 = vlaneseq
  %v1229 = vshrl.u32 %v1228, 7
  %v1230 = vsub.s32 0, %v1229
  %v1231 = vrot.slane %v1226, %v1230
  %v1233 = vadd.f32 %v1224, %v1231
  %v1234 = vadd.f32 %v1225, %v1231
  %v1235 = vld [vmem:[%s12] sm:$0x1]
  %v1236 = vld [vmem:[%s13] sm:$0x1]
  %v1237 = vsel %vm79, %v1233, 0.0
  %1238 = vadd.xlane.f32.xlu0 %v1237
  %v1239 = vpop.xlane.xlu0 %1238
  %v1240 = vsel %vm79, %v1234, 0.0
  %1241 = vadd.xlane.f32.xlu0 %v1240
  %v1242 = vpop.xlane.xlu0 %1241
  %v1243 = vmul.f32 %v1239, %v86
  %v1244 = vmul.f32 %v1242, %v86
  %v1245 = vsub.f32 %v1233, %v1243
  %v1246 = vsub.f32 %v1234, %v1244
  %v1247 = vmul.f32 %v1245, %v1245
  %v1248 = vmul.f32 %v1246, %v1246
  %v1249 = vsel %vm79, %v1247, 0.0
  %1250 = vadd.xlane.f32.xlu0 %v1249
  %v1251 = vpop.xlane.xlu0 %1250
  %v1252 = vsel %vm79, %v1248, 0.0
  %1253 = vadd.xlane.f32.xlu0 %v1252
  %v1254 = vpop.xlane.xlu0 %1253
  %v1255 = vmul.f32 %v1251, %v86
  %v1256 = vmul.f32 %v1254, %v86
  %v1257 = vadd.f32 %v1255, 1e-05
  %v1258 = vadd.f32 %v1256, 1e-05
  %v1259 = vrsqrt.pop %v1257
  %v1260 = vrsqrt.pop %v1258
  %v1261 = vmul.f32 %v1245, %v1259
  %v1262 = vmul.f32 %v1246, %v1260
  %v1264 = vlaneseq
  %v1265 = vshrl.u32 %v1264, 7
  %v1266 = vsub.s32 0, %v1265
  %v1267 = vrot.slane %v1235, %v1266
  %v1269 = vmul.f32 %v1261, %v1267
  %v1270 = vmul.f32 %v1262, %v1267
  %v1272 = vlaneseq
  %v1273 = vshrl.u32 %v1272, 7
  %v1274 = vsub.s32 0, %v1273
  %v1275 = vrot.slane %v1236, %v1274
  %v1277 = vadd.f32 %v1269, %v1275
  %v1278 = vadd.f32 %v1270, %v1275
  %v1279 = vld [vmem:[%s14] sm:$0xff]
  %v1280 = vld [vmem:[%s14 + $0x8] sm:$0xff]
  %v1281 = vld [vmem:[%s14 + $0x10] sm:$0xff]
  %v1282 = vld [vmem:[%s14 + $0x18] sm:$0xff]
  %v1283 = vld [vmem:[%s15] sm:$0x1]
  %v1285 = vlaneseq
  %v1286 = vshrl.u32 %v1285, 7
  %v1287 = vsub.s32 0, %v1286
  %v1288 = vrot.slane %v1283, %v1287
  %v1291 = vsel %vm79, %v1277, 0
  %v1294 = vsel %vm79, %v1278, 0
  %1296 = vmatprep.subr.mxu0 0.0
  %1297 = vmatpush1.msra.mxu0 %v1279
  %1298 = vmatprep.subr.mxu0 0.0
  %1299 = vmatpush1.msra.mxu0 %v1280
  %1300 = vmatprep.subr.mxu0 0.0
  %1301 = vmatpush1.msra.mxu0 %v1281
  %1302 = vmatprep.subr.mxu0 0.0
  %1303 = vmatpush1.msra.mxu0 %v1282
  %1304 = vmatprep.subr.mxu0 0.0
  %1305 = vmatpush1.msra.mxu0 0.0
  %1306 = vmatprep.subr.mxu0 0.0
  %1307 = vmatpush1.msra.mxu0 0.0
  %1308 = vmatprep.subr.mxu0 0.0
  %1309 = vmatpush1.msra.mxu0 0.0
  %1310 = vmatprep.subr.mxu0 0.0
  %1311 = vmatpush1.msra.mxu0 0.0
  %1312 = vmatprep.subr.mxu0 0.0
  %1313 = vmatpush1.msra.mxu0 0.0
  %1314 = vmatprep.subr.mxu0 0.0
  %1315 = vmatpush1.msra.mxu0 0.0
  %1316 = vmatprep.subr.mxu0 0.0
  %1317 = vmatpush1.msra.mxu0 0.0
  %1318 = vmatprep.subr.mxu0 0.0
  %1319 = vmatpush1.msra.mxu0 0.0
  %1320 = vmatprep.subr.mxu0 0.0
  %1321 = vmatpush1.msra.mxu0 0.0
  %1322 = vmatprep.subr.mxu0 0.0
  %1323 = vmatpush1.msra.mxu0 0.0
  %1324 = vmatprep.subr.mxu0 0.0
  %1325 = vmatpush1.msra.mxu0 0.0
  %1326 = vmatprep.subr.mxu0 0.0
  %1327 = vmatpush1.msra.mxu0 0.0
  %1328 = vmatprep.subr.mxu0 0.0
  %1329 = vmatpush1.msra.mxu0 0.0
  %1330 = vmatprep.subr.mxu0 0.0
  %1331 = vmatpush1.msra.mxu0 0.0
  %1332 = vmatprep.subr.mxu0 0.0
  %1333 = vmatpush1.msra.mxu0 0.0
  %1334 = vmatprep.subr.mxu0 0.0
  %1335 = vmatpush1.msra.mxu0 0.0
  %1336 = vmatprep.subr.mxu0 0.0
  %1337 = vmatpush1.msra.mxu0 0.0
  %1338 = vmatprep.subr.mxu0 0.0
  %1339 = vmatpush1.msra.mxu0 0.0
  %1340 = vmatprep.subr.mxu0 0.0
  %1341 = vmatpush1.msra.mxu0 0.0
  %1342 = vmatprep.subr.mxu0 0.0
  %1343 = vmatpush1.msra.mxu0 0.0
  %1344 = vmatprep.subr.mxu0 0.0
  %1345 = vmatpush1.msra.mxu0 0.0
  %1346 = vmatprep.subr.mxu0 0.0
  %1347 = vmatpush1.msra.mxu0 0.0
  %1348 = vmatprep.subr.mxu0 0.0
  %1349 = vmatpush1.msra.mxu0 0.0
  %1350 = vmatprep.subr.mxu0 0.0
  %1351 = vmatpush1.msra.mxu0 0.0
  %1352 = vmatprep.subr.mxu0 0.0
  %1353 = vmatpush1.msra.mxu0 0.0
  %1354 = vmatprep.subr.mxu0 0.0
  %1355 = vmatpush1.msra.mxu0 0.0
  %1356 = vmatprep.subr.mxu0 0.0
  %1357 = vmatpush1.msra.mxu0 0.0
  %1358 = vmatprep.subr.mxu0 0.0
  %1359 = vmatpush1.msra.mxu0 0.0
  %1360 = vmatprep.mubr.f32.mxu0 0.0
  %1361 = vmatmul.mubr.f32.gmra.mrb[0].mxu0 %v1291
  %v1362 = vpop.f32.mrb[0].mxu0
  %v1363 = vadd.f32 %v1288, %v1362
  %v1364 = vpop.f32.mrb[0].mxu0
  %1365 = vmatprep.mubr.f32.mxu0 0.0
  %1366 = vmatmul.mubr.f32.gmra.mrb[0].mxu0 %v1294
  %v1367 = vpop.f32.mrb[0].mxu0
  %v1368 = vadd.f32 %v1288, %v1367
  %v1369 = vpop.f32.mrb[0].mxu0
  %1370 = vdwg.mxu0
  %v1371 = vmax.f32 %v1363, 0.0
  %v1372 = vmax.f32 %v1368, 0.0
  %v1373 = vld [vmem:[%s16] sm:$0xff]
  %v1374 = vld [vmem:[%s16 + $0x8] sm:$0xff]
  %v1375 = vld [vmem:[%s16 + $0x10] sm:$0xff]
  %v1376 = vld [vmem:[%s16 + $0x18] sm:$0xff]
  %v1377 = vld [vmem:[%s16 + $0x20] sm:$0xff]
  %v1378 = vld [vmem:[%s16 + $0x28] sm:$0xff]
  %v1379 = vld [vmem:[%s16 + $0x30] sm:$0xff]
  %v1380 = vld [vmem:[%s16 + $0x38] sm:$0xff]
  %v1381 = vld [vmem:[%s16 + $0x40] sm:$0xff]
  %v1382 = vld [vmem:[%s16 + $0x48] sm:$0xff]
  %v1383 = vld [vmem:[%s16 + $0x50] sm:$0xff]
  %v1384 = vld [vmem:[%s16 + $0x58] sm:$0xff]
  %v1385 = vld [vmem:[%s16 + $0x60] sm:$0xff]
  %v1386 = vld [vmem:[%s16 + $0x68] sm:$0xff]
  %v1387 = vld [vmem:[%s16 + $0x70] sm:$0xff]
  %v1388 = vld [vmem:[%s16 + $0x78] sm:$0xff]
  %1389 = vmatprep.subr.mxu0 0.0
  %1390 = vmatpush1.msra.mxu0 %v1373
  %1391 = vmatprep.subr.mxu0 0.0
  %1392 = vmatpush1.msra.mxu0 %v1374
  %1393 = vmatprep.subr.mxu0 0.0
  %1394 = vmatpush1.msra.mxu0 %v1375
  %1395 = vmatprep.subr.mxu0 0.0
  %1396 = vmatpush1.msra.mxu0 %v1376
  %1397 = vmatprep.subr.mxu0 0.0
  %1398 = vmatpush1.msra.mxu0 %v1377
  %1399 = vmatprep.subr.mxu0 0.0
  %1400 = vmatpush1.msra.mxu0 %v1378
  %1401 = vmatprep.subr.mxu0 0.0
  %1402 = vmatpush1.msra.mxu0 %v1379
  %1403 = vmatprep.subr.mxu0 0.0
  %1404 = vmatpush1.msra.mxu0 %v1380
  %1405 = vmatprep.subr.mxu0 0.0
  %1406 = vmatpush1.msra.mxu0 %v1381
  %1407 = vmatprep.subr.mxu0 0.0
  %1408 = vmatpush1.msra.mxu0 %v1382
  %1409 = vmatprep.subr.mxu0 0.0
  %1410 = vmatpush1.msra.mxu0 %v1383
  %1411 = vmatprep.subr.mxu0 0.0
  %1412 = vmatpush1.msra.mxu0 %v1384
  %1413 = vmatprep.subr.mxu0 0.0
  %1414 = vmatpush1.msra.mxu0 %v1385
  %1415 = vmatprep.subr.mxu0 0.0
  %1416 = vmatpush1.msra.mxu0 %v1386
  %1417 = vmatprep.subr.mxu0 0.0
  %1418 = vmatpush1.msra.mxu0 %v1387
  %1419 = vmatprep.subr.mxu0 0.0
  %1420 = vmatpush1.msra.mxu0 %v1388
  %1421 = vmatprep.subr.mxu0 0.0
  %1422 = vmatpush1.msra.mxu0 0.0
  %1423 = vmatprep.subr.mxu0 0.0
  %1424 = vmatpush1.msra.mxu0 0.0
  %1425 = vmatprep.subr.mxu0 0.0
  %1426 = vmatpush1.msra.mxu0 0.0
  %1427 = vmatprep.subr.mxu0 0.0
  %1428 = vmatpush1.msra.mxu0 0.0
  %1429 = vmatprep.subr.mxu0 0.0
  %1430 = vmatpush1.msra.mxu0 0.0
  %1431 = vmatprep.subr.mxu0 0.0
  %1432 = vmatpush1.msra.mxu0 0.0
  %1433 = vmatprep.subr.mxu0 0.0
  %1434 = vmatpush1.msra.mxu0 0.0
  %1435 = vmatprep.subr.mxu0 0.0
  %1436 = vmatpush1.msra.mxu0 0.0
  %1437 = vmatprep.subr.mxu0 0.0
  %1438 = vmatpush1.msra.mxu0 0.0
  %1439 = vmatprep.subr.mxu0 0.0
  %1440 = vmatpush1.msra.mxu0 0.0
  %1441 = vmatprep.subr.mxu0 0.0
  %1442 = vmatpush1.msra.mxu0 0.0
  %1443 = vmatprep.subr.mxu0 0.0
  %1444 = vmatpush1.msra.mxu0 0.0
  %1445 = vmatprep.subr.mxu0 0.0
  %1446 = vmatpush1.msra.mxu0 0.0
  %1447 = vmatprep.subr.mxu0 0.0
  %1448 = vmatpush1.msra.mxu0 0.0
  %1449 = vmatprep.subr.mxu0 0.0
  %1450 = vmatpush1.msra.mxu0 0.0
  %1451 = vmatprep.subr.mxu0 0.0
  %1452 = vmatpush1.msra.mxu0 0.0
  %1453 = vmatprep.mubr.f32.mxu0 0.0
  %1454 = vmatmul.mubr.f32.gmra.mrb[0].mxu0 %v1371
  %v1455 = vpop.f32.mrb[0].mxu0
  %v1456 = vadd.f32 0.0, %v1455
  %v1457 = vpop.f32.mrb[0].mxu0
  %1458 = vmatprep.mubr.f32.mxu0 0.0
  %1459 = vmatmul.mubr.f32.gmra.mrb[0].mxu0 %v1372
  %v1460 = vpop.f32.mrb[0].mxu0
  %v1461 = vadd.f32 0.0, %v1460
  %v1462 = vpop.f32.mrb[0].mxu0
  %1463 = vdwg.mxu0
  %v1464 = vadd.f32 %v1233, %v1456
  %v1465 = vadd.f32 %v1234, %v1461
  %v1466 = vld [vmem:[%s17] sm:$0x1]
  %v1468 = vlaneseq
  %v1469 = vshrl.u32 %v1468, 7
  %v1470 = vsub.s32 0, %v1469
  %v1471 = vrot.slane %v1466, %v1470
  %v1473 = vadd.f32 %v1464, %v1471
  %v1474 = vadd.f32 %v1465, %v1471
  %s1475 = scalar_lea.vmem %s2, 1
  %v1476 = vld [vmem:[%s1475] sm:$0x1]
  %s1477 = scalar_lea.vmem %s3, 1
  %v1478 = vld [vmem:[%s1477] sm:$0x1]
  %v1479 = vsel %vm79, %v1473, 0.0
  %1480 = vadd.xlane.f32.xlu0 %v1479
  %v1481 = vpop.xlane.xlu0 %1480
  %v1482 = vsel %vm79, %v1474, 0.0
  %1483 = vadd.xlane.f32.xlu0 %v1482
  %v1484 = vpop.xlane.xlu0 %1483
  %v1485 = vmul.f32 %v1481, %v86
  %v1486 = vmul.f32 %v1484, %v86
  %v1487 = vsub.f32 %v1473, %v1485
  %v1488 = vsub.f32 %v1474, %v1486
  %v1489 = vmul.f32 %v1487, %v1487
  %v1490 = vmul.f32 %v1488, %v1488
  %v1491 = vsel %vm79, %v1489, 0.0
  %1492 = vadd.xlane.f32.xlu0 %v1491
  %v1493 = vpop.xlane.xlu0 %1492
  %v1494 = vsel %vm79, %v1490, 0.0
  %1495 = vadd.xlane.f32.xlu0 %v1494
  %v1496 = vpop.xlane.xlu0 %1495
  %v1497 = vmul.f32 %v1493, %v86
  %v1498 = vmul.f32 %v1496, %v86
  %v1499 = vadd.f32 %v1497, 1e-05
  %v1500 = vadd.f32 %v1498, 1e-05
  %v1501 = vrsqrt.pop %v1499
  %v1502 = vrsqrt.pop %v1500
  %v1503 = vmul.f32 %v1487, %v1501
  %v1504 = vmul.f32 %v1488, %v1502
  %v1506 = vlaneseq
  %v1507 = vshrl.u32 %v1506, 7
  %v1508 = vsub.s32 0, %v1507
  %v1509 = vrot.slane %v1476, %v1508
  %v1511 = vmul.f32 %v1503, %v1509
  %v1512 = vmul.f32 %v1504, %v1509
  %v1514 = vlaneseq
  %v1515 = vshrl.u32 %v1514, 7
  %v1516 = vsub.s32 0, %v1515
  %v1517 = vrot.slane %v1478, %v1516
  %v1519 = vadd.f32 %v1511, %v1517
  %v1520 = vadd.f32 %v1512, %v1517
  %s1521 = scalar_lea.vmem %s4, 32
  %v1522 = vld [vmem:[%s1521] sm:$0xff]
  %v1523 = vld [vmem:[%s1521 + $0x8] sm:$0xff]
  %v1524 = vld [vmem:[%s1521 + $0x10] sm:$0xff]
  %v1525 = vld [vmem:[%s1521 + $0x18] sm:$0xff]
  %s1526 = scalar_lea.vmem %s6, 32
  %v1527 = vld [vmem:[%s1526] sm:$0xff]
  %v1528 = vld [vmem:[%s1526 + $0x8] sm:$0xff]
  %v1529 = vld [vmem:[%s1526 + $0x10] sm:$0xff]
  %v1530 = vld [vmem:[%s1526 + $0x18] sm:$0xff]
  %s1531 = scalar_lea.vmem %s8, 32
  %v1532 = vld [vmem:[%s1531] sm:$0xff]
  %v1533 = vld [vmem:[%s1531 + $0x8] sm:$0xff]
  %v1534 = vld [vmem:[%s1531 + $0x10] sm:$0xff]
  %v1535 = vld [vmem:[%s1531 + $0x18] sm:$0xff]
  %s1536 = scalar_lea.vmem %s10, 32
  %v1537 = vld [vmem:[%s1536] sm:$0xff]
  %v1538 = vld [vmem:[%s1536 + $0x8] sm:$0xff]
  %v1539 = vld [vmem:[%s1536 + $0x10] sm:$0xff]
  %v1540 = vld [vmem:[%s1536 + $0x18] sm:$0xff]
  %s1541 = scalar_lea.vmem %s5, 1
  %v1542 = vld [vmem:[%s1541] sm:$0x1]
  %s1543 = scalar_lea.vmem %s7, 1
  %v1544 = vld [vmem:[%s1543] sm:$0x1]
  %s1545 = scalar_lea.vmem %s9, 1
  %v1546 = vld [vmem:[%s1545] sm:$0x1]
  %v1548 = vlaneseq
  %v1549 = vshrl.u32 %v1548, 7
  %v1550 = vsub.s32 0, %v1549
  %v1551 = vrot.slane %v1542, %v1550
  %v1554 = vsel %vm79, %v1519, 0
  %v1557 = vsel %vm79, %v1520, 0
  %1559 = vmatprep.subr.mxu0 0.0
  %1560 = vmatpush1.msra.mxu0 %v1522
  %1561 = vmatprep.subr.mxu0 0.0
  %1562 = vmatpush1.msra.mxu0 %v1523
  %1563 = vmatprep.subr.mxu0 0.0
  %1564 = vmatpush1.msra.mxu0 %v1524
  %1565 = vmatprep.subr.mxu0 0.0
  %1566 = vmatpush1.msra.mxu0 %v1525
  %1567 = vmatprep.subr.mxu0 0.0
  %1568 = vmatpush1.msra.mxu0 0.0
  %1569 = vmatprep.subr.mxu0 0.0
  %1570 = vmatpush1.msra.mxu0 0.0
  %1571 = vmatprep.subr.mxu0 0.0
  %1572 = vmatpush1.msra.mxu0 0.0
  %1573 = vmatprep.subr.mxu0 0.0
  %1574 = vmatpush1.msra.mxu0 0.0
  %1575 = vmatprep.subr.mxu0 0.0
  %1576 = vmatpush1.msra.mxu0 0.0
  %1577 = vmatprep.subr.mxu0 0.0
  %1578 = vmatpush1.msra.mxu0 0.0
  %1579 = vmatprep.subr.mxu0 0.0
  %1580 = vmatpush1.msra.mxu0 0.0
  %1581 = vmatprep.subr.mxu0 0.0
  %1582 = vmatpush1.msra.mxu0 0.0
  %1583 = vmatprep.subr.mxu0 0.0
  %1584 = vmatpush1.msra.mxu0 0.0
  %1585 = vmatprep.subr.mxu0 0.0
  %1586 = vmatpush1.msra.mxu0 0.0
  %1587 = vmatprep.subr.mxu0 0.0
  %1588 = vmatpush1.msra.mxu0 0.0
  %1589 = vmatprep.subr.mxu0 0.0
  %1590 = vmatpush1.msra.mxu0 0.0
  %1591 = vmatprep.subr.mxu0 0.0
  %1592 = vmatpush1.msra.mxu0 0.0
  %1593 = vmatprep.subr.mxu0 0.0
  %1594 = vmatpush1.msra.mxu0 0.0
  %1595 = vmatprep.subr.mxu0 0.0
  %1596 = vmatpush1.msra.mxu0 0.0
  %1597 = vmatprep.subr.mxu0 0.0
  %1598 = vmatpush1.msra.mxu0 0.0
  %1599 = vmatprep.subr.mxu0 0.0
  %1600 = vmatpush1.msra.mxu0 0.0
  %1601 = vmatprep.subr.mxu0 0.0
  %1602 = vmatpush1.msra.mxu0 0.0
  %1603 = vmatprep.subr.mxu0 0.0
  %1604 = vmatpush1.msra.mxu0 0.0
  %1605 = vmatprep.subr.mxu0 0.0
  %1606 = vmatpush1.msra.mxu0 0.0
  %1607 = vmatprep.subr.mxu0 0.0
  %1608 = vmatpush1.msra.mxu0 0.0
  %1609 = vmatprep.subr.mxu0 0.0
  %1610 = vmatpush1.msra.mxu0 0.0
  %1611 = vmatprep.subr.mxu0 0.0
  %1612 = vmatpush1.msra.mxu0 0.0
  %1613 = vmatprep.subr.mxu0 0.0
  %1614 = vmatpush1.msra.mxu0 0.0
  %1615 = vmatprep.subr.mxu0 0.0
  %1616 = vmatpush1.msra.mxu0 0.0
  %1617 = vmatprep.subr.mxu0 0.0
  %1618 = vmatpush1.msra.mxu0 0.0
  %1619 = vmatprep.subr.mxu0 0.0
  %1620 = vmatpush1.msra.mxu0 0.0
  %1621 = vmatprep.subr.mxu0 0.0
  %1622 = vmatpush1.msra.mxu0 0.0
  %1623 = vmatprep.mubr.f32.mxu0 0.0
  %1624 = vmatmul.mubr.f32.gmra.mrb[0].mxu0 %v1554
  %v1625 = vpop.f32.mrb[0].mxu0
  %v1626 = vadd.f32 %v1551, %v1625
  %v1627 = vpop.f32.mrb[0].mxu0
  %1628 = vmatprep.mubr.f32.mxu0 0.0
  %1629 = vmatmul.mubr.f32.gmra.mrb[0].mxu0 %v1557
  %v1630 = vpop.f32.mrb[0].mxu0
  %v1631 = vadd.f32 %v1551, %v1630
  %v1632 = vpop.f32.mrb[0].mxu0
  %1633 = vdwg.mxu0
  %v1635 = vlaneseq
  %v1636 = vshrl.u32 %v1635, 7
  %v1637 = vsub.s32 0, %v1636
  %v1638 = vrot.slane %v1544, %v1637
  %1640 = vmatprep.subr.mxu0 0.0
  %1641 = vmatpush1.msra.mxu0 %v1527
  %1642 = vmatprep.subr.mxu0 0.0
  %1643 = vmatpush1.msra.mxu0 %v1528
  %1644 = vmatprep.subr.mxu0 0.0
  %1645 = vmatpush1.msra.mxu0 %v1529
  %1646 = vmatprep.subr.mxu0 0.0
  %1647 = vmatpush1.msra.mxu0 %v1530
  %1648 = vmatprep.subr.mxu0 0.0
  %1649 = vmatpush1.msra.mxu0 0.0
  %1650 = vmatprep.subr.mxu0 0.0
  %1651 = vmatpush1.msra.mxu0 0.0
  %1652 = vmatprep.subr.mxu0 0.0
  %1653 = vmatpush1.msra.mxu0 0.0
  %1654 = vmatprep.subr.mxu0 0.0
  %1655 = vmatpush1.msra.mxu0 0.0
  %1656 = vmatprep.subr.mxu0 0.0
  %1657 = vmatpush1.msra.mxu0 0.0
  %1658 = vmatprep.subr.mxu0 0.0
  %1659 = vmatpush1.msra.mxu0 0.0
  %1660 = vmatprep.subr.mxu0 0.0
  %1661 = vmatpush1.msra.mxu0 0.0
  %1662 = vmatprep.subr.mxu0 0.0
  %1663 = vmatpush1.msra.mxu0 0.0
  %1664 = vmatprep.subr.mxu0 0.0
  %1665 = vmatpush1.msra.mxu0 0.0
  %1666 = vmatprep.subr.mxu0 0.0
  %1667 = vmatpush1.msra.mxu0 0.0
  %1668 = vmatprep.subr.mxu0 0.0
  %1669 = vmatpush1.msra.mxu0 0.0
  %1670 = vmatprep.subr.mxu0 0.0
  %1671 = vmatpush1.msra.mxu0 0.0
  %1672 = vmatprep.subr.mxu0 0.0
  %1673 = vmatpush1.msra.mxu0 0.0
  %1674 = vmatprep.subr.mxu0 0.0
  %1675 = vmatpush1.msra.mxu0 0.0
  %1676 = vmatprep.subr.mxu0 0.0
  %1677 = vmatpush1.msra.mxu0 0.0
  %1678 = vmatprep.subr.mxu0 0.0
  %1679 = vmatpush1.msra.mxu0 0.0
  %1680 = vmatprep.subr.mxu0 0.0
  %1681 = vmatpush1.msra.mxu0 0.0
  %1682 = vmatprep.subr.mxu0 0.0
  %1683 = vmatpush1.msra.mxu0 0.0
  %1684 = vmatprep.subr.mxu0 0.0
  %1685 = vmatpush1.msra.mxu0 0.0
  %1686 = vmatprep.subr.mxu0 0.0
  %1687 = vmatpush1.msra.mxu0 0.0
  %1688 = vmatprep.subr.mxu0 0.0
  %1689 = vmatpush1.msra.mxu0 0.0
  %1690 = vmatprep.subr.mxu0 0.0
  %1691 = vmatpush1.msra.mxu0 0.0
  %1692 = vmatprep.subr.mxu0 0.0
  %1693 = vmatpush1.msra.mxu0 0.0
  %1694 = vmatprep.subr.mxu0 0.0
  %1695 = vmatpush1.msra.mxu0 0.0
  %1696 = vmatprep.subr.mxu0 0.0
  %1697 = vmatpush1.msra.mxu0 0.0
  %1698 = vmatprep.subr.mxu0 0.0
  %1699 = vmatpush1.msra.mxu0 0.0
  %1700 = vmatprep.subr.mxu0 0.0
  %1701 = vmatpush1.msra.mxu0 0.0
  %1702 = vmatprep.subr.mxu0 0.0
  %1703 = vmatpush1.msra.mxu0 0.0
  %1704 = vmatprep.mubr.f32.mxu0 0.0
  %1705 = vmatmul.mubr.f32.gmra.mrb[0].mxu0 %v1554
  %v1706 = vpop.f32.mrb[0].mxu0
  %v1707 = vadd.f32 %v1638, %v1706
  %v1708 = vpop.f32.mrb[0].mxu0
  %1709 = vmatprep.mubr.f32.mxu0 0.0
  %1710 = vmatmul.mubr.f32.gmra.mrb[0].mxu0 %v1557
  %v1711 = vpop.f32.mrb[0].mxu0
  %v1712 = vadd.f32 %v1638, %v1711
  %v1713 = vpop.f32.mrb[0].mxu0
  %1714 = vdwg.mxu0
  %v1716 = vlaneseq
  %v1717 = vshrl.u32 %v1716, 7
  %v1718 = vsub.s32 0, %v1717
  %v1719 = vrot.slane %v1546, %v1718
  %1721 = vmatprep.subr.mxu0 0.0
  %1722 = vmatpush1.msra.mxu0 %v1532
  %1723 = vmatprep.subr.mxu0 0.0
  %1724 = vmatpush1.msra.mxu0 %v1533
  %1725 = vmatprep.subr.mxu0 0.0
  %1726 = vmatpush1.msra.mxu0 %v1534
  %1727 = vmatprep.subr.mxu0 0.0
  %1728 = vmatpush1.msra.mxu0 %v1535
  %1729 = vmatprep.subr.mxu0 0.0
  %1730 = vmatpush1.msra.mxu0 0.0
  %1731 = vmatprep.subr.mxu0 0.0
  %1732 = vmatpush1.msra.mxu0 0.0
  %1733 = vmatprep.subr.mxu0 0.0
  %1734 = vmatpush1.msra.mxu0 0.0
  %1735 = vmatprep.subr.mxu0 0.0
  %1736 = vmatpush1.msra.mxu0 0.0
  %1737 = vmatprep.subr.mxu0 0.0
  %1738 = vmatpush1.msra.mxu0 0.0
  %1739 = vmatprep.subr.mxu0 0.0
  %1740 = vmatpush1.msra.mxu0 0.0
  %1741 = vmatprep.subr.mxu0 0.0
  %1742 = vmatpush1.msra.mxu0 0.0
  %1743 = vmatprep.subr.mxu0 0.0
  %1744 = vmatpush1.msra.mxu0 0.0
  %1745 = vmatprep.subr.mxu0 0.0
  %1746 = vmatpush1.msra.mxu0 0.0
  %1747 = vmatprep.subr.mxu0 0.0
  %1748 = vmatpush1.msra.mxu0 0.0
  %1749 = vmatprep.subr.mxu0 0.0
  %1750 = vmatpush1.msra.mxu0 0.0
  %1751 = vmatprep.subr.mxu0 0.0
  %1752 = vmatpush1.msra.mxu0 0.0
  %1753 = vmatprep.subr.mxu0 0.0
  %1754 = vmatpush1.msra.mxu0 0.0
  %1755 = vmatprep.subr.mxu0 0.0
  %1756 = vmatpush1.msra.mxu0 0.0
  %1757 = vmatprep.subr.mxu0 0.0
  %1758 = vmatpush1.msra.mxu0 0.0
  %1759 = vmatprep.subr.mxu0 0.0
  %1760 = vmatpush1.msra.mxu0 0.0
  %1761 = vmatprep.subr.mxu0 0.0
  %1762 = vmatpush1.msra.mxu0 0.0
  %1763 = vmatprep.subr.mxu0 0.0
  %1764 = vmatpush1.msra.mxu0 0.0
  %1765 = vmatprep.subr.mxu0 0.0
  %1766 = vmatpush1.msra.mxu0 0.0
  %1767 = vmatprep.subr.mxu0 0.0
  %1768 = vmatpush1.msra.mxu0 0.0
  %1769 = vmatprep.subr.mxu0 0.0
  %1770 = vmatpush1.msra.mxu0 0.0
  %1771 = vmatprep.subr.mxu0 0.0
  %1772 = vmatpush1.msra.mxu0 0.0
  %1773 = vmatprep.subr.mxu0 0.0
  %1774 = vmatpush1.msra.mxu0 0.0
  %1775 = vmatprep.subr.mxu0 0.0
  %1776 = vmatpush1.msra.mxu0 0.0
  %1777 = vmatprep.subr.mxu0 0.0
  %1778 = vmatpush1.msra.mxu0 0.0
  %1779 = vmatprep.subr.mxu0 0.0
  %1780 = vmatpush1.msra.mxu0 0.0
  %1781 = vmatprep.subr.mxu0 0.0
  %1782 = vmatpush1.msra.mxu0 0.0
  %1783 = vmatprep.subr.mxu0 0.0
  %1784 = vmatpush1.msra.mxu0 0.0
  %1785 = vmatprep.mubr.f32.mxu0 0.0
  %1786 = vmatmul.mubr.f32.gmra.mrb[0].mxu0 %v1554
  %v1787 = vpop.f32.mrb[0].mxu0
  %v1788 = vadd.f32 %v1719, %v1787
  %v1789 = vpop.f32.mrb[0].mxu0
  %1790 = vmatprep.mubr.f32.mxu0 0.0
  %1791 = vmatmul.mubr.f32.gmra.mrb[0].mxu0 %v1557
  %v1792 = vpop.f32.mrb[0].mxu0
  %v1793 = vadd.f32 %v1719, %v1792
  %v1794 = vpop.f32.mrb[0].mxu0
  %1795 = vdwg.mxu0
  %v1797 = vsel %vm391, %v1626, 0
  %v1800 = vsel %vm391, %v1631, 0
  %v1803 = vsel %vm391, %v1707, 0
  %v1806 = vsel %vm391, %v1712, 0
  %1808 = vmatprep.subr.mxu0 0.0
  %1809 = vmatpush1.xpose.msra.mxu0 %v1803
  %1810 = vmatprep.subr.mxu0 0.0
  %1811 = vmatpush1.xpose.msra.mxu0 %v1806
  %1812 = vmatprep.subr.mxu0 0.0
  %1813 = vmatpush1.xpose.msra.mxu0 0.0
  %1814 = vmatprep.subr.mxu0 0.0
  %1815 = vmatpush1.xpose.msra.mxu0 0.0
  %1816 = vmatprep.subr.mxu0 0.0
  %1817 = vmatpush1.xpose.msra.mxu0 0.0
  %1818 = vmatprep.subr.mxu0 0.0
  %1819 = vmatpush1.xpose.msra.mxu0 0.0
  %1820 = vmatprep.subr.mxu0 0.0
  %1821 = vmatpush1.xpose.msra.mxu0 0.0
  %1822 = vmatprep.subr.mxu0 0.0
  %1823 = vmatpush1.xpose.msra.mxu0 0.0
  %1824 = vmatprep.subr.mxu0 0.0
  %1825 = vmatpush1.xpose.msra.mxu0 0.0
  %1826 = vmatprep.subr.mxu0 0.0
  %1827 = vmatpush1.xpose.msra.mxu0 0.0
  %1828 = vmatprep.subr.mxu0 0.0
  %1829 = vmatpush1.xpose.msra.mxu0 0.0
  %1830 = vmatprep.subr.mxu0 0.0
  %1831 = vmatpush1.xpose.msra.mxu0 0.0
  %1832 = vmatprep.subr.mxu0 0.0
  %1833 = vmatpush1.xpose.msra.mxu0 0.0
  %1834 = vmatprep.subr.mxu0 0.0
  %1835 = vmatpush1.xpose.msra.mxu0 0.0
  %1836 = vmatprep.subr.mxu0 0.0
  %1837 = vmatpush1.xpose.msra.mxu0 0.0
  %1838 = vmatprep.subr.mxu0 0.0
  %1839 = vmatpush1.xpose.msra.mxu0 0.0
  %1840 = vmatprep.subr.mxu0 0.0
  %1841 = vmatpush1.xpose.msra.mxu0 0.0
  %1842 = vmatprep.subr.mxu0 0.0
  %1843 = vmatpush1.xpose.msra.mxu0 0.0
  %1844 = vmatprep.subr.mxu0 0.0
  %1845 = vmatpush1.xpose.msra.mxu0 0.0
  %1846 = vmatprep.subr.mxu0 0.0
  %1847 = vmatpush1.xpose.msra.mxu0 0.0
  %1848 = vmatprep.subr.mxu0 0.0
  %1849 = vmatpush1.xpose.msra.mxu0 0.0
  %1850 = vmatprep.subr.mxu0 0.0
  %1851 = vmatpush1.xpose.msra.mxu0 0.0
  %1852 = vmatprep.subr.mxu0 0.0
  %1853 = vmatpush1.xpose.msra.mxu0 0.0
  %1854 = vmatprep.subr.mxu0 0.0
  %1855 = vmatpush1.xpose.msra.mxu0 0.0
  %1856 = vmatprep.subr.mxu0 0.0
  %1857 = vmatpush1.xpose.msra.mxu0 0.0
  %1858 = vmatprep.subr.mxu0 0.0
  %1859 = vmatpush1.xpose.msra.mxu0 0.0
  %1860 = vmatprep.subr.mxu0 0.0
  %1861 = vmatpush1.xpose.msra.mxu0 0.0
  %1862 = vmatprep.subr.mxu0 0.0
  %1863 = vmatpush1.xpose.msra.mxu0 0.0
  %1864 = vmatprep.subr.mxu0 0.0
  %1865 = vmatpush1.xpose.msra.mxu0 0.0
  %1866 = vmatprep.subr.mxu0 0.0
  %1867 = vmatpush1.xpose.msra.mxu0 0.0
  %1868 = vmatprep.subr.mxu0 0.0
  %1869 = vmatpush1.xpose.msra.mxu0 0.0
  %1870 = vmatprep.subr.mxu0 0.0
  %1871 = vmatpush1.xpose.msra.mxu0 0.0
  %1872 = vmatprep.mubr.f32.mxu0 0.0
  %1873 = vmatmul.mubr.f32.gmra.mrb[0].mxu0 %v1797
  %v1874 = vpop.f32.mrb[0].mxu0
  %v1875 = vadd.f32 0.0, %v1874
  %v1876 = vpop.f32.mrb[0].mxu0
  %1877 = vmatprep.mubr.f32.mxu0 0.0
  %1878 = vmatmul.mubr.f32.gmra.mrb[0].mxu0 %v1800
  %v1879 = vpop.f32.mrb[0].mxu0
  %v1880 = vadd.f32 0.0, %v1879
  %v1881 = vpop.f32.mrb[0].mxu0
  %1882 = vdwg.mxu0
  %v1883 = vmul.f32 %v1875, 0.25
  %v1884 = vmul.f32 %v1880, 0.25
  %v1885 = vadd.f32 %v1883, %v75
  %v1886 = vadd.f32 %v1884, %v76
  %v1887 = vsel %vm391, %v1885, -inf
  %1888 = vmax.xlane.f32.xlu0 %v1887
  %v1889 = vpop.xlane.xlu0 %1888
  %v1890 = vsel %vm391, %v1886, -inf
  %1891 = vmax.xlane.f32.xlu0 %v1890
  %v1892 = vpop.xlane.xlu0 %1891
  %v1893 = vsub.f32 %v1885, %v1889
  %v1894 = vsub.f32 %v1886, %v1892
  %v1895 = vmul.f32 %v1893, 1.442695
  %v1896 = vpow.pop %v1895
  %v1897 = vmul.f32 %v1894, 1.442695
  %v1898 = vpow.pop %v1897
  %v1899 = vsel %vm391, %v1896, 0.0
  %1900 = vadd.xlane.f32.xlu0 %v1899
  %v1901 = vpop.xlane.xlu0 %1900
  %v1902 = vsel %vm391, %v1898, 0.0
  %1903 = vadd.xlane.f32.xlu0 %v1902
  %v1904 = vpop.xlane.xlu0 %1903
  %v1905 = vrcp.pop %v1901
  %v1906 = vrcp.pop %v1904
  %v1907 = vmul.f32 %v1896, %v1905
  %v1908 = vmul.f32 %v1898, %v1906
  %v1910 = vsel %vm391, %v1907, 0
  %v1913 = vsel %vm391, %v1908, 0
  %1915 = vmatprep.subr.mxu0 0.0
  %1916 = vmatpush1.msra.mxu0 %v1788
  %1917 = vmatprep.subr.mxu0 0.0
  %1918 = vmatpush1.msra.mxu0 %v1793
  %1919 = vmatprep.subr.mxu0 0.0
  %1920 = vmatpush1.msra.mxu0 0.0
  %1921 = vmatprep.subr.mxu0 0.0
  %1922 = vmatpush1.msra.mxu0 0.0
  %1923 = vmatprep.subr.mxu0 0.0
  %1924 = vmatpush1.msra.mxu0 0.0
  %1925 = vmatprep.subr.mxu0 0.0
  %1926 = vmatpush1.msra.mxu0 0.0
  %1927 = vmatprep.subr.mxu0 0.0
  %1928 = vmatpush1.msra.mxu0 0.0
  %1929 = vmatprep.subr.mxu0 0.0
  %1930 = vmatpush1.msra.mxu0 0.0
  %1931 = vmatprep.subr.mxu0 0.0
  %1932 = vmatpush1.msra.mxu0 0.0
  %1933 = vmatprep.subr.mxu0 0.0
  %1934 = vmatpush1.msra.mxu0 0.0
  %1935 = vmatprep.subr.mxu0 0.0
  %1936 = vmatpush1.msra.mxu0 0.0
  %1937 = vmatprep.subr.mxu0 0.0
  %1938 = vmatpush1.msra.mxu0 0.0
  %1939 = vmatprep.subr.mxu0 0.0
  %1940 = vmatpush1.msra.mxu0 0.0
  %1941 = vmatprep.subr.mxu0 0.0
  %1942 = vmatpush1.msra.mxu0 0.0
  %1943 = vmatprep.subr.mxu0 0.0
  %1944 = vmatpush1.msra.mxu0 0.0
  %1945 = vmatprep.subr.mxu0 0.0
  %1946 = vmatpush1.msra.mxu0 0.0
  %1947 = vmatprep.subr.mxu0 0.0
  %1948 = vmatpush1.msra.mxu0 0.0
  %1949 = vmatprep.subr.mxu0 0.0
  %1950 = vmatpush1.msra.mxu0 0.0
  %1951 = vmatprep.subr.mxu0 0.0
  %1952 = vmatpush1.msra.mxu0 0.0
  %1953 = vmatprep.subr.mxu0 0.0
  %1954 = vmatpush1.msra.mxu0 0.0
  %1955 = vmatprep.subr.mxu0 0.0
  %1956 = vmatpush1.msra.mxu0 0.0
  %1957 = vmatprep.subr.mxu0 0.0
  %1958 = vmatpush1.msra.mxu0 0.0
  %1959 = vmatprep.subr.mxu0 0.0
  %1960 = vmatpush1.msra.mxu0 0.0
  %1961 = vmatprep.subr.mxu0 0.0
  %1962 = vmatpush1.msra.mxu0 0.0
  %1963 = vmatprep.subr.mxu0 0.0
  %1964 = vmatpush1.msra.mxu0 0.0
  %1965 = vmatprep.subr.mxu0 0.0
  %1966 = vmatpush1.msra.mxu0 0.0
  %1967 = vmatprep.subr.mxu0 0.0
  %1968 = vmatpush1.msra.mxu0 0.0
  %1969 = vmatprep.subr.mxu0 0.0
  %1970 = vmatpush1.msra.mxu0 0.0
  %1971 = vmatprep.subr.mxu0 0.0
  %1972 = vmatpush1.msra.mxu0 0.0
  %1973 = vmatprep.subr.mxu0 0.0
  %1974 = vmatpush1.msra.mxu0 0.0
  %1975 = vmatprep.subr.mxu0 0.0
  %1976 = vmatpush1.msra.mxu0 0.0
  %1977 = vmatprep.subr.mxu0 0.0
  %1978 = vmatpush1.msra.mxu0 0.0
  %1979 = vmatprep.mubr.f32.mxu0 0.0
  %1980 = vmatmul.mubr.f32.gmra.mrb[0].mxu0 %v1910
  %v1981 = vpop.f32.mrb[0].mxu0
  %v1982 = vadd.f32 0.0, %v1981
  %v1983 = vpop.f32.mrb[0].mxu0
  %1984 = vmatprep.mubr.f32.mxu0 0.0
  %1985 = vmatmul.mubr.f32.gmra.mrb[0].mxu0 %v1913
  %v1986 = vpop.f32.mrb[0].mxu0
  %v1987 = vadd.f32 0.0, %v1986
  %v1988 = vpop.f32.mrb[0].mxu0
  %1989 = vdwg.mxu0
  %1994 = vrot.lane.b32.xlu0 %v1522, 112
  %v1995 = vpop.permute.xlu0 %1994
  %1996 = vrot.lane.b32.xlu0 %v1523, 112
  %v1997 = vpop.permute.xlu0 %1996
  %1998 = vrot.lane.b32.xlu0 %v1524, 112
  %v1999 = vpop.permute.xlu0 %1998
  %2000 = vrot.lane.b32.xlu0 %v1525, 112
  %v2001 = vpop.permute.xlu0 %2000
  %2006 = vrot.lane.b32.xlu0 %v1551, 112
  %v2007 = vpop.permute.xlu0 %2006
  %2009 = vmatprep.subr.mxu0 0.0
  %2010 = vmatpush1.msra.mxu0 %v1995
  %2011 = vmatprep.subr.mxu0 0.0
  %2012 = vmatpush1.msra.mxu0 %v1997
  %2013 = vmatprep.subr.mxu0 0.0
  %2014 = vmatpush1.msra.mxu0 %v1999
  %2015 = vmatprep.subr.mxu0 0.0
  %2016 = vmatpush1.msra.mxu0 %v2001
  %2017 = vmatprep.subr.mxu0 0.0
  %2018 = vmatpush1.msra.mxu0 0.0
  %2019 = vmatprep.subr.mxu0 0.0
  %2020 = vmatpush1.msra.mxu0 0.0
  %2021 = vmatprep.subr.mxu0 0.0
  %2022 = vmatpush1.msra.mxu0 0.0
  %2023 = vmatprep.subr.mxu0 0.0
  %2024 = vmatpush1.msra.mxu0 0.0
  %2025 = vmatprep.subr.mxu0 0.0
  %2026 = vmatpush1.msra.mxu0 0.0
  %2027 = vmatprep.subr.mxu0 0.0
  %2028 = vmatpush1.msra.mxu0 0.0
  %2029 = vmatprep.subr.mxu0 0.0
  %2030 = vmatpush1.msra.mxu0 0.0
  %2031 = vmatprep.subr.mxu0 0.0
  %2032 = vmatpush1.msra.mxu0 0.0
  %2033 = vmatprep.subr.mxu0 0.0
  %2034 = vmatpush1.msra.mxu0 0.0
  %2035 = vmatprep.subr.mxu0 0.0
  %2036 = vmatpush1.msra.mxu0 0.0
  %2037 = vmatprep.subr.mxu0 0.0
  %2038 = vmatpush1.msra.mxu0 0.0
  %2039 = vmatprep.subr.mxu0 0.0
  %2040 = vmatpush1.msra.mxu0 0.0
  %2041 = vmatprep.subr.mxu0 0.0
  %2042 = vmatpush1.msra.mxu0 0.0
  %2043 = vmatprep.subr.mxu0 0.0
  %2044 = vmatpush1.msra.mxu0 0.0
  %2045 = vmatprep.subr.mxu0 0.0
  %2046 = vmatpush1.msra.mxu0 0.0
  %2047 = vmatprep.subr.mxu0 0.0
  %2048 = vmatpush1.msra.mxu0 0.0
  %2049 = vmatprep.subr.mxu0 0.0
  %2050 = vmatpush1.msra.mxu0 0.0
  %2051 = vmatprep.subr.mxu0 0.0
  %2052 = vmatpush1.msra.mxu0 0.0
  %2053 = vmatprep.subr.mxu0 0.0
  %2054 = vmatpush1.msra.mxu0 0.0
  %2055 = vmatprep.subr.mxu0 0.0
  %2056 = vmatpush1.msra.mxu0 0.0
  %2057 = vmatprep.subr.mxu0 0.0
  %2058 = vmatpush1.msra.mxu0 0.0
  %2059 = vmatprep.subr.mxu0 0.0
  %2060 = vmatpush1.msra.mxu0 0.0
  %2061 = vmatprep.subr.mxu0 0.0
  %2062 = vmatpush1.msra.mxu0 0.0
  %2063 = vmatprep.subr.mxu0 0.0
  %2064 = vmatpush1.msra.mxu0 0.0
  %2065 = vmatprep.subr.mxu0 0.0
  %2066 = vmatpush1.msra.mxu0 0.0
  %2067 = vmatprep.subr.mxu0 0.0
  %2068 = vmatpush1.msra.mxu0 0.0
  %2069 = vmatprep.subr.mxu0 0.0
  %2070 = vmatpush1.msra.mxu0 0.0
  %2071 = vmatprep.subr.mxu0 0.0
  %2072 = vmatpush1.msra.mxu0 0.0
  %2073 = vmatprep.mubr.f32.mxu0 0.0
  %2074 = vmatmul.mubr.f32.gmra.mrb[0].mxu0 %v1554
  %v2075 = vpop.f32.mrb[0].mxu0
  %v2076 = vadd.f32 %v2007, %v2075
  %v2077 = vpop.f32.mrb[0].mxu0
  %2078 = vmatprep.mubr.f32.mxu0 0.0
  %2079 = vmatmul.mubr.f32.gmra.mrb[0].mxu0 %v1557
  %v2080 = vpop.f32.mrb[0].mxu0
  %v2081 = vadd.f32 %v2007, %v2080
  %v2082 = vpop.f32.mrb[0].mxu0
  %2083 = vdwg.mxu0
  %2088 = vrot.lane.b32.xlu0 %v1527, 112
  %v2089 = vpop.permute.xlu0 %2088
  %2090 = vrot.lane.b32.xlu0 %v1528, 112
  %v2091 = vpop.permute.xlu0 %2090
  %2092 = vrot.lane.b32.xlu0 %v1529, 112
  %v2093 = vpop.permute.xlu0 %2092
  %2094 = vrot.lane.b32.xlu0 %v1530, 112
  %v2095 = vpop.permute.xlu0 %2094
  %2100 = vrot.lane.b32.xlu0 %v1638, 112
  %v2101 = vpop.permute.xlu0 %2100
  %2103 = vmatprep.subr.mxu0 0.0
  %2104 = vmatpush1.msra.mxu0 %v2089
  %2105 = vmatprep.subr.mxu0 0.0
  %2106 = vmatpush1.msra.mxu0 %v2091
  %2107 = vmatprep.subr.mxu0 0.0
  %2108 = vmatpush1.msra.mxu0 %v2093
  %2109 = vmatprep.subr.mxu0 0.0
  %2110 = vmatpush1.msra.mxu0 %v2095
  %2111 = vmatprep.subr.mxu0 0.0
  %2112 = vmatpush1.msra.mxu0 0.0
  %2113 = vmatprep.subr.mxu0 0.0
  %2114 = vmatpush1.msra.mxu0 0.0
  %2115 = vmatprep.subr.mxu0 0.0
  %2116 = vmatpush1.msra.mxu0 0.0
  %2117 = vmatprep.subr.mxu0 0.0
  %2118 = vmatpush1.msra.mxu0 0.0
  %2119 = vmatprep.subr.mxu0 0.0
  %2120 = vmatpush1.msra.mxu0 0.0
  %2121 = vmatprep.subr.mxu0 0.0
  %2122 = vmatpush1.msra.mxu0 0.0
  %2123 = vmatprep.subr.mxu0 0.0
  %2124 = vmatpush1.msra.mxu0 0.0
  %2125 = vmatprep.subr.mxu0 0.0
  %2126 = vmatpush1.msra.mxu0 0.0
  %2127 = vmatprep.subr.mxu0 0.0
  %2128 = vmatpush1.msra.mxu0 0.0
  %2129 = vmatprep.subr.mxu0 0.0
  %2130 = vmatpush1.msra.mxu0 0.0
  %2131 = vmatprep.subr.mxu0 0.0
  %2132 = vmatpush1.msra.mxu0 0.0
  %2133 = vmatprep.subr.mxu0 0.0
  %2134 = vmatpush1.msra.mxu0 0.0
  %2135 = vmatprep.subr.mxu0 0.0
  %2136 = vmatpush1.msra.mxu0 0.0
  %2137 = vmatprep.subr.mxu0 0.0
  %2138 = vmatpush1.msra.mxu0 0.0
  %2139 = vmatprep.subr.mxu0 0.0
  %2140 = vmatpush1.msra.mxu0 0.0
  %2141 = vmatprep.subr.mxu0 0.0
  %2142 = vmatpush1.msra.mxu0 0.0
  %2143 = vmatprep.subr.mxu0 0.0
  %2144 = vmatpush1.msra.mxu0 0.0
  %2145 = vmatprep.subr.mxu0 0.0
  %2146 = vmatpush1.msra.mxu0 0.0
  %2147 = vmatprep.subr.mxu0 0.0
  %2148 = vmatpush1.msra.mxu0 0.0
  %2149 = vmatprep.subr.mxu0 0.0
  %2150 = vmatpush1.msra.mxu0 0.0
  %2151 = vmatprep.subr.mxu0 0.0
  %2152 = vmatpush1.msra.mxu0 0.0
  %2153 = vmatprep.subr.mxu0 0.0
  %2154 = vmatpush1.msra.mxu0 0.0
  %2155 = vmatprep.subr.mxu0 0.0
  %2156 = vmatpush1.msra.mxu0 0.0
  %2157 = vmatprep.subr.mxu0 0.0
  %2158 = vmatpush1.msra.mxu0 0.0
  %2159 = vmatprep.subr.mxu0 0.0
  %2160 = vmatpush1.msra.mxu0 0.0
  %2161 = vmatprep.subr.mxu0 0.0
  %2162 = vmatpush1.msra.mxu0 0.0
  %2163 = vmatprep.subr.mxu0 0.0
  %2164 = vmatpush1.msra.mxu0 0.0
  %2165 = vmatprep.subr.mxu0 0.0
  %2166 = vmatpush1.msra.mxu0 0.0
  %2167 = vmatprep.mubr.f32.mxu0 0.0
  %2168 = vmatmul.mubr.f32.gmra.mrb[0].mxu0 %v1554
  %v2169 = vpop.f32.mrb[0].mxu0
  %v2170 = vadd.f32 %v2101, %v2169
  %v2171 = vpop.f32.mrb[0].mxu0
  %2172 = vmatprep.mubr.f32.mxu0 0.0
  %2173 = vmatmul.mubr.f32.gmra.mrb[0].mxu0 %v1557
  %v2174 = vpop.f32.mrb[0].mxu0
  %v2175 = vadd.f32 %v2101, %v2174
  %v2176 = vpop.f32.mrb[0].mxu0
  %2177 = vdwg.mxu0
  %2182 = vrot.lane.b32.xlu0 %v1532, 112
  %v2183 = vpop.permute.xlu0 %2182
  %2184 = vrot.lane.b32.xlu0 %v1533, 112
  %v2185 = vpop.permute.xlu0 %2184
  %2186 = vrot.lane.b32.xlu0 %v1534, 112
  %v2187 = vpop.permute.xlu0 %2186
  %2188 = vrot.lane.b32.xlu0 %v1535, 112
  %v2189 = vpop.permute.xlu0 %2188
  %2194 = vrot.lane.b32.xlu0 %v1719, 112
  %v2195 = vpop.permute.xlu0 %2194
  %2197 = vmatprep.subr.mxu0 0.0
  %2198 = vmatpush1.msra.mxu0 %v2183
  %2199 = vmatprep.subr.mxu0 0.0
  %2200 = vmatpush1.msra.mxu0 %v2185
  %2201 = vmatprep.subr.mxu0 0.0
  %2202 = vmatpush1.msra.mxu0 %v2187
  %2203 = vmatprep.subr.mxu0 0.0
  %2204 = vmatpush1.msra.mxu0 %v2189
  %2205 = vmatprep.subr.mxu0 0.0
  %2206 = vmatpush1.msra.mxu0 0.0
  %2207 = vmatprep.subr.mxu0 0.0
  %2208 = vmatpush1.msra.mxu0 0.0
  %2209 = vmatprep.subr.mxu0 0.0
  %2210 = vmatpush1.msra.mxu0 0.0
  %2211 = vmatprep.subr.mxu0 0.0
  %2212 = vmatpush1.msra.mxu0 0.0
  %2213 = vmatprep.subr.mxu0 0.0
  %2214 = vmatpush1.msra.mxu0 0.0
  %2215 = vmatprep.subr.mxu0 0.0
  %2216 = vmatpush1.msra.mxu0 0.0
  %2217 = vmatprep.subr.mxu0 0.0
  %2218 = vmatpush1.msra.mxu0 0.0
  %2219 = vmatprep.subr.mxu0 0.0
  %2220 = vmatpush1.msra.mxu0 0.0
  %2221 = vmatprep.subr.mxu0 0.0
  %2222 = vmatpush1.msra.mxu0 0.0
  %2223 = vmatprep.subr.mxu0 0.0
  %2224 = vmatpush1.msra.mxu0 0.0
  %2225 = vmatprep.subr.mxu0 0.0
  %2226 = vmatpush1.msra.mxu0 0.0
  %2227 = vmatprep.subr.mxu0 0.0
  %2228 = vmatpush1.msra.mxu0 0.0
  %2229 = vmatprep.subr.mxu0 0.0
  %2230 = vmatpush1.msra.mxu0 0.0
  %2231 = vmatprep.subr.mxu0 0.0
  %2232 = vmatpush1.msra.mxu0 0.0
  %2233 = vmatprep.subr.mxu0 0.0
  %2234 = vmatpush1.msra.mxu0 0.0
  %2235 = vmatprep.subr.mxu0 0.0
  %2236 = vmatpush1.msra.mxu0 0.0
  %2237 = vmatprep.subr.mxu0 0.0
  %2238 = vmatpush1.msra.mxu0 0.0
  %2239 = vmatprep.subr.mxu0 0.0
  %2240 = vmatpush1.msra.mxu0 0.0
  %2241 = vmatprep.subr.mxu0 0.0
  %2242 = vmatpush1.msra.mxu0 0.0
  %2243 = vmatprep.subr.mxu0 0.0
  %2244 = vmatpush1.msra.mxu0 0.0
  %2245 = vmatprep.subr.mxu0 0.0
  %2246 = vmatpush1.msra.mxu0 0.0
  %2247 = vmatprep.subr.mxu0 0.0
  %2248 = vmatpush1.msra.mxu0 0.0
  %2249 = vmatprep.subr.mxu0 0.0
  %2250 = vmatpush1.msra.mxu0 0.0
  %2251 = vmatprep.subr.mxu0 0.0
  %2252 = vmatpush1.msra.mxu0 0.0
  %2253 = vmatprep.subr.mxu0 0.0
  %2254 = vmatpush1.msra.mxu0 0.0
  %2255 = vmatprep.subr.mxu0 0.0
  %2256 = vmatpush1.msra.mxu0 0.0
  %2257 = vmatprep.subr.mxu0 0.0
  %2258 = vmatpush1.msra.mxu0 0.0
  %2259 = vmatprep.subr.mxu0 0.0
  %2260 = vmatpush1.msra.mxu0 0.0
  %2261 = vmatprep.mubr.f32.mxu0 0.0
  %2262 = vmatmul.mubr.f32.gmra.mrb[0].mxu0 %v1554
  %v2263 = vpop.f32.mrb[0].mxu0
  %v2264 = vadd.f32 %v2195, %v2263
  %v2265 = vpop.f32.mrb[0].mxu0
  %2266 = vmatprep.mubr.f32.mxu0 0.0
  %2267 = vmatmul.mubr.f32.gmra.mrb[0].mxu0 %v1557
  %v2268 = vpop.f32.mrb[0].mxu0
  %v2269 = vadd.f32 %v2195, %v2268
  %v2270 = vpop.f32.mrb[0].mxu0
  %2271 = vdwg.mxu0
  %v2273 = vsel %vm391, %v2076, 0
  %v2276 = vsel %vm391, %v2081, 0
  %v2279 = vsel %vm391, %v2170, 0
  %v2282 = vsel %vm391, %v2175, 0
  %2284 = vmatprep.subr.mxu0 0.0
  %2285 = vmatpush1.xpose.msra.mxu0 %v2279
  %2286 = vmatprep.subr.mxu0 0.0
  %2287 = vmatpush1.xpose.msra.mxu0 %v2282
  %2288 = vmatprep.subr.mxu0 0.0
  %2289 = vmatpush1.xpose.msra.mxu0 0.0
  %2290 = vmatprep.subr.mxu0 0.0
  %2291 = vmatpush1.xpose.msra.mxu0 0.0
  %2292 = vmatprep.subr.mxu0 0.0
  %2293 = vmatpush1.xpose.msra.mxu0 0.0
  %2294 = vmatprep.subr.mxu0 0.0
  %2295 = vmatpush1.xpose.msra.mxu0 0.0
  %2296 = vmatprep.subr.mxu0 0.0
  %2297 = vmatpush1.xpose.msra.mxu0 0.0
  %2298 = vmatprep.subr.mxu0 0.0
  %2299 = vmatpush1.xpose.msra.mxu0 0.0
  %2300 = vmatprep.subr.mxu0 0.0
  %2301 = vmatpush1.xpose.msra.mxu0 0.0
  %2302 = vmatprep.subr.mxu0 0.0
  %2303 = vmatpush1.xpose.msra.mxu0 0.0
  %2304 = vmatprep.subr.mxu0 0.0
  %2305 = vmatpush1.xpose.msra.mxu0 0.0
  %2306 = vmatprep.subr.mxu0 0.0
  %2307 = vmatpush1.xpose.msra.mxu0 0.0
  %2308 = vmatprep.subr.mxu0 0.0
  %2309 = vmatpush1.xpose.msra.mxu0 0.0
  %2310 = vmatprep.subr.mxu0 0.0
  %2311 = vmatpush1.xpose.msra.mxu0 0.0
  %2312 = vmatprep.subr.mxu0 0.0
  %2313 = vmatpush1.xpose.msra.mxu0 0.0
  %2314 = vmatprep.subr.mxu0 0.0
  %2315 = vmatpush1.xpose.msra.mxu0 0.0
  %2316 = vmatprep.subr.mxu0 0.0
  %2317 = vmatpush1.xpose.msra.mxu0 0.0
  %2318 = vmatprep.subr.mxu0 0.0
  %2319 = vmatpush1.xpose.msra.mxu0 0.0
  %2320 = vmatprep.subr.mxu0 0.0
  %2321 = vmatpush1.xpose.msra.mxu0 0.0
  %2322 = vmatprep.subr.mxu0 0.0
  %2323 = vmatpush1.xpose.msra.mxu0 0.0
  %2324 = vmatprep.subr.mxu0 0.0
  %2325 = vmatpush1.xpose.msra.mxu0 0.0
  %2326 = vmatprep.subr.mxu0 0.0
  %2327 = vmatpush1.xpose.msra.mxu0 0.0
  %2328 = vmatprep.subr.mxu0 0.0
  %2329 = vmatpush1.xpose.msra.mxu0 0.0
  %2330 = vmatprep.subr.mxu0 0.0
  %2331 = vmatpush1.xpose.msra.mxu0 0.0
  %2332 = vmatprep.subr.mxu0 0.0
  %2333 = vmatpush1.xpose.msra.mxu0 0.0
  %2334 = vmatprep.subr.mxu0 0.0
  %2335 = vmatpush1.xpose.msra.mxu0 0.0
  %2336 = vmatprep.subr.mxu0 0.0
  %2337 = vmatpush1.xpose.msra.mxu0 0.0
  %2338 = vmatprep.subr.mxu0 0.0
  %2339 = vmatpush1.xpose.msra.mxu0 0.0
  %2340 = vmatprep.subr.mxu0 0.0
  %2341 = vmatpush1.xpose.msra.mxu0 0.0
  %2342 = vmatprep.subr.mxu0 0.0
  %2343 = vmatpush1.xpose.msra.mxu0 0.0
  %2344 = vmatprep.subr.mxu0 0.0
  %2345 = vmatpush1.xpose.msra.mxu0 0.0
  %2346 = vmatprep.subr.mxu0 0.0
  %2347 = vmatpush1.xpose.msra.mxu0 0.0
  %2348 = vmatprep.mubr.f32.mxu0 0.0
  %2349 = vmatmul.mubr.f32.gmra.mrb[0].mxu0 %v2273
  %v2350 = vpop.f32.mrb[0].mxu0
  %v2351 = vadd.f32 0.0, %v2350
  %v2352 = vpop.f32.mrb[0].mxu0
  %2353 = vmatprep.mubr.f32.mxu0 0.0
  %2354 = vmatmul.mubr.f32.gmra.mrb[0].mxu0 %v2276
  %v2355 = vpop.f32.mrb[0].mxu0
  %v2356 = vadd.f32 0.0, %v2355
  %v2357 = vpop.f32.mrb[0].mxu0
  %2358 = vdwg.mxu0
  %v2359 = vmul.f32 %v2351, 0.25
  %v2360 = vmul.f32 %v2356, 0.25
  %v2361 = vadd.f32 %v2359, %v75
  %v2362 = vadd.f32 %v2360, %v76
  %v2363 = vsel %vm391, %v2361, -inf
  %2364 = vmax.xlane.f32.xlu0 %v2363
  %v2365 = vpop.xlane.xlu0 %2364
  %v2366 = vsel %vm391, %v2362, -inf
  %2367 = vmax.xlane.f32.xlu0 %v2366
  %v2368 = vpop.xlane.xlu0 %2367
  %v2369 = vsub.f32 %v2361, %v2365
  %v2370 = vsub.f32 %v2362, %v2368
  %v2371 = vmul.f32 %v2369, 1.442695
  %v2372 = vpow.pop %v2371
  %v2373 = vmul.f32 %v2370, 1.442695
  %v2374 = vpow.pop %v2373
  %v2375 = vsel %vm391, %v2372, 0.0
  %2376 = vadd.xlane.f32.xlu0 %v2375
  %v2377 = vpop.xlane.xlu0 %2376
  %v2378 = vsel %vm391, %v2374, 0.0
  %2379 = vadd.xlane.f32.xlu0 %v2378
  %v2380 = vpop.xlane.xlu0 %2379
  %v2381 = vrcp.pop %v2377
  %v2382 = vrcp.pop %v2380
  %v2383 = vmul.f32 %v2372, %v2381
  %v2384 = vmul.f32 %v2374, %v2382
  %v2386 = vsel %vm391, %v2383, 0
  %v2389 = vsel %vm391, %v2384, 0
  %2391 = vmatprep.subr.mxu0 0.0
  %2392 = vmatpush1.msra.mxu0 %v2264
  %2393 = vmatprep.subr.mxu0 0.0
  %2394 = vmatpush1.msra.mxu0 %v2269
  %2395 = vmatprep.subr.mxu0 0.0
  %2396 = vmatpush1.msra.mxu0 0.0
  %2397 = vmatprep.subr.mxu0 0.0
  %2398 = vmatpush1.msra.mxu0 0.0
  %2399 = vmatprep.subr.mxu0 0.0
  %2400 = vmatpush1.msra.mxu0 0.0
  %2401 = vmatprep.subr.mxu0 0.0
  %2402 = vmatpush1.msra.mxu0 0.0
  %2403 = vmatprep.subr.mxu0 0.0
  %2404 = vmatpush1.msra.mxu0 0.0
  %2405 = vmatprep.subr.mxu0 0.0
  %2406 = vmatpush1.msra.mxu0 0.0
  %2407 = vmatprep.subr.mxu0 0.0
  %2408 = vmatpush1.msra.mxu0 0.0
  %2409 = vmatprep.subr.mxu0 0.0
  %2410 = vmatpush1.msra.mxu0 0.0
  %2411 = vmatprep.subr.mxu0 0.0
  %2412 = vmatpush1.msra.mxu0 0.0
  %2413 = vmatprep.subr.mxu0 0.0
  %2414 = vmatpush1.msra.mxu0 0.0
  %2415 = vmatprep.subr.mxu0 0.0
  %2416 = vmatpush1.msra.mxu0 0.0
  %2417 = vmatprep.subr.mxu0 0.0
  %2418 = vmatpush1.msra.mxu0 0.0
  %2419 = vmatprep.subr.mxu0 0.0
  %2420 = vmatpush1.msra.mxu0 0.0
  %2421 = vmatprep.subr.mxu0 0.0
  %2422 = vmatpush1.msra.mxu0 0.0
  %2423 = vmatprep.subr.mxu0 0.0
  %2424 = vmatpush1.msra.mxu0 0.0
  %2425 = vmatprep.subr.mxu0 0.0
  %2426 = vmatpush1.msra.mxu0 0.0
  %2427 = vmatprep.subr.mxu0 0.0
  %2428 = vmatpush1.msra.mxu0 0.0
  %2429 = vmatprep.subr.mxu0 0.0
  %2430 = vmatpush1.msra.mxu0 0.0
  %2431 = vmatprep.subr.mxu0 0.0
  %2432 = vmatpush1.msra.mxu0 0.0
  %2433 = vmatprep.subr.mxu0 0.0
  %2434 = vmatpush1.msra.mxu0 0.0
  %2435 = vmatprep.subr.mxu0 0.0
  %2436 = vmatpush1.msra.mxu0 0.0
  %2437 = vmatprep.subr.mxu0 0.0
  %2438 = vmatpush1.msra.mxu0 0.0
  %2439 = vmatprep.subr.mxu0 0.0
  %2440 = vmatpush1.msra.mxu0 0.0
  %2441 = vmatprep.subr.mxu0 0.0
  %2442 = vmatpush1.msra.mxu0 0.0
  %2443 = vmatprep.subr.mxu0 0.0
  %2444 = vmatpush1.msra.mxu0 0.0
  %2445 = vmatprep.subr.mxu0 0.0
  %2446 = vmatpush1.msra.mxu0 0.0
  %2447 = vmatprep.subr.mxu0 0.0
  %2448 = vmatpush1.msra.mxu0 0.0
  %2449 = vmatprep.subr.mxu0 0.0
  %2450 = vmatpush1.msra.mxu0 0.0
  %2451 = vmatprep.subr.mxu0 0.0
  %2452 = vmatpush1.msra.mxu0 0.0
  %2453 = vmatprep.subr.mxu0 0.0
  %2454 = vmatpush1.msra.mxu0 0.0
  %2455 = vmatprep.mubr.f32.mxu0 0.0
  %2456 = vmatmul.mubr.f32.gmra.mrb[0].mxu0 %v2386
  %v2457 = vpop.f32.mrb[0].mxu0
  %v2458 = vadd.f32 0.0, %v2457
  %v2459 = vpop.f32.mrb[0].mxu0
  %2460 = vmatprep.mubr.f32.mxu0 0.0
  %2461 = vmatmul.mubr.f32.gmra.mrb[0].mxu0 %v2389
  %v2462 = vpop.f32.mrb[0].mxu0
  %v2463 = vadd.f32 0.0, %v2462
  %v2464 = vpop.f32.mrb[0].mxu0
  %2465 = vdwg.mxu0
  %v2467 = vsel %vm391, %v2458, 0
  %v2470 = vsel %vm391, %v2463, 0
  %2472 = vmatprep.subr.mxu0 0.0
  %2473 = vmatpush1.msra.mxu0 %v1539
  %2474 = vmatprep.subr.mxu0 0.0
  %2475 = vmatpush1.msra.mxu0 %v1540
  %2476 = vmatprep.subr.mxu0 0.0
  %2477 = vmatpush1.msra.mxu0 0.0
  %2478 = vmatprep.subr.mxu0 0.0
  %2479 = vmatpush1.msra.mxu0 0.0
  %2480 = vmatprep.subr.mxu0 0.0
  %2481 = vmatpush1.msra.mxu0 0.0
  %2482 = vmatprep.subr.mxu0 0.0
  %2483 = vmatpush1.msra.mxu0 0.0
  %2484 = vmatprep.subr.mxu0 0.0
  %2485 = vmatpush1.msra.mxu0 0.0
  %2486 = vmatprep.subr.mxu0 0.0
  %2487 = vmatpush1.msra.mxu0 0.0
  %2488 = vmatprep.subr.mxu0 0.0
  %2489 = vmatpush1.msra.mxu0 0.0
  %2490 = vmatprep.subr.mxu0 0.0
  %2491 = vmatpush1.msra.mxu0 0.0
  %2492 = vmatprep.subr.mxu0 0.0
  %2493 = vmatpush1.msra.mxu0 0.0
  %2494 = vmatprep.subr.mxu0 0.0
  %2495 = vmatpush1.msra.mxu0 0.0
  %2496 = vmatprep.subr.mxu0 0.0
  %2497 = vmatpush1.msra.mxu0 0.0
  %2498 = vmatprep.subr.mxu0 0.0
  %2499 = vmatpush1.msra.mxu0 0.0
  %2500 = vmatprep.subr.mxu0 0.0
  %2501 = vmatpush1.msra.mxu0 0.0
  %2502 = vmatprep.subr.mxu0 0.0
  %2503 = vmatpush1.msra.mxu0 0.0
  %2504 = vmatprep.subr.mxu0 0.0
  %2505 = vmatpush1.msra.mxu0 0.0
  %2506 = vmatprep.subr.mxu0 0.0
  %2507 = vmatpush1.msra.mxu0 0.0
  %2508 = vmatprep.subr.mxu0 0.0
  %2509 = vmatpush1.msra.mxu0 0.0
  %2510 = vmatprep.subr.mxu0 0.0
  %2511 = vmatpush1.msra.mxu0 0.0
  %2512 = vmatprep.subr.mxu0 0.0
  %2513 = vmatpush1.msra.mxu0 0.0
  %2514 = vmatprep.subr.mxu0 0.0
  %2515 = vmatpush1.msra.mxu0 0.0
  %2516 = vmatprep.subr.mxu0 0.0
  %2517 = vmatpush1.msra.mxu0 0.0
  %2518 = vmatprep.subr.mxu0 0.0
  %2519 = vmatpush1.msra.mxu0 0.0
  %2520 = vmatprep.subr.mxu0 0.0
  %2521 = vmatpush1.msra.mxu0 0.0
  %2522 = vmatprep.subr.mxu0 0.0
  %2523 = vmatpush1.msra.mxu0 0.0
  %2524 = vmatprep.subr.mxu0 0.0
  %2525 = vmatpush1.msra.mxu0 0.0
  %2526 = vmatprep.subr.mxu0 0.0
  %2527 = vmatpush1.msra.mxu0 0.0
  %2528 = vmatprep.subr.mxu0 0.0
  %2529 = vmatpush1.msra.mxu0 0.0
  %2530 = vmatprep.subr.mxu0 0.0
  %2531 = vmatpush1.msra.mxu0 0.0
  %2532 = vmatprep.subr.mxu0 0.0
  %2533 = vmatpush1.msra.mxu0 0.0
  %2534 = vmatprep.subr.mxu0 0.0
  %2535 = vmatpush1.msra.mxu0 0.0
  %2536 = vmatprep.mubr.f32.mxu0 0.0
  %2537 = vmatmul.mubr.f32.gmra.mrb[0].mxu0 %v2467
  %v2538 = vpop.f32.mrb[0].mxu0
  %v2539 = vadd.f32 0.0, %v2538
  %v2540 = vpop.f32.mrb[0].mxu0
  %2541 = vmatprep.mubr.f32.mxu0 0.0
  %2542 = vmatmul.mubr.f32.gmra.mrb[0].mxu0 %v2470
  %v2543 = vpop.f32.mrb[0].mxu0
  %v2544 = vadd.f32 0.0, %v2543
  %v2545 = vpop.f32.mrb[0].mxu0
  %2546 = vdwg.mxu0
  %v2548 = vsel %vm391, %v1982, 0
  %v2551 = vsel %vm391, %v1987, 0
  %2553 = vmatprep.subr.mxu0 0.0
  %2554 = vmatpush1.msra.mxu0 %v1537
  %2555 = vmatprep.subr.mxu0 0.0
  %2556 = vmatpush1.msra.mxu0 %v1538
  %2557 = vmatprep.subr.mxu0 0.0
  %2558 = vmatpush1.msra.mxu0 0.0
  %2559 = vmatprep.subr.mxu0 0.0
  %2560 = vmatpush1.msra.mxu0 0.0
  %2561 = vmatprep.subr.mxu0 0.0
  %2562 = vmatpush1.msra.mxu0 0.0
  %2563 = vmatprep.subr.mxu0 0.0
  %2564 = vmatpush1.msra.mxu0 0.0
  %2565 = vmatprep.subr.mxu0 0.0
  %2566 = vmatpush1.msra.mxu0 0.0
  %2567 = vmatprep.subr.mxu0 0.0
  %2568 = vmatpush1.msra.mxu0 0.0
  %2569 = vmatprep.subr.mxu0 0.0
  %2570 = vmatpush1.msra.mxu0 0.0
  %2571 = vmatprep.subr.mxu0 0.0
  %2572 = vmatpush1.msra.mxu0 0.0
  %2573 = vmatprep.subr.mxu0 0.0
  %2574 = vmatpush1.msra.mxu0 0.0
  %2575 = vmatprep.subr.mxu0 0.0
  %2576 = vmatpush1.msra.mxu0 0.0
  %2577 = vmatprep.subr.mxu0 0.0
  %2578 = vmatpush1.msra.mxu0 0.0
  %2579 = vmatprep.subr.mxu0 0.0
  %2580 = vmatpush1.msra.mxu0 0.0
  %2581 = vmatprep.subr.mxu0 0.0
  %2582 = vmatpush1.msra.mxu0 0.0
  %2583 = vmatprep.subr.mxu0 0.0
  %2584 = vmatpush1.msra.mxu0 0.0
  %2585 = vmatprep.subr.mxu0 0.0
  %2586 = vmatpush1.msra.mxu0 0.0
  %2587 = vmatprep.subr.mxu0 0.0
  %2588 = vmatpush1.msra.mxu0 0.0
  %2589 = vmatprep.subr.mxu0 0.0
  %2590 = vmatpush1.msra.mxu0 0.0
  %2591 = vmatprep.subr.mxu0 0.0
  %2592 = vmatpush1.msra.mxu0 0.0
  %2593 = vmatprep.subr.mxu0 0.0
  %2594 = vmatpush1.msra.mxu0 0.0
  %2595 = vmatprep.subr.mxu0 0.0
  %2596 = vmatpush1.msra.mxu0 0.0
  %2597 = vmatprep.subr.mxu0 0.0
  %2598 = vmatpush1.msra.mxu0 0.0
  %2599 = vmatprep.subr.mxu0 0.0
  %2600 = vmatpush1.msra.mxu0 0.0
  %2601 = vmatprep.subr.mxu0 0.0
  %2602 = vmatpush1.msra.mxu0 0.0
  %2603 = vmatprep.subr.mxu0 0.0
  %2604 = vmatpush1.msra.mxu0 0.0
  %2605 = vmatprep.subr.mxu0 0.0
  %2606 = vmatpush1.msra.mxu0 0.0
  %2607 = vmatprep.subr.mxu0 0.0
  %2608 = vmatpush1.msra.mxu0 0.0
  %2609 = vmatprep.subr.mxu0 0.0
  %2610 = vmatpush1.msra.mxu0 0.0
  %2611 = vmatprep.subr.mxu0 0.0
  %2612 = vmatpush1.msra.mxu0 0.0
  %2613 = vmatprep.subr.mxu0 0.0
  %2614 = vmatpush1.msra.mxu0 0.0
  %2615 = vmatprep.subr.mxu0 0.0
  %2616 = vmatpush1.msra.mxu0 0.0
  %2617 = vmatprep.mubr.f32.mxu0 0.0
  %2618 = vmatmul.mubr.f32.gmra.mrb[0].mxu0 %v2548
  %v2619 = vpop.f32.mrb[0].mxu0
  %v2620 = vadd.f32 %v2539, %v2619
  %v2621 = vpop.f32.mrb[0].mxu0
  %2622 = vmatprep.mubr.f32.mxu0 0.0
  %2623 = vmatmul.mubr.f32.gmra.mrb[0].mxu0 %v2551
  %v2624 = vpop.f32.mrb[0].mxu0
  %v2625 = vadd.f32 %v2544, %v2624
  %v2626 = vpop.f32.mrb[0].mxu0
  %2627 = vdwg.mxu0
  %v2628 = vadd.f32 %v1473, %v2620
  %v2629 = vadd.f32 %v1474, %v2625
  %s2630 = scalar_lea.vmem %s11, 1
  %v2631 = vld [vmem:[%s2630] sm:$0x1]
  %v2633 = vlaneseq
  %v2634 = vshrl.u32 %v2633, 7
  %v2635 = vsub.s32 0, %v2634
  %v2636 = vrot.slane %v2631, %v2635
  %v2638 = vadd.f32 %v2628, %v2636
  %v2639 = vadd.f32 %v2629, %v2636
  %s2640 = scalar_lea.vmem %s12, 1
  %v2641 = vld [vmem:[%s2640] sm:$0x1]
  %s2642 = scalar_lea.vmem %s13, 1
  %v2643 = vld [vmem:[%s2642] sm:$0x1]
  %v2644 = vsel %vm79, %v2638, 0.0
  %2645 = vadd.xlane.f32.xlu0 %v2644
  %v2646 = vpop.xlane.xlu0 %2645
  %v2647 = vsel %vm79, %v2639, 0.0
  %2648 = vadd.xlane.f32.xlu0 %v2647
  %v2649 = vpop.xlane.xlu0 %2648
  %v2650 = vmul.f32 %v2646, %v86
  %v2651 = vmul.f32 %v2649, %v86
  %v2652 = vsub.f32 %v2638, %v2650
  %v2653 = vsub.f32 %v2639, %v2651
  %v2654 = vmul.f32 %v2652, %v2652
  %v2655 = vmul.f32 %v2653, %v2653
  %v2656 = vsel %vm79, %v2654, 0.0
  %2657 = vadd.xlane.f32.xlu0 %v2656
  %v2658 = vpop.xlane.xlu0 %2657
  %v2659 = vsel %vm79, %v2655, 0.0
  %2660 = vadd.xlane.f32.xlu0 %v2659
  %v2661 = vpop.xlane.xlu0 %2660
  %v2662 = vmul.f32 %v2658, %v86
  %v2663 = vmul.f32 %v2661, %v86
  %v2664 = vadd.f32 %v2662, 1e-05
  %v2665 = vadd.f32 %v2663, 1e-05
  %v2666 = vrsqrt.pop %v2664
  %v2667 = vrsqrt.pop %v2665
  %v2668 = vmul.f32 %v2652, %v2666
  %v2669 = vmul.f32 %v2653, %v2667
  %v2671 = vlaneseq
  %v2672 = vshrl.u32 %v2671, 7
  %v2673 = vsub.s32 0, %v2672
  %v2674 = vrot.slane %v2641, %v2673
  %v2676 = vmul.f32 %v2668, %v2674
  %v2677 = vmul.f32 %v2669, %v2674
  %v2679 = vlaneseq
  %v2680 = vshrl.u32 %v2679, 7
  %v2681 = vsub.s32 0, %v2680
  %v2682 = vrot.slane %v2643, %v2681
  %v2684 = vadd.f32 %v2676, %v2682
  %v2685 = vadd.f32 %v2677, %v2682
  %s2686 = scalar_lea.vmem %s14, 32
  %v2687 = vld [vmem:[%s2686] sm:$0xff]
  %v2688 = vld [vmem:[%s2686 + $0x8] sm:$0xff]
  %v2689 = vld [vmem:[%s2686 + $0x10] sm:$0xff]
  %v2690 = vld [vmem:[%s2686 + $0x18] sm:$0xff]
  %s2691 = scalar_lea.vmem %s15, 1
  %v2692 = vld [vmem:[%s2691] sm:$0x1]
  %v2694 = vlaneseq
  %v2695 = vshrl.u32 %v2694, 7
  %v2696 = vsub.s32 0, %v2695
  %v2697 = vrot.slane %v2692, %v2696
  %v2700 = vsel %vm79, %v2684, 0
  %v2703 = vsel %vm79, %v2685, 0
  %2705 = vmatprep.subr.mxu0 0.0
  %2706 = vmatpush1.msra.mxu0 %v2687
  %2707 = vmatprep.subr.mxu0 0.0
  %2708 = vmatpush1.msra.mxu0 %v2688
  %2709 = vmatprep.subr.mxu0 0.0
  %2710 = vmatpush1.msra.mxu0 %v2689
  %2711 = vmatprep.subr.mxu0 0.0
  %2712 = vmatpush1.msra.mxu0 %v2690
  %2713 = vmatprep.subr.mxu0 0.0
  %2714 = vmatpush1.msra.mxu0 0.0
  %2715 = vmatprep.subr.mxu0 0.0
  %2716 = vmatpush1.msra.mxu0 0.0
  %2717 = vmatprep.subr.mxu0 0.0
  %2718 = vmatpush1.msra.mxu0 0.0
  %2719 = vmatprep.subr.mxu0 0.0
  %2720 = vmatpush1.msra.mxu0 0.0
  %2721 = vmatprep.subr.mxu0 0.0
  %2722 = vmatpush1.msra.mxu0 0.0
  %2723 = vmatprep.subr.mxu0 0.0
  %2724 = vmatpush1.msra.mxu0 0.0
  %2725 = vmatprep.subr.mxu0 0.0
  %2726 = vmatpush1.msra.mxu0 0.0
  %2727 = vmatprep.subr.mxu0 0.0
  %2728 = vmatpush1.msra.mxu0 0.0
  %2729 = vmatprep.subr.mxu0 0.0
  %2730 = vmatpush1.msra.mxu0 0.0
  %2731 = vmatprep.subr.mxu0 0.0
  %2732 = vmatpush1.msra.mxu0 0.0
  %2733 = vmatprep.subr.mxu0 0.0
  %2734 = vmatpush1.msra.mxu0 0.0
  %2735 = vmatprep.subr.mxu0 0.0
  %2736 = vmatpush1.msra.mxu0 0.0
  %2737 = vmatprep.subr.mxu0 0.0
  %2738 = vmatpush1.msra.mxu0 0.0
  %2739 = vmatprep.subr.mxu0 0.0
  %2740 = vmatpush1.msra.mxu0 0.0
  %2741 = vmatprep.subr.mxu0 0.0
  %2742 = vmatpush1.msra.mxu0 0.0
  %2743 = vmatprep.subr.mxu0 0.0
  %2744 = vmatpush1.msra.mxu0 0.0
  %2745 = vmatprep.subr.mxu0 0.0
  %2746 = vmatpush1.msra.mxu0 0.0
  %2747 = vmatprep.subr.mxu0 0.0
  %2748 = vmatpush1.msra.mxu0 0.0
  %2749 = vmatprep.subr.mxu0 0.0
  %2750 = vmatpush1.msra.mxu0 0.0
  %2751 = vmatprep.subr.mxu0 0.0
  %2752 = vmatpush1.msra.mxu0 0.0
  %2753 = vmatprep.subr.mxu0 0.0
  %2754 = vmatpush1.msra.mxu0 0.0
  %2755 = vmatprep.subr.mxu0 0.0
  %2756 = vmatpush1.msra.mxu0 0.0
  %2757 = vmatprep.subr.mxu0 0.0
  %2758 = vmatpush1.msra.mxu0 0.0
  %2759 = vmatprep.subr.mxu0 0.0
  %2760 = vmatpush1.msra.mxu0 0.0
  %2761 = vmatprep.subr.mxu0 0.0
  %2762 = vmatpush1.msra.mxu0 0.0
  %2763 = vmatprep.subr.mxu0 0.0
  %2764 = vmatpush1.msra.mxu0 0.0
  %2765 = vmatprep.subr.mxu0 0.0
  %2766 = vmatpush1.msra.mxu0 0.0
  %2767 = vmatprep.subr.mxu0 0.0
  %2768 = vmatpush1.msra.mxu0 0.0
  %2769 = vmatprep.mubr.f32.mxu0 0.0
  %2770 = vmatmul.mubr.f32.gmra.mrb[0].mxu0 %v2700
  %v2771 = vpop.f32.mrb[0].mxu0
  %v2772 = vadd.f32 %v2697, %v2771
  %v2773 = vpop.f32.mrb[0].mxu0
  %2774 = vmatprep.mubr.f32.mxu0 0.0
  %2775 = vmatmul.mubr.f32.gmra.mrb[0].mxu0 %v2703
  %v2776 = vpop.f32.mrb[0].mxu0
  %v2777 = vadd.f32 %v2697, %v2776
  %v2778 = vpop.f32.mrb[0].mxu0
  %2779 = vdwg.mxu0
  %v2780 = vmax.f32 %v2772, 0.0
  %v2781 = vmax.f32 %v2777, 0.0
  %s2782 = scalar_lea.vmem %s16, 128
  %v2783 = vld [vmem:[%s2782] sm:$0xff]
  %v2784 = vld [vmem:[%s2782 + $0x8] sm:$0xff]
  %v2785 = vld [vmem:[%s2782 + $0x10] sm:$0xff]
  %v2786 = vld [vmem:[%s2782 + $0x18] sm:$0xff]
  %v2787 = vld [vmem:[%s2782 + $0x20] sm:$0xff]
  %v2788 = vld [vmem:[%s2782 + $0x28] sm:$0xff]
  %v2789 = vld [vmem:[%s2782 + $0x30] sm:$0xff]
  %v2790 = vld [vmem:[%s2782 + $0x38] sm:$0xff]
  %v2791 = vld [vmem:[%s2782 + $0x40] sm:$0xff]
  %v2792 = vld [vmem:[%s2782 + $0x48] sm:$0xff]
  %v2793 = vld [vmem:[%s2782 + $0x50] sm:$0xff]
  %v2794 = vld [vmem:[%s2782 + $0x58] sm:$0xff]
  %v2795 = vld [vmem:[%s2782 + $0x60] sm:$0xff]
  %v2796 = vld [vmem:[%s2782 + $0x68] sm:$0xff]
  %v2797 = vld [vmem:[%s2782 + $0x70] sm:$0xff]
  %v2798 = vld [vmem:[%s2782 + $0x78] sm:$0xff]
  %2799 = vmatprep.subr.mxu0 0.0
  %2800 = vmatpush1.msra.mxu0 %v2783
  %2801 = vmatprep.subr.mxu0 0.0
  %2802 = vmatpush1.msra.mxu0 %v2784
  %2803 = vmatprep.subr.mxu0 0.0
  %2804 = vmatpush1.msra.mxu0 %v2785
  %2805 = vmatprep.subr.mxu0 0.0
  %2806 = vmatpush1.msra.mxu0 %v2786
  %2807 = vmatprep.subr.mxu0 0.0
  %2808 = vmatpush1.msra.mxu0 %v2787
  %2809 = vmatprep.subr.mxu0 0.0
  %2810 = vmatpush1.msra.mxu0 %v2788
  %2811 = vmatprep.subr.mxu0 0.0
  %2812 = vmatpush1.msra.mxu0 %v2789
  %2813 = vmatprep.subr.mxu0 0.0
  %2814 = vmatpush1.msra.mxu0 %v2790
  %2815 = vmatprep.subr.mxu0 0.0
  %2816 = vmatpush1.msra.mxu0 %v2791
  %2817 = vmatprep.subr.mxu0 0.0
  %2818 = vmatpush1.msra.mxu0 %v2792
  %2819 = vmatprep.subr.mxu0 0.0
  %2820 = vmatpush1.msra.mxu0 %v2793
  %2821 = vmatprep.subr.mxu0 0.0
  %2822 = vmatpush1.msra.mxu0 %v2794
  %2823 = vmatprep.subr.mxu0 0.0
  %2824 = vmatpush1.msra.mxu0 %v2795
  %2825 = vmatprep.subr.mxu0 0.0
  %2826 = vmatpush1.msra.mxu0 %v2796
  %2827 = vmatprep.subr.mxu0 0.0
  %2828 = vmatpush1.msra.mxu0 %v2797
  %2829 = vmatprep.subr.mxu0 0.0
  %2830 = vmatpush1.msra.mxu0 %v2798
  %2831 = vmatprep.subr.mxu0 0.0
  %2832 = vmatpush1.msra.mxu0 0.0
  %2833 = vmatprep.subr.mxu0 0.0
  %2834 = vmatpush1.msra.mxu0 0.0
  %2835 = vmatprep.subr.mxu0 0.0
  %2836 = vmatpush1.msra.mxu0 0.0
  %2837 = vmatprep.subr.mxu0 0.0
  %2838 = vmatpush1.msra.mxu0 0.0
  %2839 = vmatprep.subr.mxu0 0.0
  %2840 = vmatpush1.msra.mxu0 0.0
  %2841 = vmatprep.subr.mxu0 0.0
  %2842 = vmatpush1.msra.mxu0 0.0
  %2843 = vmatprep.subr.mxu0 0.0
  %2844 = vmatpush1.msra.mxu0 0.0
  %2845 = vmatprep.subr.mxu0 0.0
  %2846 = vmatpush1.msra.mxu0 0.0
  %2847 = vmatprep.subr.mxu0 0.0
  %2848 = vmatpush1.msra.mxu0 0.0
  %2849 = vmatprep.subr.mxu0 0.0
  %2850 = vmatpush1.msra.mxu0 0.0
  %2851 = vmatprep.subr.mxu0 0.0
  %2852 = vmatpush1.msra.mxu0 0.0
  %2853 = vmatprep.subr.mxu0 0.0
  %2854 = vmatpush1.msra.mxu0 0.0
  %2855 = vmatprep.subr.mxu0 0.0
  %2856 = vmatpush1.msra.mxu0 0.0
  %2857 = vmatprep.subr.mxu0 0.0
  %2858 = vmatpush1.msra.mxu0 0.0
  %2859 = vmatprep.subr.mxu0 0.0
  %2860 = vmatpush1.msra.mxu0 0.0
  %2861 = vmatprep.subr.mxu0 0.0
  %2862 = vmatpush1.msra.mxu0 0.0
  %2863 = vmatprep.mubr.f32.mxu0 0.0
  %2864 = vmatmul.mubr.f32.gmra.mrb[0].mxu0 %v2780
  %v2865 = vpop.f32.mrb[0].mxu0
  %v2866 = vadd.f32 0.0, %v2865
  %v2867 = vpop.f32.mrb[0].mxu0
  %2868 = vmatprep.mubr.f32.mxu0 0.0
  %2869 = vmatmul.mubr.f32.gmra.mrb[0].mxu0 %v2781
  %v2870 = vpop.f32.mrb[0].mxu0
  %v2871 = vadd.f32 0.0, %v2870
  %v2872 = vpop.f32.mrb[0].mxu0
  %2873 = vdwg.mxu0
  %v2874 = vadd.f32 %v2638, %v2866
  %v2875 = vadd.f32 %v2639, %v2871
  %s2876 = scalar_lea.vmem %s17, 1
  %v2877 = vld [vmem:[%s2876] sm:$0x1]
  %v2879 = vlaneseq
  %v2880 = vshrl.u32 %v2879, 7
  %v2881 = vsub.s32 0, %v2880
  %v2882 = vrot.slane %v2877, %v2881
  %v2884 = vadd.f32 %v2874, %v2882
  %v2885 = vadd.f32 %v2875, %v2882
  %v2886 = vld [vmem:[%s18] sm:$0x1]
  %v2887 = vld [vmem:[%s19] sm:$0x1]
  %v2888 = vsel %vm79, %v2884, 0.0
  %2889 = vadd.xlane.f32.xlu0 %v2888
  %v2890 = vpop.xlane.xlu0 %2889
  %v2891 = vsel %vm79, %v2885, 0.0
  %2892 = vadd.xlane.f32.xlu0 %v2891
  %v2893 = vpop.xlane.xlu0 %2892
  %v2894 = vmul.f32 %v2890, %v86
  %v2895 = vmul.f32 %v2893, %v86
  %v2896 = vsub.f32 %v2884, %v2894
  %v2897 = vsub.f32 %v2885, %v2895
  %v2898 = vmul.f32 %v2896, %v2896
  %v2899 = vmul.f32 %v2897, %v2897
  %v2900 = vsel %vm79, %v2898, 0.0
  %2901 = vadd.xlane.f32.xlu0 %v2900
  %v2902 = vpop.xlane.xlu0 %2901
  %v2903 = vsel %vm79, %v2899, 0.0
  %2904 = vadd.xlane.f32.xlu0 %v2903
  %v2905 = vpop.xlane.xlu0 %2904
  %v2906 = vmul.f32 %v2902, %v86
  %v2907 = vmul.f32 %v2905, %v86
  %v2908 = vadd.f32 %v2906, 1e-05
  %v2909 = vadd.f32 %v2907, 1e-05
  %v2910 = vrsqrt.pop %v2908
  %v2911 = vrsqrt.pop %v2909
  %v2912 = vmul.f32 %v2896, %v2910
  %v2913 = vmul.f32 %v2897, %v2911
  %v2915 = vlaneseq
  %v2916 = vshrl.u32 %v2915, 7
  %v2917 = vsub.s32 0, %v2916
  %v2918 = vrot.slane %v2886, %v2917
  %v2920 = vmul.f32 %v2912, %v2918
  %v2921 = vmul.f32 %v2913, %v2918
  %v2923 = vlaneseq
  %v2924 = vshrl.u32 %v2923, 7
  %v2925 = vsub.s32 0, %v2924
  %v2926 = vrot.slane %v2887, %v2925
  %v2928 = vadd.f32 %v2920, %v2926
  %v2929 = vadd.f32 %v2921, %v2926
  %v2930 = vld [vmem:[%s20] sm:$0x1]
  %v2931 = vld [vmem:[#allocation2] sm:$0x1]
  %2933 = vset.pattern.permute.xlu0 0
  %2934 = vperm.xlu0 %2933, %v2931
  %v2935 = vpop.permute.xlu0 %2934
  %v2937 = vlaneseq
  %v2938 = vshrl.u32 %v2937, 7
  %v2939 = vsub.s32 0, %v2938
  %v2940 = vrot.slane %v2935, %v2939
  %v2942 = vsel %vm79, %v2930, 0
  %v2945 = vsel %vm79, %v2928, 0
  %v2948 = vsel %vm79, %v2929, 0
  %2950 = vmatprep.subr.mxu0 0.0
  %2951 = vmatpush1.xpose.msra.mxu0 %v2945
  %2952 = vmatprep.subr.mxu0 0.0
  %2953 = vmatpush1.xpose.msra.mxu0 %v2948
  %2954 = vmatprep.subr.mxu0 0.0
  %2955 = vmatpush1.xpose.msra.mxu0 0.0
  %2956 = vmatprep.subr.mxu0 0.0
  %2957 = vmatpush1.xpose.msra.mxu0 0.0
  %2958 = vmatprep.subr.mxu0 0.0
  %2959 = vmatpush1.xpose.msra.mxu0 0.0
  %2960 = vmatprep.subr.mxu0 0.0
  %2961 = vmatpush1.xpose.msra.mxu0 0.0
  %2962 = vmatprep.subr.mxu0 0.0
  %2963 = vmatpush1.xpose.msra.mxu0 0.0
  %2964 = vmatprep.subr.mxu0 0.0
  %2965 = vmatpush1.xpose.msra.mxu0 0.0
  %2966 = vmatprep.subr.mxu0 0.0
  %2967 = vmatpush1.xpose.msra.mxu0 0.0
  %2968 = vmatprep.subr.mxu0 0.0
  %2969 = vmatpush1.xpose.msra.mxu0 0.0
  %2970 = vmatprep.subr.mxu0 0.0
  %2971 = vmatpush1.xpose.msra.mxu0 0.0
  %2972 = vmatprep.subr.mxu0 0.0
  %2973 = vmatpush1.xpose.msra.mxu0 0.0
  %2974 = vmatprep.subr.mxu0 0.0
  %2975 = vmatpush1.xpose.msra.mxu0 0.0
  %2976 = vmatprep.subr.mxu0 0.0
  %2977 = vmatpush1.xpose.msra.mxu0 0.0
  %2978 = vmatprep.subr.mxu0 0.0
  %2979 = vmatpush1.xpose.msra.mxu0 0.0
  %2980 = vmatprep.subr.mxu0 0.0
  %2981 = vmatpush1.xpose.msra.mxu0 0.0
  %2982 = vmatprep.subr.mxu0 0.0
  %2983 = vmatpush1.xpose.msra.mxu0 0.0
  %2984 = vmatprep.subr.mxu0 0.0
  %2985 = vmatpush1.xpose.msra.mxu0 0.0
  %2986 = vmatprep.subr.mxu0 0.0
  %2987 = vmatpush1.xpose.msra.mxu0 0.0
  %2988 = vmatprep.subr.mxu0 0.0
  %2989 = vmatpush1.xpose.msra.mxu0 0.0
  %2990 = vmatprep.subr.mxu0 0.0
  %2991 = vmatpush1.xpose.msra.mxu0 0.0
  %2992 = vmatprep.subr.mxu0 0.0
  %2993 = vmatpush1.xpose.msra.mxu0 0.0
  %2994 = vmatprep.subr.mxu0 0.0
  %2995 = vmatpush1.xpose.msra.mxu0 0.0
  %2996 = vmatprep.subr.mxu0 0.0
  %2997 = vmatpush1.xpose.msra.mxu0 0.0
  %2998 = vmatprep.subr.mxu0 0.0
  %2999 = vmatpush1.xpose.msra.mxu0 0.0
  %3000 = vmatprep.subr.mxu0 0.0
  %3001 = vmatpush1.xpose.msra.mxu0 0.0
  %3002 = vmatprep.subr.mxu0 0.0
  %3003 = vmatpush1.xpose.msra.mxu0 0.0
  %3004 = vmatprep.subr.mxu0 0.0
  %3005 = vmatpush1.xpose.msra.mxu0 0.0
  %3006 = vmatprep.subr.mxu0 0.0
  %3007 = vmatpush1.xpose.msra.mxu0 0.0
  %3008 = vmatprep.subr.mxu0 0.0
  %3009 = vmatpush1.xpose.msra.mxu0 0.0
  %3010 = vmatprep.subr.mxu0 0.0
  %3011 = vmatpush1.xpose.msra.mxu0 0.0
  %3012 = vmatprep.subr.mxu0 0.0
  %3013 = vmatpush1.xpose.msra.mxu0 0.0
  %3014 = vmatprep.mubr.f32.mxu0 0.0
  %3015 = vmatmul.mubr.f32.gmra.mrb[0].mxu0 %v2942
  %v3016 = vpop.f32.mrb[0].mxu0
  %v3017 = vadd.f32 %v2940, %v3016
  %v3018 = vpop.f32.mrb[0].mxu0
  %3019 = vdwg.mxu0
  %vm3020 = vcmask 122880
  %3021 = vst.msk [vmem:[%s22] sm:$0x1] %vm3020, %v3017
  // Predicated region
  $region90: #{model_forward.1} parent=0 // pred_check
    _
  $region91: #{model_forward.1} parent=0 // pred_check_branch
    %3023 = sbr.rel (0) target = $region93
  $region92: #{model_forward.1} parent=0 // pred_region
    _
  $region93: #{model_forward.1} parent=0 // pred_fallthru
    _
  // Predicated region
  $region94: #{model_forward.1} parent=0 // pred_check
    _
  $region95: #{model_forward.1} parent=0 // pred_check_branch
    %3025 = sbr.rel (0) target = $region97
  $region96: #{model_forward.1} parent=0 // pred_region
    _
  $region97: #{model_forward.1} parent=0 // pred_fallthru
    _

</llo_original>
